<compile_context>
chip_gen: v6e
topology: v6e:2x2x1
jax: 0.10.0
libtpu: 0.0.40
codegen_flags: <defaults>
</compile_context>

<pallas_src>
import math
from collections import namedtuple

import jax
import jax.numpy as jnp
from jax.experimental import pallas as pl
from jax.experimental.pallas import tpu as pltpu


# ----------------------------------------------------------------------------
# Genotype
# ----------------------------------------------------------------------------
Genotype = namedtuple("Genotype", "normal normal_concat")
GENOTYPE = Genotype(
    normal=[("semi_gcn", 0), ("conv_1x1", 1),
            ("skip_connect", 0), ("semi_gcn", 1),
            ("conv_1x1", 2), ("skip_connect", 3),
            ("semi_gcn", 2), ("conv_1x1", 4)],
    normal_concat=[2, 3, 4, 5],
)

LANES = 128


# ----------------------------------------------------------------------------
# Host-side parameter packing: one bf16 weight slab + one f32 shift slab + a static plan
# ----------------------------------------------------------------------------
def build_packed_params(key, genotype, C, num_classes, layers, in_channels,
                        stem_multiplier=3, lanes=LANES, eps=1e-5):
    op_names, indices = zip(*genotype.normal)
    steps = len(op_names) // 2
    concat = tuple(genotype.normal_concat)
    multiplier = len(concat)
    half = multiplier * C                      # lane width of a cell output (s1)
    C_stem = stem_multiplier * C
    assert concat == tuple(range(concat[0], concat[0] + multiplier))
    assert 2 * half <= lanes and C_stem <= half and (2 + steps) * C <= lanes

    bn_scale = 1.0 / math.sqrt(1.0 + eps)      # BN eval defaults (gamma=1, var=1, mean=0, beta=0)
    keys = iter(jax.random.split(key, 256))

    def lin(c_in, c_out):                      # PyTorch nn.Linear default weight init
        bound = 1.0 / math.sqrt(c_in)
        return jax.random.uniform(next(keys), (c_in, c_out), jnp.float32, -bound, bound)

    w_blocks, sh_rows = [], []
    n_w_rows = 0

    def add_weight(block):                     # block [k, lanes]; start kept 16-row aligned (bf16 tiling)
        nonlocal n_w_rows
        r0 = n_w_rows
        pad = (-block.shape[0]) % 16
        if pad:
            block = jnp.pad(block, ((0, pad), (0, 0)))
        w_blocks.append(block)
        n_w_rows += block.shape[0]
        return r0

    def add_shift(row):                        # row [1, lanes] f32
        sh_rows.append(row)
        return len(sh_rows) - 1

    def lane_pad(a):
        return jnp.pad(a, ((0, 0), (0, lanes - a.shape[1])))

    plan = {"C": C, "half": half, "lanes": lanes, "c_stem": C_stem,
            "x_k": ((in_channels + 15) // 16) * 16,
            "concat_lo": concat[0], "concat_hi": concat[-1]}

    # stem: Linear(in_ch -> 3C, bias=False) + BN (scale folded into W), no activation
    plan["stem_w"] = add_weight(lane_pad(lin(in_channels, C_stem) * bn_scale))
    plan["stem_sh"] = add_shift(jnp.zeros((1, lanes), jnp.float32))

    C_pp, C_p = C_stem, C_stem
    cells = []
    for _ in range(layers):
        cell = {}
        # merged preprocess0/1: carry [N, 2*half] @ block-diagonal [2*half, 2C]
        pw = jnp.zeros((2 * half, lanes), jnp.float32)
        pw = pw.at[0:C_pp, 0:C].set(lin(C_pp, C) * bn_scale)
        pw = pw.at[half:half + C_p, C:2 * C].set(lin(C_p, C) * bn_scale)
        cell["pre_w"] = add_weight(pw)
        cell["pre_sh"] = add_shift(jnp.zeros((1, lanes), jnp.float32))

        step_plans = []
        for i in range(steps):
            ops_i = [(op_names[2 * i + t], indices[2 * i + t]) for t in range(2)]
            nonskip = [idx for name, idx in ops_i if name != "skip_connect"]
            sp = {"ops": []}
            if nonskip:
                lo, hi = min(nonskip), max(nonskip)
                win_w = (hi - lo + 1) * C          # contiguous lane window of the state bank
                wblk = jnp.zeros((win_w, lanes), jnp.float32)
                col = 0
                for name, idx in ops_i:
                    if name == "skip_connect":
                        sp["ops"].append(("skip", idx, None))
                    else:
                        wblk = wblk.at[(idx - lo) * C:(idx - lo + 1) * C,
                                       col * C:(col + 1) * C].set(lin(C, C) * bn_scale)
                        sp["ops"].append((name, idx, col))
                        col += 1
                sp["win_lo"], sp["win_w"] = lo, win_w
                sp["w"] = add_weight(wblk)
                sp["sh"] = add_shift(jnp.zeros((1, lanes), jnp.float32))
            else:
                sp["ops"] = [("skip", idx, None) for _, idx in ops_i]
            step_plans.append(sp)
        cell["steps"] = step_plans
        cells.append(cell)
        C_pp, C_p = C_p, multiplier * C
    plan["cells"] = cells

    # classifier Linear(C_prev+1 -> num_classes, bias=True); pooled-mean column folded in:
    #   cat([mean(s1), s1]) @ Wt == s1 @ (Wt[1:] + (1/C_prev) * 1 @ Wt[0:1])
    # TODO(synk): fold assumes torch.cat((pooled_mean, s1), dim=1) ordering (weight.T row 0 = mean).
    wc = lin(C_p + 1, num_classes)
    bias_bound = 1.0 / math.sqrt(C_p + 1)
    bc = jax.random.uniform(next(keys), (1, num_classes), jnp.float32, -bias_bound, bias_bound)
    w_feat = wc[1:, :] + (1.0 / C_p) * wc[0:1, :]
    plan["clf_w"] = add_weight(lane_pad(w_feat))
    plan["clf_sh"] = add_shift(lane_pad(bc))

    w_slab = jnp.concatenate(w_blocks, axis=0).astype(jnp.bfloat16)
    sh_slab = jnp.concatenate(sh_rows, axis=0)
    pad = (-sh_slab.shape[0]) % 8
    if pad:
        sh_slab = jnp.pad(sh_slab, ((0, pad), (0, 0)))
    return w_slab, sh_slab, plan


# ----------------------------------------------------------------------------
# Fused whole-network Pallas kernel (built from the static plan)
# ----------------------------------------------------------------------------
def make_network_kernel(plan):
    C, half, c_stem, x_k = plan["C"], plan["half"], plan["c_stem"], plan["x_k"]

    def kernel(x_ref, adj_ref, w_ref, sh_ref, out_ref, carry, bank):
        adj = adj_ref[...]                                   # bf16 [N, N], in VMEM once

        def mm(lhs, r0, k):                                  # bf16 MXU matmul, f32 accumulate
            return jnp.dot(lhs.astype(jnp.bfloat16), w_ref[r0:r0 + k, :],
                           preferred_element_type=jnp.float32)

        def sh(r):
            return sh_ref[r:r + 1, :]

        # ---- stem: Linear + BN (scale folded), no activation ----
        s = mm(x_ref[...], plan["stem_w"], x_k) + sh(plan["stem_sh"])
        carry[...] = jnp.zeros_like(carry)
        carry[:, 0:c_stem] = s[:, 0:c_stem]                  # s0
        carry[:, half:half + c_stem] = s[:, 0:c_stem]        # s1

        # ---- cells ----
        for cell in plan["cells"]:
            bank[...] = jnp.zeros_like(bank)                 # zero unwritten lanes (block-diag windows)
            z = jnp.maximum(mm(carry[...], cell["pre_w"], 2 * half) + sh(cell["pre_sh"]), 0.0)
            bank[:, 0:2 * C] = z[:, 0:2 * C]                 # states 0 (pre0) and 1 (pre1)

            for i, sp in enumerate(cell["steps"]):
                if "w" in sp:                                # one merged matmul for both step ops
                    lo, ww = sp["win_lo"], sp["win_w"]
                    z = mm(bank[:, lo * C:lo * C + ww], sp["w"], ww)
                    zsh = sh(sp["sh"])
                hs = []
                for name, idx, col in sp["ops"]:
                    if name == "skip":
                        hs.append(bank[:, idx * C:(idx + 1) * C])
                    else:
                        zi = z[:, col * C:(col + 1) * C]
                        if name == "semi_gcn":               # ReLU(BN(A_norm @ (x @ W)))
                            zi = jnp.dot(adj, zi.astype(jnp.bfloat16),
                                         preferred_element_type=jnp.float32)
                        hs.append(jnp.maximum(zi + zsh[:, col * C:(col + 1) * C], 0.0))
                bank[:, (2 + i) * C:(3 + i) * C] = hs[0] + hs[1]

            # s0' = s1 ; s1' = concat(states[concat]) = contiguous lane slice of the bank
            s1_old = carry[:, half:2 * half]
            carry[:, 0:half] = s1_old
            carry[:, half:2 * half] = bank[:, plan["concat_lo"] * C:(plan["concat_hi"] + 1) * C]

        # ---- pooled classifier (mean column folded into weights host-side) ----
        out_ref[...] = mm(carry[:, half:2 * half], plan["clf_w"], half) + sh(plan["clf_sh"])

    return kernel


# ----------------------------------------------------------------------------
# Adjacency normalization (PyG GCNConv-style: scatter-ADD duplicates + self loops)
# ----------------------------------------------------------------------------
def normalized_adjacency(edge_index, num_nodes):
    src, dst = edge_index[0], edge_index[1]
    a = jnp.zeros((num_nodes, num_nodes), jnp.float32)
    a = a.at[dst, src].add(1.0)                              # duplicates sum, like PyG scatter-add
    a = a + jnp.eye(num_nodes, dtype=jnp.float32)            # add_self_loops
    deg = jnp.sum(a, axis=1)
    d = jnp.where(deg > 0, 1.0 / jnp.sqrt(deg), 0.0)
    return a * d[:, None] * d[None, :]


# ----------------------------------------------------------------------------
# Forward pass: one pallas_call for the whole network
# ----------------------------------------------------------------------------
def network_ppi_forward(x, adj, w_slab, sh_slab, plan, num_classes):
    n = x.shape[0]
    lanes = plan["lanes"]
    x_in = jnp.pad(x.astype(jnp.float32), ((0, 0), (0, plan["x_k"] - x.shape[1])))
    adj_bf16 = adj.astype(jnp.bfloat16)

    # advisory cost estimate for XLA scheduling
    flops = 2 * n * plan["x_k"] * lanes + 2 * n * plan["half"] * lanes
    for cell in plan["cells"]:
        flops += 2 * n * (2 * plan["half"]) * lanes
        for sp in cell["steps"]:
            if "w" in sp:
                flops += 2 * n * sp["win_w"] * lanes
            flops += sum(2 * n * n * plan["C"]
                         for name, _, _ in sp["ops"] if name == "semi_gcn")
    bytes_accessed = (x_in.size * 4 + adj_bf16.size * 2 + w_slab.size * 2 +
                      sh_slab.size * 4 + n * lanes * 4)

    vmem = pl.BlockSpec(memory_space=pltpu.MemorySpace.VMEM)
    # TODO(synk): for graphs with N >> 64, row-tile only adj / the output (grid over node rows,
    #   dimension_semantics=("parallel",)) while keeping the full x@W resident in VMEM, since
    #   adj @ xw needs every row of xw per output tile; the [tile_rows, N] adj block is what
    #   hits v7x's 64 MiB VMEM budget first.  At N=64 the single launch is fastest.
    logits_pad = pl.pallas_call(
        make_network_kernel(plan),
        out_shape=jax.ShapeDtypeStruct((n, lanes), jnp.float32),
        in_specs=[vmem, vmem, vmem, vmem],
        out_specs=vmem,
        scratch_shapes=[pltpu.VMEM((n, lanes), jnp.float32),   # carry: [s0 | s1]
                        pltpu.VMEM((n, lanes), jnp.float32)],  # per-cell packed state bank
        cost_estimate=pl.CostEstimate(flops=int(flops), transcendentals=0,
                                      bytes_accessed=int(bytes_accessed)),
    )(x_in, adj_bf16, w_slab, sh_slab)
    return logits_pad[:, :num_classes], None   # logits_aux is None in eval mode


# ----------------------------------------------------------------------------
# Main
# ----------------------------------------------------------------------------
if __name__ == "__main__":
    N, IN_CH, C, LAYERS, NUM_CLASSES = 64, 8, 16, 3, 8

    key = jax.random.PRNGKey(0)
    k_x, k_e, k_p = jax.random.split(key, 3)

    # node features [N, IN_CH]
    x = jax.random.normal(k_x, (N, IN_CH), jnp.float32)

    # deterministic edge_index [2, E]: bidirectional ring + random chords
    src = jnp.arange(N, dtype=jnp.int32)
    dst = (src + 1) % N
    extra = jax.random.randint(k_e, (2, 2 * N), 0, N, dtype=jnp.int32)
    edge_index = jnp.concatenate(
        [jnp.stack([src, dst]), jnp.stack([dst, src]), extra], axis=1)

    adj = normalized_adjacency(edge_index, N)
    w_slab, sh_slab, plan = build_packed_params(k_p, GENOTYPE, C, NUM_CLASSES,
                                                LAYERS, IN_CH)

    logits, logits_aux = network_ppi_forward(x, adj, w_slab, sh_slab, plan,
                                             NUM_CLASSES)
    logits = jax.block_until_ready(logits)

    assert logits.shape == (N, NUM_CLASSES), logits.shape
    assert logits_aux is None
    assert bool(jnp.all(jnp.isfinite(logits)))
    print("KERNEL_OK")
</pallas_src>

<mosaic_0001>
module attributes {stable_mosaic.version = 11 : i64} {
  func.func @kernel(%arg0: memref<64x16xf32, #tpu.memory_space<vmem>>, %arg1: memref<64x64xbf16, #tpu.memory_space<vmem>>, %arg2: memref<800x128xbf16, #tpu.memory_space<vmem>>, %arg3: memref<24x128xf32, #tpu.memory_space<vmem>>, %arg4: memref<64x128xf32, #tpu.memory_space<vmem>>, %arg5: memref<64x128xf32, #tpu.memory_space<vmem>>, %arg6: memref<64x128xf32, #tpu.memory_space<vmem>>) attributes {dimension_semantics = [], scalar_prefetch = 0 : i64, scratch_operands = 2 : i64, tpu.core_type = #tpu.core_type<tc>} {
    %c0 = arith.constant 0 : index
    %c0_0 = arith.constant 0 : index
    %0 = vector.load %arg1[%c0, %c0_0] : memref<64x64xbf16, #tpu.memory_space<vmem>>, vector<64x64xbf16>
    %c0_1 = arith.constant 0 : index
    %c0_2 = arith.constant 0 : index
    %1 = vector.load %arg0[%c0_1, %c0_2] : memref<64x16xf32, #tpu.memory_space<vmem>>, vector<64x16xf32>
    %2 = arith.truncf %1 : vector<64x16xf32> to vector<64x16xbf16>
    %c0_3 = arith.constant 0 : index
    %c0_4 = arith.constant 0 : index
    %3 = vector.load %arg2[%c0_3, %c0_4] : memref<800x128xbf16, #tpu.memory_space<vmem>>, vector<16x128xbf16>
    %cst = arith.constant dense<0.000000e+00> : vector<64x128xf32>
    %4 = tpu.matmul %2, %3, %cst {dimension_numbers = #tpu.dot_dimension_numbers<[1], [0], [0], [1], [0, 0, 1, 1], [], []>} : vector<64x16xbf16>, vector<16x128xbf16>, vector<64x128xf32> -> vector<64x128xf32>
    %c0_5 = arith.constant 0 : index
    %c0_6 = arith.constant 0 : index
    %5 = vector.load %arg3[%c0_5, %c0_6] : memref<24x128xf32, #tpu.memory_space<vmem>>, vector<1x128xf32>
    %6 = vector.broadcast %5 : vector<1x128xf32> to vector<64x128xf32>
    %7 = arith.addf %4, %6 : vector<64x128xf32>
    %cst_7 = arith.constant 0.000000e+00 : f32
    %8 = vector.broadcast %cst_7 : f32 to vector<64x128xf32>
    %c0_8 = arith.constant 0 : index
    %c0_9 = arith.constant 0 : index
    %9 = vector.load %arg5[%c0_8, %c0_9] : memref<64x128xf32, #tpu.memory_space<vmem>>, vector<64x128xf32>
    tpu.vector_store %arg5[%c0_8, %c0_9], %8 {strides = array<i32>} : memref<64x128xf32, #tpu.memory_space<vmem>>, vector<64x128xf32>,
    %10 = vector.extract_strided_slice %7 {offsets = [0, 0], sizes = [64, 48], strides = [1, 1]} : vector<64x128xf32> to vector<64x48xf32>
    %c0_10 = arith.constant 0 : index
    %c0_11 = arith.constant 0 : index
    %11 = vector.load %arg5[%c0_10, %c0_11] : memref<64x128xf32, #tpu.memory_space<vmem>>, vector<64x48xf32>
    tpu.vector_store %arg5[%c0_10, %c0_11], %10 {strides = array<i32>} : memref<64x128xf32, #tpu.memory_space<vmem>>, vector<64x48xf32>,
    %12 = vector.extract_strided_slice %7 {offsets = [0, 0], sizes = [64, 48], strides = [1, 1]} : vector<64x128xf32> to vector<64x48xf32>
    %c0_12 = arith.constant 0 : index
    %c64 = arith.constant 64 : index
    %13 = vector.load %arg5[%c0_12, %c64] : memref<64x128xf32, #tpu.memory_space<vmem>>, vector<64x48xf32>
    tpu.vector_store %arg5[%c0_12, %c64], %12 {strides = array<i32>} : memref<64x128xf32, #tpu.memory_space<vmem>>, vector<64x48xf32>,
    %cst_13 = arith.constant 0.000000e+00 : f32
    %14 = vector.broadcast %cst_13 : f32 to vector<64x128xf32>
    %c0_14 = arith.constant 0 : index
    %c0_15 = arith.constant 0 : index
    %15 = vector.load %arg6[%c0_14, %c0_15] : memref<64x128xf32, #tpu.memory_space<vmem>>, vector<64x128xf32>
    tpu.vector_store %arg6[%c0_14, %c0_15], %14 {strides = array<i32>} : memref<64x128xf32, #tpu.memory_space<vmem>>, vector<64x128xf32>,
    %c0_16 = arith.constant 0 : index
    %c0_17 = arith.constant 0 : index
    %16 = vector.load %arg5[%c0_16, %c0_17] : memref<64x128xf32, #tpu.memory_space<vmem>>, vector<64x128xf32>
    %17 = arith.truncf %16 : vector<64x128xf32> to vector<64x128xbf16>
    %c16 = arith.constant 16 : index
    %c0_18 = arith.constant 0 : index
    %18 = vector.load %arg2[%c16, %c0_18] : memref<800x128xbf16, #tpu.memory_space<vmem>>, vector<128x128xbf16>
    %cst_19 = arith.constant dense<0.000000e+00> : vector<64x128xf32>
    %19 = tpu.matmul %17, %18, %cst_19 {dimension_numbers = #tpu.dot_dimension_numbers<[1], [0], [0], [1], [0, 0, 1, 1], [], []>} : vector<64x128xbf16>, vector<128x128xbf16>, vector<64x128xf32> -> vector<64x128xf32>
    %c1 = arith.constant 1 : index
    %c0_20 = arith.constant 0 : index
    %20 = vector.load %arg3[%c1, %c0_20] : memref<24x128xf32, #tpu.memory_space<vmem>>, vector<1x128xf32>
    %21 = vector.broadcast %20 : vector<1x128xf32> to vector<64x128xf32>
    %22 = arith.addf %19, %21 : vector<64x128xf32>
    %cst_21 = arith.constant 0.000000e+00 : f32
    %23 = vector.broadcast %cst_21 : f32 to vector<64x128xf32>
    %24 = arith.maximumf %22, %23 : vector<64x128xf32>
    %25 = vector.extract_strided_slice %24 {offsets = [0, 0], sizes = [64, 32], strides = [1, 1]} : vector<64x128xf32> to vector<64x32xf32>
    %c0_22 = arith.constant 0 : index
    %c0_23 = arith.constant 0 : index
    %26 = vector.load %arg6[%c0_22, %c0_23] : memref<64x128xf32, #tpu.memory_space<vmem>>, vector<64x32xf32>
    tpu.vector_store %arg6[%c0_22, %c0_23], %25 {strides = array<i32>} : memref<64x128xf32, #tpu.memory_space<vmem>>, vector<64x32xf32>,
    %c0_24 = arith.constant 0 : index
    %c0_25 = arith.constant 0 : index
    %27 = vector.load %arg6[%c0_24, %c0_25] : memref<64x128xf32, #tpu.memory_space<vmem>>, vector<64x32xf32>
    %28 = arith.truncf %27 : vector<64x32xf32> to vector<64x32xbf16>
    %c144 = arith.constant 144 : index
    %c0_26 = arith.constant 0 : index
    %29 = vector.load %arg2[%c144, %c0_26] : memref<800x128xbf16, #tpu.memory_space<vmem>>, vector<32x128xbf16>
    %cst_27 = arith.constant dense<0.000000e+00> : vector<64x128xf32>
    %30 = tpu.matmul %28, %29, %cst_27 {dimension_numbers = #tpu.dot_dimension_numbers<[1], [0], [0], [1], [0, 0, 1, 1], [], []>} : vector<64x32xbf16>, vector<32x128xbf16>, vector<64x128xf32> -> vector<64x128xf32>
    %c2 = arith.constant 2 : index
    %c0_28 = arith.constant 0 : index
    %31 = vector.load %arg3[%c2, %c0_28] : memref<24x128xf32, #tpu.memory_space<vmem>>, vector<1x128xf32>
    %32 = vector.extract_strided_slice %30 {offsets = [0, 0], sizes = [64, 16], strides = [1, 1]} : vector<64x128xf32> to vector<64x16xf32>
    %33 = arith.truncf %32 : vector<64x16xf32> to vector<64x16xbf16>
    %cst_29 = arith.constant dense<0.000000e+00> : vector<64x16xf32>
    %34 = tpu.matmul %0, %33, %cst_29 {dimension_numbers = #tpu.dot_dimension_numbers<[1], [0], [0], [1], [0, 0, 1, 1], [], []>} : vector<64x64xbf16>, vector<64x16xbf16>, vector<64x16xf32> -> vector<64x16xf32>
    %35 = vector.extract_strided_slice %31 {offsets = [0, 0], sizes = [1, 16], strides = [1, 1]} : vector<1x128xf32> to vector<1x16xf32>
    %36 = vector.broadcast %35 : vector<1x16xf32> to vector<64x16xf32>
    %37 = arith.addf %34, %36 : vector<64x16xf32>
    %cst_30 = arith.constant 0.000000e+00 : f32
    %38 = vector.broadcast %cst_30 : f32 to vector<64x16xf32>
    %39 = arith.maximumf %37, %38 : vector<64x16xf32>
    %40 = vector.extract_strided_slice %30 {offsets = [0, 16], sizes = [64, 16], strides = [1, 1]} : vector<64x128xf32> to vector<64x16xf32>
    %41 = vector.extract_strided_slice %31 {offsets = [0, 16], sizes = [1, 16], strides = [1, 1]} : vector<1x128xf32> to vector<1x16xf32>
    %42 = vector.broadcast %41 : vector<1x16xf32> to vector<64x16xf32>
    %43 = arith.addf %40, %42 : vector<64x16xf32>
    %cst_31 = arith.constant 0.000000e+00 : f32
    %44 = vector.broadcast %cst_31 : f32 to vector<64x16xf32>
    %45 = arith.maximumf %43, %44 : vector<64x16xf32>
    %46 = arith.addf %39, %45 : vector<64x16xf32>
    %c0_32 = arith.constant 0 : index
    %c32 = arith.constant 32 : index
    %47 = vector.load %arg6[%c0_32, %c32] : memref<64x128xf32, #tpu.memory_space<vmem>>, vector<64x16xf32>
    tpu.vector_store %arg6[%c0_32, %c32], %46 {strides = array<i32>} : memref<64x128xf32, #tpu.memory_space<vmem>>, vector<64x16xf32>,
    %c0_33 = arith.constant 0 : index
    %c16_34 = arith.constant 16 : index
    %48 = vector.load %arg6[%c0_33, %c16_34] : memref<64x128xf32, #tpu.memory_space<vmem>>, vector<64x16xf32>
    %49 = arith.truncf %48 : vector<64x16xf32> to vector<64x16xbf16>
    %c176 = arith.constant 176 : index
    %c0_35 = arith.constant 0 : index
    %50 = vector.load %arg2[%c176, %c0_35] : memref<800x128xbf16, #tpu.memory_space<vmem>>, vector<16x128xbf16>
    %cst_36 = arith.constant dense<0.000000e+00> : vector<64x128xf32>
    %51 = tpu.matmul %49, %50, %cst_36 {dimension_numbers = #tpu.dot_dimension_numbers<[1], [0], [0], [1], [0, 0, 1, 1], [], []>} : vector<64x16xbf16>, vector<16x128xbf16>, vector<64x128xf32> -> vector<64x128xf32>
    %c3 = arith.constant 3 : index
    %c0_37 = arith.constant 0 : index
    %52 = vector.load %arg3[%c3, %c0_37] : memref<24x128xf32, #tpu.memory_space<vmem>>, vector<1x128xf32>
    %c0_38 = arith.constant 0 : index
    %c0_39 = arith.constant 0 : index
    %53 = vector.load %arg6[%c0_38, %c0_39] : memref<64x128xf32, #tpu.memory_space<vmem>>, vector<64x16xf32>
    %54 = vector.extract_strided_slice %51 {offsets = [0, 0], sizes = [64, 16], strides = [1, 1]} : vector<64x128xf32> to vector<64x16xf32>
    %55 = arith.truncf %54 : vector<64x16xf32> to vector<64x16xbf16>
    %cst_40 = arith.constant dense<0.000000e+00> : vector<64x16xf32>
    %56 = tpu.matmul %0, %55, %cst_40 {dimension_numbers = #tpu.dot_dimension_numbers<[1], [0], [0], [1], [0, 0, 1, 1], [], []>} : vector<64x64xbf16>, vector<64x16xbf16>, vector<64x16xf32> -> vector<64x16xf32>
    %57 = vector.extract_strided_slice %52 {offsets = [0, 0], sizes = [1, 16], strides = [1, 1]} : vector<1x128xf32> to vector<1x16xf32>
    %58 = vector.broadcast %57 : vector<1x16xf32> to vector<64x16xf32>
    %59 = arith.addf %56, %58 : vector<64x16xf32>
    %cst_41 = arith.constant 0.000000e+00 : f32
    %60 = vector.broadcast %cst_41 : f32 to vector<64x16xf32>
    %61 = arith.maximumf %59, %60 : vector<64x16xf32>
    %62 = arith.addf %53, %61 : vector<64x16xf32>
    %c0_42 = arith.constant 0 : index
    %c48 = arith.constant 48 : index
    %63 = vector.load %arg6[%c0_42, %c48] : memref<64x128xf32, #tpu.memory_space<vmem>>, vector<64x16xf32>
    tpu.vector_store %arg6[%c0_42, %c48], %62 {strides = array<i32>} : memref<64x128xf32, #tpu.memory_space<vmem>>, vector<64x16xf32>,
    %c0_43 = arith.constant 0 : index
    %c32_44 = arith.constant 32 : index
    %64 = vector.load %arg6[%c0_43, %c32_44] : memref<64x128xf32, #tpu.memory_space<vmem>>, vector<64x16xf32>
    %65 = arith.truncf %64 : vector<64x16xf32> to vector<64x16xbf16>
    %c192 = arith.constant 192 : index
    %c0_45 = arith.constant 0 : index
    %66 = vector.load %arg2[%c192, %c0_45] : memref<800x128xbf16, #tpu.memory_space<vmem>>, vector<16x128xbf16>
    %cst_46 = arith.constant dense<0.000000e+00> : vector<64x128xf32>
    %67 = tpu.matmul %65, %66, %cst_46 {dimension_numbers = #tpu.dot_dimension_numbers<[1], [0], [0], [1], [0, 0, 1, 1], [], []>} : vector<64x16xbf16>, vector<16x128xbf16>, vector<64x128xf32> -> vector<64x128xf32>
    %c4 = arith.constant 4 : index
    %c0_47 = arith.constant 0 : index
    %68 = vector.load %arg3[%c4, %c0_47] : memref<24x128xf32, #tpu.memory_space<vmem>>, vector<1x128xf32>
    %69 = vector.extract_strided_slice %67 {offsets = [0, 0], sizes = [64, 16], strides = [1, 1]} : vector<64x128xf32> to vector<64x16xf32>
    %70 = vector.extract_strided_slice %68 {offsets = [0, 0], sizes = [1, 16], strides = [1, 1]} : vector<1x128xf32> to vector<1x16xf32>
    %71 = vector.broadcast %70 : vector<1x16xf32> to vector<64x16xf32>
    %72 = arith.addf %69, %71 : vector<64x16xf32>
    %cst_48 = arith.constant 0.000000e+00 : f32
    %73 = vector.broadcast %cst_48 : f32 to vector<64x16xf32>
    %74 = arith.maximumf %72, %73 : vector<64x16xf32>
    %c0_49 = arith.constant 0 : index
    %c48_50 = arith.constant 48 : index
    %75 = vector.load %arg6[%c0_49, %c48_50] : memref<64x128xf32, #tpu.memory_space<vmem>>, vector<64x16xf32>
    %76 = arith.addf %74, %75 : vector<64x16xf32>
    %c0_51 = arith.constant 0 : index
    %c64_52 = arith.constant 64 : index
    %77 = vector.load %arg6[%c0_51, %c64_52] : memref<64x128xf32, #tpu.memory_space<vmem>>, vector<64x16xf32>
    tpu.vector_store %arg6[%c0_51, %c64_52], %76 {strides = array<i32>} : memref<64x128xf32, #tpu.memory_space<vmem>>, vector<64x16xf32>,
    %c0_53 = arith.constant 0 : index
    %c32_54 = arith.constant 32 : index
    %78 = vector.load %arg6[%c0_53, %c32_54] : memref<64x128xf32, #tpu.memory_space<vmem>>, vector<64x48xf32>
    %79 = arith.truncf %78 : vector<64x48xf32> to vector<64x48xbf16>
    %c208 = arith.constant 208 : index
    %c0_55 = arith.constant 0 : index
    %80 = vector.load %arg2[%c208, %c0_55] : memref<800x128xbf16, #tpu.memory_space<vmem>>, vector<48x128xbf16>
    %cst_56 = arith.constant dense<0.000000e+00> : vector<64x128xf32>
    %81 = tpu.matmul %79, %80, %cst_56 {dimension_numbers = #tpu.dot_dimension_numbers<[1], [0], [0], [1], [0, 0, 1, 1], [], []>} : vector<64x48xbf16>, vector<48x128xbf16>, vector<64x128xf32> -> vector<64x128xf32>
    %c5 = arith.constant 5 : index
    %c0_57 = arith.constant 0 : index
    %82 = vector.load %arg3[%c5, %c0_57] : memref<24x128xf32, #tpu.memory_space<vmem>>, vector<1x128xf32>
    %83 = vector.extract_strided_slice %81 {offsets = [0, 0], sizes = [64, 16], strides = [1, 1]} : vector<64x128xf32> to vector<64x16xf32>
    %84 = arith.truncf %83 : vector<64x16xf32> to vector<64x16xbf16>
    %cst_58 = arith.constant dense<0.000000e+00> : vector<64x16xf32>
    %85 = tpu.matmul %0, %84, %cst_58 {dimension_numbers = #tpu.dot_dimension_numbers<[1], [0], [0], [1], [0, 0, 1, 1], [], []>} : vector<64x64xbf16>, vector<64x16xbf16>, vector<64x16xf32> -> vector<64x16xf32>
    %86 = vector.extract_strided_slice %82 {offsets = [0, 0], sizes = [1, 16], strides = [1, 1]} : vector<1x128xf32> to vector<1x16xf32>
    %87 = vector.broadcast %86 : vector<1x16xf32> to vector<64x16xf32>
    %88 = arith.addf %85, %87 : vector<64x16xf32>
    %cst_59 = arith.constant 0.000000e+00 : f32
    %89 = vector.broadcast %cst_59 : f32 to vector<64x16xf32>
    %90 = arith.maximumf %88, %89 : vector<64x16xf32>
    %91 = vector.extract_strided_slice %81 {offsets = [0, 16], sizes = [64, 16], strides = [1, 1]} : vector<64x128xf32> to vector<64x16xf32>
    %92 = vector.extract_strided_slice %82 {offsets = [0, 16], sizes = [1, 16], strides = [1, 1]} : vector<1x128xf32> to vector<1x16xf32>
    %93 = vector.broadcast %92 : vector<1x16xf32> to vector<64x16xf32>
    %94 = arith.addf %91, %93 : vector<64x16xf32>
    %cst_60 = arith.constant 0.000000e+00 : f32
    %95 = vector.broadcast %cst_60 : f32 to vector<64x16xf32>
    %96 = arith.maximumf %94, %95 : vector<64x16xf32>
    %97 = arith.addf %90, %96 : vector<64x16xf32>
    %c0_61 = arith.constant 0 : index
    %c80 = arith.constant 80 : index
    %98 = vector.load %arg6[%c0_61, %c80] : memref<64x128xf32, #tpu.memory_space<vmem>>, vector<64x16xf32>
    tpu.vector_store %arg6[%c0_61, %c80], %97 {strides = array<i32>} : memref<64x128xf32, #tpu.memory_space<vmem>>, vector<64x16xf32>,
    %c0_62 = arith.constant 0 : index
    %c64_63 = arith.constant 64 : index
    %99 = vector.load %arg5[%c0_62, %c64_63] : memref<64x128xf32, #tpu.memory_space<vmem>>, vector<64x64xf32>
    %c0_64 = arith.constant 0 : index
    %c0_65 = arith.constant 0 : index
    %100 = vector.load %arg5[%c0_64, %c0_65] : memref<64x128xf32, #tpu.memory_space<vmem>>, vector<64x64xf32>
    tpu.vector_store %arg5[%c0_64, %c0_65], %99 {strides = array<i32>} : memref<64x128xf32, #tpu.memory_space<vmem>>, vector<64x64xf32>,
    %c0_66 = arith.constant 0 : index
    %c32_67 = arith.constant 32 : index
    %101 = vector.load %arg6[%c0_66, %c32_67] : memref<64x128xf32, #tpu.memory_space<vmem>>, vector<64x64xf32>
    %c0_68 = arith.constant 0 : index
    %c64_69 = arith.constant 64 : index
    %102 = vector.load %arg5[%c0_68, %c64_69] : memref<64x128xf32, #tpu.memory_space<vmem>>, vector<64x64xf32>
    tpu.vector_store %arg5[%c0_68, %c64_69], %101 {strides = array<i32>} : memref<64x128xf32, #tpu.memory_space<vmem>>, vector<64x64xf32>,
    %cst_70 = arith.constant 0.000000e+00 : f32
    %103 = vector.broadcast %cst_70 : f32 to vector<64x128xf32>
    %c0_71 = arith.constant 0 : index
    %c0_72 = arith.constant 0 : index
    %104 = vector.load %arg6[%c0_71, %c0_72] : memref<64x128xf32, #tpu.memory_space<vmem>>, vector<64x128xf32>
    tpu.vector_store %arg6[%c0_71, %c0_72], %103 {strides = array<i32>} : memref<64x128xf32, #tpu.memory_space<vmem>>, vector<64x128xf32>,
    %c0_73 = arith.constant 0 : index
    %c0_74 = arith.constant 0 : index
    %105 = vector.load %arg5[%c0_73, %c0_74] : memref<64x128xf32, #tpu.memory_space<vmem>>, vector<64x128xf32>
    %106 = arith.truncf %105 : vector<64x128xf32> to vector<64x128xbf16>
    %c256 = arith.constant 256 : index
    %c0_75 = arith.constant 0 : index
    %107 = vector.load %arg2[%c256, %c0_75] : memref<800x128xbf16, #tpu.memory_space<vmem>>, vector<128x128xbf16>
    %cst_76 = arith.constant dense<0.000000e+00> : vector<64x128xf32>
    %108 = tpu.matmul %106, %107, %cst_76 {dimension_numbers = #tpu.dot_dimension_numbers<[1], [0], [0], [1], [0, 0, 1, 1], [], []>} : vector<64x128xbf16>, vector<128x128xbf16>, vector<64x128xf32> -> vector<64x128xf32>
    %c6 = arith.constant 6 : index
    %c0_77 = arith.constant 0 : index
    %109 = vector.load %arg3[%c6, %c0_77] : memref<24x128xf32, #tpu.memory_space<vmem>>, vector<1x128xf32>
    %110 = vector.broadcast %109 : vector<1x128xf32> to vector<64x128xf32>
    %111 = arith.addf %108, %110 : vector<64x128xf32>
    %cst_78 = arith.constant 0.000000e+00 : f32
    %112 = vector.broadcast %cst_78 : f32 to vector<64x128xf32>
    %113 = arith.maximumf %111, %112 : vector<64x128xf32>
    %114 = vector.extract_strided_slice %113 {offsets = [0, 0], sizes = [64, 32], strides = [1, 1]} : vector<64x128xf32> to vector<64x32xf32>
    %c0_79 = arith.constant 0 : index
    %c0_80 = arith.constant 0 : index
    %115 = vector.load %arg6[%c0_79, %c0_80] : memref<64x128xf32, #tpu.memory_space<vmem>>, vector<64x32xf32>
    tpu.vector_store %arg6[%c0_79, %c0_80], %114 {strides = array<i32>} : memref<64x128xf32, #tpu.memory_space<vmem>>, vector<64x32xf32>,
    %c0_81 = arith.constant 0 : index
    %c0_82 = arith.constant 0 : index
    %116 = vector.load %arg6[%c0_81, %c0_82] : memref<64x128xf32, #tpu.memory_space<vmem>>, vector<64x32xf32>
    %117 = arith.truncf %116 : vector<64x32xf32> to vector<64x32xbf16>
    %c384 = arith.constant 384 : index
    %c0_83 = arith.constant 0 : index
    %118 = vector.load %arg2[%c384, %c0_83] : memref<800x128xbf16, #tpu.memory_space<vmem>>, vector<32x128xbf16>
    %cst_84 = arith.constant dense<0.000000e+00> : vector<64x128xf32>
    %119 = tpu.matmul %117, %118, %cst_84 {dimension_numbers = #tpu.dot_dimension_numbers<[1], [0], [0], [1], [0, 0, 1, 1], [], []>} : vector<64x32xbf16>, vector<32x128xbf16>, vector<64x128xf32> -> vector<64x128xf32>
    %c7 = arith.constant 7 : index
    %c0_85 = arith.constant 0 : index
    %120 = vector.load %arg3[%c7, %c0_85] : memref<24x128xf32, #tpu.memory_space<vmem>>, vector<1x128xf32>
    %121 = vector.extract_strided_slice %119 {offsets = [0, 0], sizes = [64, 16], strides = [1, 1]} : vector<64x128xf32> to vector<64x16xf32>
    %122 = arith.truncf %121 : vector<64x16xf32> to vector<64x16xbf16>
    %cst_86 = arith.constant dense<0.000000e+00> : vector<64x16xf32>
    %123 = tpu.matmul %0, %122, %cst_86 {dimension_numbers = #tpu.dot_dimension_numbers<[1], [0], [0], [1], [0, 0, 1, 1], [], []>} : vector<64x64xbf16>, vector<64x16xbf16>, vector<64x16xf32> -> vector<64x16xf32>
    %124 = vector.extract_strided_slice %120 {offsets = [0, 0], sizes = [1, 16], strides = [1, 1]} : vector<1x128xf32> to vector<1x16xf32>
    %125 = vector.broadcast %124 : vector<1x16xf32> to vector<64x16xf32>
    %126 = arith.addf %123, %125 : vector<64x16xf32>
    %cst_87 = arith.constant 0.000000e+00 : f32
    %127 = vector.broadcast %cst_87 : f32 to vector<64x16xf32>
    %128 = arith.maximumf %126, %127 : vector<64x16xf32>
    %129 = vector.extract_strided_slice %119 {offsets = [0, 16], sizes = [64, 16], strides = [1, 1]} : vector<64x128xf32> to vector<64x16xf32>
    %130 = vector.extract_strided_slice %120 {offsets = [0, 16], sizes = [1, 16], strides = [1, 1]} : vector<1x128xf32> to vector<1x16xf32>
    %131 = vector.broadcast %130 : vector<1x16xf32> to vector<64x16xf32>
    %132 = arith.addf %129, %131 : vector<64x16xf32>
    %cst_88 = arith.constant 0.000000e+00 : f32
    %133 = vector.broadcast %cst_88 : f32 to vector<64x16xf32>
    %134 = arith.maximumf %132, %133 : vector<64x16xf32>
    %135 = arith.addf %128, %134 : vector<64x16xf32>
    %c0_89 = arith.constant 0 : index
    %c32_90 = arith.constant 32 : index
    %136 = vector.load %arg6[%c0_89, %c32_90] : memref<64x128xf32, #tpu.memory_space<vmem>>, vector<64x16xf32>
    tpu.vector_store %arg6[%c0_89, %c32_90], %135 {strides = array<i32>} : memref<64x128xf32, #tpu.memory_space<vmem>>, vector<64x16xf32>,
    %c0_91 = arith.constant 0 : index
    %c16_92 = arith.constant 16 : index
    %137 = vector.load %arg6[%c0_91, %c16_92] : memref<64x128xf32, #tpu.memory_space<vmem>>, vector<64x16xf32>
    %138 = arith.truncf %137 : vector<64x16xf32> to vector<64x16xbf16>
    %c416 = arith.constant 416 : index
    %c0_93 = arith.constant 0 : index
    %139 = vector.load %arg2[%c416, %c0_93] : memref<800x128xbf16, #tpu.memory_space<vmem>>, vector<16x128xbf16>
    %cst_94 = arith.constant dense<0.000000e+00> : vector<64x128xf32>
    %140 = tpu.matmul %138, %139, %cst_94 {dimension_numbers = #tpu.dot_dimension_numbers<[1], [0], [0], [1], [0, 0, 1, 1], [], []>} : vector<64x16xbf16>, vector<16x128xbf16>, vector<64x128xf32> -> vector<64x128xf32>
    %c8 = arith.constant 8 : index
    %c0_95 = arith.constant 0 : index
    %141 = vector.load %arg3[%c8, %c0_95] : memref<24x128xf32, #tpu.memory_space<vmem>>, vector<1x128xf32>
    %c0_96 = arith.constant 0 : index
    %c0_97 = arith.constant 0 : index
    %142 = vector.load %arg6[%c0_96, %c0_97] : memref<64x128xf32, #tpu.memory_space<vmem>>, vector<64x16xf32>
    %143 = vector.extract_strided_slice %140 {offsets = [0, 0], sizes = [64, 16], strides = [1, 1]} : vector<64x128xf32> to vector<64x16xf32>
    %144 = arith.truncf %143 : vector<64x16xf32> to vector<64x16xbf16>
    %cst_98 = arith.constant dense<0.000000e+00> : vector<64x16xf32>
    %145 = tpu.matmul %0, %144, %cst_98 {dimension_numbers = #tpu.dot_dimension_numbers<[1], [0], [0], [1], [0, 0, 1, 1], [], []>} : vector<64x64xbf16>, vector<64x16xbf16>, vector<64x16xf32> -> vector<64x16xf32>
    %146 = vector.extract_strided_slice %141 {offsets = [0, 0], sizes = [1, 16], strides = [1, 1]} : vector<1x128xf32> to vector<1x16xf32>
    %147 = vector.broadcast %146 : vector<1x16xf32> to vector<64x16xf32>
    %148 = arith.addf %145, %147 : vector<64x16xf32>
    %cst_99 = arith.constant 0.000000e+00 : f32
    %149 = vector.broadcast %cst_99 : f32 to vector<64x16xf32>
    %150 = arith.maximumf %148, %149 : vector<64x16xf32>
    %151 = arith.addf %142, %150 : vector<64x16xf32>
    %c0_100 = arith.constant 0 : index
    %c48_101 = arith.constant 48 : index
    %152 = vector.load %arg6[%c0_100, %c48_101] : memref<64x128xf32, #tpu.memory_space<vmem>>, vector<64x16xf32>
    tpu.vector_store %arg6[%c0_100, %c48_101], %151 {strides = array<i32>} : memref<64x128xf32, #tpu.memory_space<vmem>>, vector<64x16xf32>,
    %c0_102 = arith.constant 0 : index
    %c32_103 = arith.constant 32 : index
    %153 = vector.load %arg6[%c0_102, %c32_103] : memref<64x128xf32, #tpu.memory_space<vmem>>, vector<64x16xf32>
    %154 = arith.truncf %153 : vector<64x16xf32> to vector<64x16xbf16>
    %c432 = arith.constant 432 : index
    %c0_104 = arith.constant 0 : index
    %155 = vector.load %arg2[%c432, %c0_104] : memref<800x128xbf16, #tpu.memory_space<vmem>>, vector<16x128xbf16>
    %cst_105 = arith.constant dense<0.000000e+00> : vector<64x128xf32>
    %156 = tpu.matmul %154, %155, %cst_105 {dimension_numbers = #tpu.dot_dimension_numbers<[1], [0], [0], [1], [0, 0, 1, 1], [], []>} : vector<64x16xbf16>, vector<16x128xbf16>, vector<64x128xf32> -> vector<64x128xf32>
    %c9 = arith.constant 9 : index
    %c0_106 = arith.constant 0 : index
    %157 = vector.load %arg3[%c9, %c0_106] : memref<24x128xf32, #tpu.memory_space<vmem>>, vector<1x128xf32>
    %158 = vector.extract_strided_slice %156 {offsets = [0, 0], sizes = [64, 16], strides = [1, 1]} : vector<64x128xf32> to vector<64x16xf32>
    %159 = vector.extract_strided_slice %157 {offsets = [0, 0], sizes = [1, 16], strides = [1, 1]} : vector<1x128xf32> to vector<1x16xf32>
    %160 = vector.broadcast %159 : vector<1x16xf32> to vector<64x16xf32>
    %161 = arith.addf %158, %160 : vector<64x16xf32>
    %cst_107 = arith.constant 0.000000e+00 : f32
    %162 = vector.broadcast %cst_107 : f32 to vector<64x16xf32>
    %163 = arith.maximumf %161, %162 : vector<64x16xf32>
    %c0_108 = arith.constant 0 : index
    %c48_109 = arith.constant 48 : index
    %164 = vector.load %arg6[%c0_108, %c48_109] : memref<64x128xf32, #tpu.memory_space<vmem>>, vector<64x16xf32>
    %165 = arith.addf %163, %164 : vector<64x16xf32>
    %c0_110 = arith.constant 0 : index
    %c64_111 = arith.constant 64 : index
    %166 = vector.load %arg6[%c0_110, %c64_111] : memref<64x128xf32, #tpu.memory_space<vmem>>, vector<64x16xf32>
    tpu.vector_store %arg6[%c0_110, %c64_111], %165 {strides = array<i32>} : memref<64x128xf32, #tpu.memory_space<vmem>>, vector<64x16xf32>,
    %c0_112 = arith.constant 0 : index
    %c32_113 = arith.constant 32 : index
    %167 = vector.load %arg6[%c0_112, %c32_113] : memref<64x128xf32, #tpu.memory_space<vmem>>, vector<64x48xf32>
    %168 = arith.truncf %167 : vector<64x48xf32> to vector<64x48xbf16>
    %c448 = arith.constant 448 : index
    %c0_114 = arith.constant 0 : index
    %169 = vector.load %arg2[%c448, %c0_114] : memref<800x128xbf16, #tpu.memory_space<vmem>>, vector<48x128xbf16>
    %cst_115 = arith.constant dense<0.000000e+00> : vector<64x128xf32>
    %170 = tpu.matmul %168, %169, %cst_115 {dimension_numbers = #tpu.dot_dimension_numbers<[1], [0], [0], [1], [0, 0, 1, 1], [], []>} : vector<64x48xbf16>, vector<48x128xbf16>, vector<64x128xf32> -> vector<64x128xf32>
    %c10 = arith.constant 10 : index
    %c0_116 = arith.constant 0 : index
    %171 = vector.load %arg3[%c10, %c0_116] : memref<24x128xf32, #tpu.memory_space<vmem>>, vector<1x128xf32>
    %172 = vector.extract_strided_slice %170 {offsets = [0, 0], sizes = [64, 16], strides = [1, 1]} : vector<64x128xf32> to vector<64x16xf32>
    %173 = arith.truncf %172 : vector<64x16xf32> to vector<64x16xbf16>
    %cst_117 = arith.constant dense<0.000000e+00> : vector<64x16xf32>
    %174 = tpu.matmul %0, %173, %cst_117 {dimension_numbers = #tpu.dot_dimension_numbers<[1], [0], [0], [1], [0, 0, 1, 1], [], []>} : vector<64x64xbf16>, vector<64x16xbf16>, vector<64x16xf32> -> vector<64x16xf32>
    %175 = vector.extract_strided_slice %171 {offsets = [0, 0], sizes = [1, 16], strides = [1, 1]} : vector<1x128xf32> to vector<1x16xf32>
    %176 = vector.broadcast %175 : vector<1x16xf32> to vector<64x16xf32>
    %177 = arith.addf %174, %176 : vector<64x16xf32>
    %cst_118 = arith.constant 0.000000e+00 : f32
    %178 = vector.broadcast %cst_118 : f32 to vector<64x16xf32>
    %179 = arith.maximumf %177, %178 : vector<64x16xf32>
    %180 = vector.extract_strided_slice %170 {offsets = [0, 16], sizes = [64, 16], strides = [1, 1]} : vector<64x128xf32> to vector<64x16xf32>
    %181 = vector.extract_strided_slice %171 {offsets = [0, 16], sizes = [1, 16], strides = [1, 1]} : vector<1x128xf32> to vector<1x16xf32>
    %182 = vector.broadcast %181 : vector<1x16xf32> to vector<64x16xf32>
    %183 = arith.addf %180, %182 : vector<64x16xf32>
    %cst_119 = arith.constant 0.000000e+00 : f32
    %184 = vector.broadcast %cst_119 : f32 to vector<64x16xf32>
    %185 = arith.maximumf %183, %184 : vector<64x16xf32>
    %186 = arith.addf %179, %185 : vector<64x16xf32>
    %c0_120 = arith.constant 0 : index
    %c80_121 = arith.constant 80 : index
    %187 = vector.load %arg6[%c0_120, %c80_121] : memref<64x128xf32, #tpu.memory_space<vmem>>, vector<64x16xf32>
    tpu.vector_store %arg6[%c0_120, %c80_121], %186 {strides = array<i32>} : memref<64x128xf32, #tpu.memory_space<vmem>>, vector<64x16xf32>,
    %c0_122 = arith.constant 0 : index
    %c64_123 = arith.constant 64 : index
    %188 = vector.load %arg5[%c0_122, %c64_123] : memref<64x128xf32, #tpu.memory_space<vmem>>, vector<64x64xf32>
    %c0_124 = arith.constant 0 : index
    %c0_125 = arith.constant 0 : index
    %189 = vector.load %arg5[%c0_124, %c0_125] : memref<64x128xf32, #tpu.memory_space<vmem>>, vector<64x64xf32>
    tpu.vector_store %arg5[%c0_124, %c0_125], %188 {strides = array<i32>} : memref<64x128xf32, #tpu.memory_space<vmem>>, vector<64x64xf32>,
    %c0_126 = arith.constant 0 : index
    %c32_127 = arith.constant 32 : index
    %190 = vector.load %arg6[%c0_126, %c32_127] : memref<64x128xf32, #tpu.memory_space<vmem>>, vector<64x64xf32>
    %c0_128 = arith.constant 0 : index
    %c64_129 = arith.constant 64 : index
    %191 = vector.load %arg5[%c0_128, %c64_129] : memref<64x128xf32, #tpu.memory_space<vmem>>, vector<64x64xf32>
    tpu.vector_store %arg5[%c0_128, %c64_129], %190 {strides = array<i32>} : memref<64x128xf32, #tpu.memory_space<vmem>>, vector<64x64xf32>,
    %cst_130 = arith.constant 0.000000e+00 : f32
    %192 = vector.broadcast %cst_130 : f32 to vector<64x128xf32>
    %c0_131 = arith.constant 0 : index
    %c0_132 = arith.constant 0 : index
    %193 = vector.load %arg6[%c0_131, %c0_132] : memref<64x128xf32, #tpu.memory_space<vmem>>, vector<64x128xf32>
    tpu.vector_store %arg6[%c0_131, %c0_132], %192 {strides = array<i32>} : memref<64x128xf32, #tpu.memory_space<vmem>>, vector<64x128xf32>,
    %c0_133 = arith.constant 0 : index
    %c0_134 = arith.constant 0 : index
    %194 = vector.load %arg5[%c0_133, %c0_134] : memref<64x128xf32, #tpu.memory_space<vmem>>, vector<64x128xf32>
    %195 = arith.truncf %194 : vector<64x128xf32> to vector<64x128xbf16>
    %c496 = arith.constant 496 : index
    %c0_135 = arith.constant 0 : index
    %196 = vector.load %arg2[%c496, %c0_135] : memref<800x128xbf16, #tpu.memory_space<vmem>>, vector<128x128xbf16>
    %cst_136 = arith.constant dense<0.000000e+00> : vector<64x128xf32>
    %197 = tpu.matmul %195, %196, %cst_136 {dimension_numbers = #tpu.dot_dimension_numbers<[1], [0], [0], [1], [0, 0, 1, 1], [], []>} : vector<64x128xbf16>, vector<128x128xbf16>, vector<64x128xf32> -> vector<64x128xf32>
    %c11 = arith.constant 11 : index
    %c0_137 = arith.constant 0 : index
    %198 = vector.load %arg3[%c11, %c0_137] : memref<24x128xf32, #tpu.memory_space<vmem>>, vector<1x128xf32>
    %199 = vector.broadcast %198 : vector<1x128xf32> to vector<64x128xf32>
    %200 = arith.addf %197, %199 : vector<64x128xf32>
    %cst_138 = arith.constant 0.000000e+00 : f32
    %201 = vector.broadcast %cst_138 : f32 to vector<64x128xf32>
    %202 = arith.maximumf %200, %201 : vector<64x128xf32>
    %203 = vector.extract_strided_slice %202 {offsets = [0, 0], sizes = [64, 32], strides = [1, 1]} : vector<64x128xf32> to vector<64x32xf32>
    %c0_139 = arith.constant 0 : index
    %c0_140 = arith.constant 0 : index
    %204 = vector.load %arg6[%c0_139, %c0_140] : memref<64x128xf32, #tpu.memory_space<vmem>>, vector<64x32xf32>
    tpu.vector_store %arg6[%c0_139, %c0_140], %203 {strides = array<i32>} : memref<64x128xf32, #tpu.memory_space<vmem>>, vector<64x32xf32>,
    %c0_141 = arith.constant 0 : index
    %c0_142 = arith.constant 0 : index
    %205 = vector.load %arg6[%c0_141, %c0_142] : memref<64x128xf32, #tpu.memory_space<vmem>>, vector<64x32xf32>
    %206 = arith.truncf %205 : vector<64x32xf32> to vector<64x32xbf16>
    %c624 = arith.constant 624 : index
    %c0_143 = arith.constant 0 : index
    %207 = vector.load %arg2[%c624, %c0_143] : memref<800x128xbf16, #tpu.memory_space<vmem>>, vector<32x128xbf16>
    %cst_144 = arith.constant dense<0.000000e+00> : vector<64x128xf32>
    %208 = tpu.matmul %206, %207, %cst_144 {dimension_numbers = #tpu.dot_dimension_numbers<[1], [0], [0], [1], [0, 0, 1, 1], [], []>} : vector<64x32xbf16>, vector<32x128xbf16>, vector<64x128xf32> -> vector<64x128xf32>
    %c12 = arith.constant 12 : index
    %c0_145 = arith.constant 0 : index
    %209 = vector.load %arg3[%c12, %c0_145] : memref<24x128xf32, #tpu.memory_space<vmem>>, vector<1x128xf32>
    %210 = vector.extract_strided_slice %208 {offsets = [0, 0], sizes = [64, 16], strides = [1, 1]} : vector<64x128xf32> to vector<64x16xf32>
    %211 = arith.truncf %210 : vector<64x16xf32> to vector<64x16xbf16>
    %cst_146 = arith.constant dense<0.000000e+00> : vector<64x16xf32>
    %212 = tpu.matmul %0, %211, %cst_146 {dimension_numbers = #tpu.dot_dimension_numbers<[1], [0], [0], [1], [0, 0, 1, 1], [], []>} : vector<64x64xbf16>, vector<64x16xbf16>, vector<64x16xf32> -> vector<64x16xf32>
    %213 = vector.extract_strided_slice %209 {offsets = [0, 0], sizes = [1, 16], strides = [1, 1]} : vector<1x128xf32> to vector<1x16xf32>
    %214 = vector.broadcast %213 : vector<1x16xf32> to vector<64x16xf32>
    %215 = arith.addf %212, %214 : vector<64x16xf32>
    %cst_147 = arith.constant 0.000000e+00 : f32
    %216 = vector.broadcast %cst_147 : f32 to vector<64x16xf32>
    %217 = arith.maximumf %215, %216 : vector<64x16xf32>
    %218 = vector.extract_strided_slice %208 {offsets = [0, 16], sizes = [64, 16], strides = [1, 1]} : vector<64x128xf32> to vector<64x16xf32>
    %219 = vector.extract_strided_slice %209 {offsets = [0, 16], sizes = [1, 16], strides = [1, 1]} : vector<1x128xf32> to vector<1x16xf32>
    %220 = vector.broadcast %219 : vector<1x16xf32> to vector<64x16xf32>
    %221 = arith.addf %218, %220 : vector<64x16xf32>
    %cst_148 = arith.constant 0.000000e+00 : f32
    %222 = vector.broadcast %cst_148 : f32 to vector<64x16xf32>
    %223 = arith.maximumf %221, %222 : vector<64x16xf32>
    %224 = arith.addf %217, %223 : vector<64x16xf32>
    %c0_149 = arith.constant 0 : index
    %c32_150 = arith.constant 32 : index
    %225 = vector.load %arg6[%c0_149, %c32_150] : memref<64x128xf32, #tpu.memory_space<vmem>>, vector<64x16xf32>
    tpu.vector_store %arg6[%c0_149, %c32_150], %224 {strides = array<i32>} : memref<64x128xf32, #tpu.memory_space<vmem>>, vector<64x16xf32>,
    %c0_151 = arith.constant 0 : index
    %c16_152 = arith.constant 16 : index
    %226 = vector.load %arg6[%c0_151, %c16_152] : memref<64x128xf32, #tpu.memory_space<vmem>>, vector<64x16xf32>
    %227 = arith.truncf %226 : vector<64x16xf32> to vector<64x16xbf16>
    %c656 = arith.constant 656 : index
    %c0_153 = arith.constant 0 : index
    %228 = vector.load %arg2[%c656, %c0_153] : memref<800x128xbf16, #tpu.memory_space<vmem>>, vector<16x128xbf16>
    %cst_154 = arith.constant dense<0.000000e+00> : vector<64x128xf32>
    %229 = tpu.matmul %227, %228, %cst_154 {dimension_numbers = #tpu.dot_dimension_numbers<[1], [0], [0], [1], [0, 0, 1, 1], [], []>} : vector<64x16xbf16>, vector<16x128xbf16>, vector<64x128xf32> -> vector<64x128xf32>
    %c13 = arith.constant 13 : index
    %c0_155 = arith.constant 0 : index
    %230 = vector.load %arg3[%c13, %c0_155] : memref<24x128xf32, #tpu.memory_space<vmem>>, vector<1x128xf32>
    %c0_156 = arith.constant 0 : index
    %c0_157 = arith.constant 0 : index
    %231 = vector.load %arg6[%c0_156, %c0_157] : memref<64x128xf32, #tpu.memory_space<vmem>>, vector<64x16xf32>
    %232 = vector.extract_strided_slice %229 {offsets = [0, 0], sizes = [64, 16], strides = [1, 1]} : vector<64x128xf32> to vector<64x16xf32>
    %233 = arith.truncf %232 : vector<64x16xf32> to vector<64x16xbf16>
    %cst_158 = arith.constant dense<0.000000e+00> : vector<64x16xf32>
    %234 = tpu.matmul %0, %233, %cst_158 {dimension_numbers = #tpu.dot_dimension_numbers<[1], [0], [0], [1], [0, 0, 1, 1], [], []>} : vector<64x64xbf16>, vector<64x16xbf16>, vector<64x16xf32> -> vector<64x16xf32>
    %235 = vector.extract_strided_slice %230 {offsets = [0, 0], sizes = [1, 16], strides = [1, 1]} : vector<1x128xf32> to vector<1x16xf32>
    %236 = vector.broadcast %235 : vector<1x16xf32> to vector<64x16xf32>
    %237 = arith.addf %234, %236 : vector<64x16xf32>
    %cst_159 = arith.constant 0.000000e+00 : f32
    %238 = vector.broadcast %cst_159 : f32 to vector<64x16xf32>
    %239 = arith.maximumf %237, %238 : vector<64x16xf32>
    %240 = arith.addf %231, %239 : vector<64x16xf32>
    %c0_160 = arith.constant 0 : index
    %c48_161 = arith.constant 48 : index
    %241 = vector.load %arg6[%c0_160, %c48_161] : memref<64x128xf32, #tpu.memory_space<vmem>>, vector<64x16xf32>
    tpu.vector_store %arg6[%c0_160, %c48_161], %240 {strides = array<i32>} : memref<64x128xf32, #tpu.memory_space<vmem>>, vector<64x16xf32>,
    %c0_162 = arith.constant 0 : index
    %c32_163 = arith.constant 32 : index
    %242 = vector.load %arg6[%c0_162, %c32_163] : memref<64x128xf32, #tpu.memory_space<vmem>>, vector<64x16xf32>
    %243 = arith.truncf %242 : vector<64x16xf32> to vector<64x16xbf16>
    %c672 = arith.constant 672 : index
    %c0_164 = arith.constant 0 : index
    %244 = vector.load %arg2[%c672, %c0_164] : memref<800x128xbf16, #tpu.memory_space<vmem>>, vector<16x128xbf16>
    %cst_165 = arith.constant dense<0.000000e+00> : vector<64x128xf32>
    %245 = tpu.matmul %243, %244, %cst_165 {dimension_numbers = #tpu.dot_dimension_numbers<[1], [0], [0], [1], [0, 0, 1, 1], [], []>} : vector<64x16xbf16>, vector<16x128xbf16>, vector<64x128xf32> -> vector<64x128xf32>
    %c14 = arith.constant 14 : index
    %c0_166 = arith.constant 0 : index
    %246 = vector.load %arg3[%c14, %c0_166] : memref<24x128xf32, #tpu.memory_space<vmem>>, vector<1x128xf32>
    %247 = vector.extract_strided_slice %245 {offsets = [0, 0], sizes = [64, 16], strides = [1, 1]} : vector<64x128xf32> to vector<64x16xf32>
    %248 = vector.extract_strided_slice %246 {offsets = [0, 0], sizes = [1, 16], strides = [1, 1]} : vector<1x128xf32> to vector<1x16xf32>
    %249 = vector.broadcast %248 : vector<1x16xf32> to vector<64x16xf32>
    %250 = arith.addf %247, %249 : vector<64x16xf32>
    %cst_167 = arith.constant 0.000000e+00 : f32
    %251 = vector.broadcast %cst_167 : f32 to vector<64x16xf32>
    %252 = arith.maximumf %250, %251 : vector<64x16xf32>
    %c0_168 = arith.constant 0 : index
    %c48_169 = arith.constant 48 : index
    %253 = vector.load %arg6[%c0_168, %c48_169] : memref<64x128xf32, #tpu.memory_space<vmem>>, vector<64x16xf32>
    %254 = arith.addf %252, %253 : vector<64x16xf32>
    %c0_170 = arith.constant 0 : index
    %c64_171 = arith.constant 64 : index
    %255 = vector.load %arg6[%c0_170, %c64_171] : memref<64x128xf32, #tpu.memory_space<vmem>>, vector<64x16xf32>
    tpu.vector_store %arg6[%c0_170, %c64_171], %254 {strides = array<i32>} : memref<64x128xf32, #tpu.memory_space<vmem>>, vector<64x16xf32>,
    %c0_172 = arith.constant 0 : index
    %c32_173 = arith.constant 32 : index
    %256 = vector.load %arg6[%c0_172, %c32_173] : memref<64x128xf32, #tpu.memory_space<vmem>>, vector<64x48xf32>
    %257 = arith.truncf %256 : vector<64x48xf32> to vector<64x48xbf16>
    %c688 = arith.constant 688 : index
    %c0_174 = arith.constant 0 : index
    %258 = vector.load %arg2[%c688, %c0_174] : memref<800x128xbf16, #tpu.memory_space<vmem>>, vector<48x128xbf16>
    %cst_175 = arith.constant dense<0.000000e+00> : vector<64x128xf32>
    %259 = tpu.matmul %257, %258, %cst_175 {dimension_numbers = #tpu.dot_dimension_numbers<[1], [0], [0], [1], [0, 0, 1, 1], [], []>} : vector<64x48xbf16>, vector<48x128xbf16>, vector<64x128xf32> -> vector<64x128xf32>
    %c15 = arith.constant 15 : index
    %c0_176 = arith.constant 0 : index
    %260 = vector.load %arg3[%c15, %c0_176] : memref<24x128xf32, #tpu.memory_space<vmem>>, vector<1x128xf32>
    %261 = vector.extract_strided_slice %259 {offsets = [0, 0], sizes = [64, 16], strides = [1, 1]} : vector<64x128xf32> to vector<64x16xf32>
    %262 = arith.truncf %261 : vector<64x16xf32> to vector<64x16xbf16>
    %cst_177 = arith.constant dense<0.000000e+00> : vector<64x16xf32>
    %263 = tpu.matmul %0, %262, %cst_177 {dimension_numbers = #tpu.dot_dimension_numbers<[1], [0], [0], [1], [0, 0, 1, 1], [], []>} : vector<64x64xbf16>, vector<64x16xbf16>, vector<64x16xf32> -> vector<64x16xf32>
    %264 = vector.extract_strided_slice %260 {offsets = [0, 0], sizes = [1, 16], strides = [1, 1]} : vector<1x128xf32> to vector<1x16xf32>
    %265 = vector.broadcast %264 : vector<1x16xf32> to vector<64x16xf32>
    %266 = arith.addf %263, %265 : vector<64x16xf32>
    %cst_178 = arith.constant 0.000000e+00 : f32
    %267 = vector.broadcast %cst_178 : f32 to vector<64x16xf32>
    %268 = arith.maximumf %266, %267 : vector<64x16xf32>
    %269 = vector.extract_strided_slice %259 {offsets = [0, 16], sizes = [64, 16], strides = [1, 1]} : vector<64x128xf32> to vector<64x16xf32>
    %270 = vector.extract_strided_slice %260 {offsets = [0, 16], sizes = [1, 16], strides = [1, 1]} : vector<1x128xf32> to vector<1x16xf32>
    %271 = vector.broadcast %270 : vector<1x16xf32> to vector<64x16xf32>
    %272 = arith.addf %269, %271 : vector<64x16xf32>
    %cst_179 = arith.constant 0.000000e+00 : f32
    %273 = vector.broadcast %cst_179 : f32 to vector<64x16xf32>
    %274 = arith.maximumf %272, %273 : vector<64x16xf32>
    %275 = arith.addf %268, %274 : vector<64x16xf32>
    %c0_180 = arith.constant 0 : index
    %c80_181 = arith.constant 80 : index
    %276 = vector.load %arg6[%c0_180, %c80_181] : memref<64x128xf32, #tpu.memory_space<vmem>>, vector<64x16xf32>
    tpu.vector_store %arg6[%c0_180, %c80_181], %275 {strides = array<i32>} : memref<64x128xf32, #tpu.memory_space<vmem>>, vector<64x16xf32>,
    %c0_182 = arith.constant 0 : index
    %c64_183 = arith.constant 64 : index
    %277 = vector.load %arg5[%c0_182, %c64_183] : memref<64x128xf32, #tpu.memory_space<vmem>>, vector<64x64xf32>
    %c0_184 = arith.constant 0 : index
    %c0_185 = arith.constant 0 : index
    %278 = vector.load %arg5[%c0_184, %c0_185] : memref<64x128xf32, #tpu.memory_space<vmem>>, vector<64x64xf32>
    tpu.vector_store %arg5[%c0_184, %c0_185], %277 {strides = array<i32>} : memref<64x128xf32, #tpu.memory_space<vmem>>, vector<64x64xf32>,
    %c0_186 = arith.constant 0 : index
    %c32_187 = arith.constant 32 : index
    %279 = vector.load %arg6[%c0_186, %c32_187] : memref<64x128xf32, #tpu.memory_space<vmem>>, vector<64x64xf32>
    %c0_188 = arith.constant 0 : index
    %c64_189 = arith.constant 64 : index
    %280 = vector.load %arg5[%c0_188, %c64_189] : memref<64x128xf32, #tpu.memory_space<vmem>>, vector<64x64xf32>
    tpu.vector_store %arg5[%c0_188, %c64_189], %279 {strides = array<i32>} : memref<64x128xf32, #tpu.memory_space<vmem>>, vector<64x64xf32>,
    %c0_190 = arith.constant 0 : index
    %c64_191 = arith.constant 64 : index
    %281 = vector.load %arg5[%c0_190, %c64_191] : memref<64x128xf32, #tpu.memory_space<vmem>>, vector<64x64xf32>
    %282 = arith.truncf %281 : vector<64x64xf32> to vector<64x64xbf16>
    %c736 = arith.constant 736 : index
    %c0_192 = arith.constant 0 : index
    %283 = vector.load %arg2[%c736, %c0_192] : memref<800x128xbf16, #tpu.memory_space<vmem>>, vector<64x128xbf16>
    %cst_193 = arith.constant dense<0.000000e+00> : vector<64x128xf32>
    %284 = tpu.matmul %282, %283, %cst_193 {dimension_numbers = #tpu.dot_dimension_numbers<[1], [0], [0], [1], [0, 0, 1, 1], [], []>} : vector<64x64xbf16>, vector<64x128xbf16>, vector<64x128xf32> -> vector<64x128xf32>
    %c16_194 = arith.constant 16 : index
    %c0_195 = arith.constant 0 : index
    %285 = vector.load %arg3[%c16_194, %c0_195] : memref<24x128xf32, #tpu.memory_space<vmem>>, vector<1x128xf32>
    %286 = vector.broadcast %285 : vector<1x128xf32> to vector<64x128xf32>
    %287 = arith.addf %284, %286 : vector<64x128xf32>
    %c0_196 = arith.constant 0 : index
    %c0_197 = arith.constant 0 : index
    %288 = vector.load %arg4[%c0_196, %c0_197] : memref<64x128xf32, #tpu.memory_space<vmem>>, vector<64x128xf32>
    tpu.vector_store %arg4[%c0_196, %c0_197], %287 {strides = array<i32>} : memref<64x128xf32, #tpu.memory_space<vmem>>, vector<64x128xf32>,
    return
  }
}

</mosaic_0001>

<llo_original>
// kernel: tpu_custom_call.1
$region0: #{tpu_custom_call.1}
  #allocation0 [shape = 'u32[]', space=smem, size = 0x4, offset = 0x4, fixed_abs, tag = 'smem constant byte address 0x4 - core index']
  #allocation1 [shape = 'u32[144,128]{1,0:T(1,128)}', space=vmem, size = 0x12000, scoped, tag = 'internal scratch']
  #allocation2 [shape = 'f32[64,128]{1,0:T(8,128)}', space=vmem, size = 0x8000, scoped, tag = 'scratch operand']
  #allocation3 [shape = 'f32[64,128]{1,0:T(8,128)}', space=vmem, size = 0x8000, scoped, tag = 'scratch operand']
  %s0 = inlined_call_operand.vmem [shape: f32[64,16], index: 0, kind: input, shape index: {}]
  %s1 = inlined_call_operand.vmem [shape: bf16[64,64], index: 1, kind: input, shape index: {}]
  %s2 = inlined_call_operand.hbm [shape: bf16[800,128], index: 2, kind: input, shape index: {}]
  %s3 = inlined_call_operand.vmem [shape: f32[24,128], index: 3, kind: input, shape index: {}]
  %s4 = inlined_call_operand.hbm [shape: f32[64,128], index: 4, kind: output, shape index: {}]
  %s5 = sld [smem:[#allocation0]]
  $region30: #{tpu_custom_call.1} parent=0
    _
  %s7 = ssub.s32 1, %s5
  %s8 = scalar_select 0, %s7, %s5
  $region1: #{tpu_custom_call.1} parent=0
    #allocation4 [shape = 'u8[204800]{0}', space=vmem, size = 0x32000, scoped, tag = 'input window, operand 2, single buffered']
    #allocation5 [shape = 's32[1]{0}', space=sflag, size = 0x4, scoped, tag = 'scoped memory for tpu_custom_call.1']
    #allocation6 [shape = 's32[1]{0}', space=sflag, size = 0x4, scoped, tag = 'scoped memory for tpu_custom_call.1']
    #allocation7 [shape = 'u8[32768]{0}', space=vmem, size = 0x8000, scoped, tag = 'output window, operand 0, single buffered']
    %9 = vsyncpa [#allocation5], 0
    %10 = vsyncpa [#allocation6], 0
    // Predicated region
    $region2: #{tpu_custom_call.1} parent=1 // pred_check
      _
    $region3: #{tpu_custom_call.1} parent=1 // pred_check_branch
      %12 = sbr.rel (0) target = $region5
    $region4: #{tpu_custom_call.1} parent=1 // pred_region
      _
    $region5: #{tpu_custom_call.1} parent=1 // pred_fallthru
      _
    // Predicated region
    $region6: #{tpu_custom_call.1} parent=1 // pred_check
      _
    $region7: #{tpu_custom_call.1} parent=1 // pred_check_branch
      %14 = sbr.rel (0) target = $region9
    $region8: #{tpu_custom_call.1} parent=1 // pred_region
      _
    $region9: #{tpu_custom_call.1} parent=1 // pred_fallthru
      _
    // Predicated region
    $region10: #{tpu_custom_call.1} parent=1 // pred_check
      _
    $region11: #{tpu_custom_call.1} parent=1 // pred_check_branch
      %16 = sbr.rel (0) target = $region13
    $region12: #{tpu_custom_call.1} parent=1 // pred_region
      %s18 = ssub.s32 6400, 6400
      %19 = vsyncadd [#allocation5], %s18
      %s20 = sshll.u32 [#allocation4], 4
      %s21 = int_to_ptr.vmem [resolvable:$true] %s20
      %26 = dma.hbm_to_vmem [thread:$0]  %s2, 6400, %s21, [#allocation5], 64, 64, 4
    $region13: #{tpu_custom_call.1} parent=1 // pred_fallthru
      _
    // Predicated region
    $region14: #{tpu_custom_call.1} parent=1 // pred_check
      _
    $region15: #{tpu_custom_call.1} parent=1 // pred_check_branch
      %28 = sbr.rel (0) target = $region17
    $region16: #{tpu_custom_call.1} parent=1 // pred_region
      _
    $region17: #{tpu_custom_call.1} parent=1 // pred_fallthru
      _
    // Predicated region
    $region18: #{tpu_custom_call.1} parent=1 // pred_check
      _
    $region19: #{tpu_custom_call.1} parent=1 // pred_check_branch
      %30 = sbr.rel (0) target = $region21
    $region20: #{tpu_custom_call.1} parent=1 // pred_region
      %31 = dma.done [#allocation5], 6400
    $region21: #{tpu_custom_call.1} parent=1 // pred_fallthru
      _
    %v33 = vld [vmem:[%s1] sm:$0xf]
    %v34 = vld [vmem:[%s1 + $0x4] sm:$0xf]
    %v35 = vld [vmem:[%s1 + $0x8] sm:$0xf]
    %v36 = vld [vmem:[%s1 + $0xc] sm:$0xf]
    %v37 = vld [vmem:[%s1 + $0x10] sm:$0xf]
    %v38 = vld [vmem:[%s1 + $0x14] sm:$0xf]
    %v39 = vld [vmem:[%s1 + $0x18] sm:$0xf]
    %v40 = vld [vmem:[%s1 + $0x1c] sm:$0xf]
    %v41 = vld [vmem:[%s0] sm:$0xff]
    %v42 = vld [vmem:[%s0 + $0x8] sm:$0xff]
    %v43 = vld [vmem:[%s0 + $0x10] sm:$0xff]
    %v44 = vld [vmem:[%s0 + $0x18] sm:$0xff]
    %v45 = vld [vmem:[%s0 + $0x20] sm:$0xff]
    %v46 = vld [vmem:[%s0 + $0x28] sm:$0xff]
    %v47 = vld [vmem:[%s0 + $0x30] sm:$0xff]
    %v48 = vld [vmem:[%s0 + $0x38] sm:$0xff]
    %v49 = vpack.c.bf16 %v42, %v41
    %v50 = vpack.c.bf16 %v44, %v43
    %v51 = vpack.c.bf16 %v46, %v45
    %v52 = vpack.c.bf16 %v48, %v47
    %v53 = vld [vmem:[#allocation4] sm:$0xf]
    %v54 = vld [vmem:[#allocation4 + $0x4] sm:$0xf]
    %v55 = vld [vmem:[%s3] sm:$0x1]
    %v56 = vlaneseq
    %v57 = vshrl.u32 %v56, 7
    %v58 = vsub.s32 0, %v57
    %v59 = vrot.slane %v55, %v58
    %v62 = vunpack.c.l.b16 %v53
    %v63 = vunpack.c.l.b16 %v54
    %v64 = vpack.c.b16 %v63, %v62
    %vm66 = vcmask 130048
    %v68 = vsel %vm66, %v49, 0
    %v71 = vsel %vm66, %v50, 0
    %v74 = vsel %vm66, %v51, 0
    %v77 = vsel %vm66, %v52, 0
    %79 = vmatprep.subr.bf16.mxu0 0
    %80 = vmatpush1.bf16.msra.mxu0 0
    %81 = vmatprep.subr.bf16.mxu0 0
    %82 = vmatpush1.bf16.msra.mxu0 0
    %83 = vmatprep.subr.bf16.mxu0 0
    %84 = vmatpush1.bf16.msra.mxu0 0
    %85 = vmatprep.subr.bf16.mxu0 0
    %86 = vmatpush1.bf16.msra.mxu0 0
    %87 = vmatprep.subr.bf16.mxu0 0
    %88 = vmatpush1.bf16.msra.mxu0 0
    %89 = vmatprep.subr.bf16.mxu0 0
    %90 = vmatpush1.bf16.msra.mxu0 0
    %91 = vmatprep.subr.bf16.mxu0 0
    %92 = vmatpush1.bf16.msra.mxu0 0
    %93 = vmatprep.subr.bf16.mxu0 0
    %94 = vmatpush1.bf16.msra.mxu0 %v64
    %95 = vmatprep.subr.bf16.mxu0 0
    %96 = vmatpush2.bf16.msra.mxu0 0
    %97 = vmatprep.subr.bf16.mxu0 0
    %98 = vmatpush2.bf16.msra.mxu0 0
    %99 = vmatprep.subr.bf16.mxu0 0
    %100 = vmatpush2.bf16.msra.mxu0 0
    %101 = vmatprep.subr.bf16.mxu0 0
    %102 = vmatpush2.bf16.msra.mxu0 0
    %103 = vmatprep.subr.bf16.mxu0 0
    %104 = vmatpush2.bf16.msra.mxu0 0
    %105 = vmatprep.subr.bf16.mxu0 0
    %106 = vmatpush2.bf16.msra.mxu0 0
    %107 = vmatprep.subr.bf16.mxu0 0
    %108 = vmatpush2.bf16.msra.mxu0 0
    %109 = vmatprep.subr.bf16.mxu0 0
    %110 = vmatpush2.bf16.msra.mxu0 0
    %111 = vmatprep.mubr.bf16.mxu0 0
    %112 = vmatmul.mubr.bf16.gmra.mxu0 %v68
    %v113 = vpop.f32.mrf.mxu0
    %v114 = vadd.f32 %v59, %v113
    %v115 = vpop.f32.mrf.mxu0
    %v116 = vpop.f32.mrf.mxu0
    %v117 = vadd.f32 %v59, %v116
    %v118 = vpop.f32.mrf.mxu0
    %119 = vmatprep.mubr.bf16.mxu0 0
    %120 = vmatmul.mubr.bf16.gmra.mxu0 %v71
    %v121 = vpop.f32.mrf.mxu0
    %v122 = vadd.f32 %v59, %v121
    %v123 = vpop.f32.mrf.mxu0
    %v124 = vpop.f32.mrf.mxu0
    %v125 = vadd.f32 %v59, %v124
    %v126 = vpop.f32.mrf.mxu0
    %127 = vmatprep.mubr.bf16.mxu0 0
    %128 = vmatmul.mubr.bf16.gmra.mxu0 %v74
    %v129 = vpop.f32.mrf.mxu0
    %v130 = vadd.f32 %v59, %v129
    %v131 = vpop.f32.mrf.mxu0
    %v132 = vpop.f32.mrf.mxu0
    %v133 = vadd.f32 %v59, %v132
    %v134 = vpop.f32.mrf.mxu0
    %135 = vmatprep.mubr.bf16.mxu0 0
    %136 = vmatmul.mubr.bf16.gmra.mxu0 %v77
    %v137 = vpop.f32.mrf.mxu0
    %v138 = vadd.f32 %v59, %v137
    %v139 = vpop.f32.mrf.mxu0
    %v140 = vpop.f32.mrf.mxu0
    %v141 = vadd.f32 %v59, %v140
    %v142 = vpop.f32.mrf.mxu0
    %143 = vdwg.mxu0
    %144 = vst [vmem:[#allocation2] sm:$0xff] 0.0
    %145 = vst [vmem:[#allocation2 + $0x8] sm:$0xff] 0.0
    %146 = vst [vmem:[#allocation2 + $0x10] sm:$0xff] 0.0
    %147 = vst [vmem:[#allocation2 + $0x18] sm:$0xff] 0.0
    %148 = vst [vmem:[#allocation2 + $0x20] sm:$0xff] 0.0
    %149 = vst [vmem:[#allocation2 + $0x28] sm:$0xff] 0.0
    %150 = vst [vmem:[#allocation2 + $0x30] sm:$0xff] 0.0
    %151 = vst [vmem:[#allocation2 + $0x38] sm:$0xff] 0.0
    %vm152 = vcmask 392192
    %153 = vst.msk [vmem:[#allocation2] sm:$0xff] %vm152, %v114
    %154 = vst.msk [vmem:[#allocation2 + $0x8] sm:$0xff] %vm152, %v117
    %155 = vst.msk [vmem:[#allocation2 + $0x10] sm:$0xff] %vm152, %v122
    %156 = vst.msk [vmem:[#allocation2 + $0x18] sm:$0xff] %vm152, %v125
    %157 = vst.msk [vmem:[#allocation2 + $0x20] sm:$0xff] %vm152, %v130
    %158 = vst.msk [vmem:[#allocation2 + $0x28] sm:$0xff] %vm152, %v133
    %159 = vst.msk [vmem:[#allocation2 + $0x30] sm:$0xff] %vm152, %v138
    %160 = vst.msk [vmem:[#allocation2 + $0x38] sm:$0xff] %vm152, %v141
    %169 = vrot.lane.b32.xlu0 %v114, 64
    %v170 = vpop.permute.xlu0 %169
    %171 = vrot.lane.b32.xlu0 %v117, 64
    %v172 = vpop.permute.xlu0 %171
    %173 = vrot.lane.b32.xlu0 %v122, 64
    %v174 = vpop.permute.xlu0 %173
    %175 = vrot.lane.b32.xlu0 %v125, 64
    %v176 = vpop.permute.xlu0 %175
    %177 = vrot.lane.b32.xlu0 %v130, 64
    %v178 = vpop.permute.xlu0 %177
    %179 = vrot.lane.b32.xlu0 %v133, 64
    %v180 = vpop.permute.xlu0 %179
    %181 = vrot.lane.b32.xlu0 %v138, 64
    %v182 = vpop.permute.xlu0 %181
    %183 = vrot.lane.b32.xlu0 %v141, 64
    %v184 = vpop.permute.xlu0 %183
    %vm193 = vcmask 916992
    %194 = vst.msk [vmem:[#allocation2] sm:$0xff] %vm193, %v170
    %195 = vst.msk [vmem:[#allocation2 + $0x8] sm:$0xff] %vm193, %v172
    %196 = vst.msk [vmem:[#allocation2 + $0x10] sm:$0xff] %vm193, %v174
    %197 = vst.msk [vmem:[#allocation2 + $0x18] sm:$0xff] %vm193, %v176
    %198 = vst.msk [vmem:[#allocation2 + $0x20] sm:$0xff] %vm193, %v178
    %199 = vst.msk [vmem:[#allocation2 + $0x28] sm:$0xff] %vm193, %v180
    %200 = vst.msk [vmem:[#allocation2 + $0x30] sm:$0xff] %vm193, %v182
    %201 = vst.msk [vmem:[#allocation2 + $0x38] sm:$0xff] %vm193, %v184
    %202 = vst [vmem:[#allocation3] sm:$0xff] 0.0
    %203 = vst [vmem:[#allocation3 + $0x8] sm:$0xff] 0.0
    %204 = vst [vmem:[#allocation3 + $0x10] sm:$0xff] 0.0
    %205 = vst [vmem:[#allocation3 + $0x18] sm:$0xff] 0.0
    %206 = vst [vmem:[#allocation3 + $0x20] sm:$0xff] 0.0
    %207 = vst [vmem:[#allocation3 + $0x28] sm:$0xff] 0.0
    %208 = vst [vmem:[#allocation3 + $0x30] sm:$0xff] 0.0
    %209 = vst [vmem:[#allocation3 + $0x38] sm:$0xff] 0.0
    %v210 = vld [vmem:[#allocation2] sm:$0xff]
    %v211 = vld [vmem:[#allocation2 + $0x8] sm:$0xff]
    %v212 = vld [vmem:[#allocation2 + $0x10] sm:$0xff]
    %v213 = vld [vmem:[#allocation2 + $0x18] sm:$0xff]
    %v214 = vld [vmem:[#allocation2 + $0x20] sm:$0xff]
    %v215 = vld [vmem:[#allocation2 + $0x28] sm:$0xff]
    %v216 = vld [vmem:[#allocation2 + $0x30] sm:$0xff]
    %v217 = vld [vmem:[#allocation2 + $0x38] sm:$0xff]
    %v218 = vpack.c.bf16 %v211, %v210
    %v219 = vpack.c.bf16 %v213, %v212
    %v220 = vpack.c.bf16 %v215, %v214
    %v221 = vpack.c.bf16 %v217, %v216
    %v222 = vld [vmem:[#allocation4 + $0x8] sm:$0xf]
    %v223 = vld [vmem:[#allocation4 + $0xc] sm:$0xf]
    %v224 = vld [vmem:[#allocation4 + $0x10] sm:$0xf]
    %v225 = vld [vmem:[#allocation4 + $0x14] sm:$0xf]
    %v226 = vld [vmem:[#allocation4 + $0x18] sm:$0xf]
    %v227 = vld [vmem:[#allocation4 + $0x1c] sm:$0xf]
    %v228 = vld [vmem:[#allocation4 + $0x20] sm:$0xf]
    %v229 = vld [vmem:[#allocation4 + $0x24] sm:$0xf]
    %v230 = vld [vmem:[#allocation4 + $0x28] sm:$0xf]
    %v231 = vld [vmem:[#allocation4 + $0x2c] sm:$0xf]
    %v232 = vld [vmem:[#allocation4 + $0x30] sm:$0xf]
    %v233 = vld [vmem:[#allocation4 + $0x34] sm:$0xf]
    %v234 = vld [vmem:[#allocation4 + $0x38] sm:$0xf]
    %v235 = vld [vmem:[#allocation4 + $0x3c] sm:$0xf]
    %v236 = vld [vmem:[#allocation4 + $0x40] sm:$0xf]
    %v237 = vld [vmem:[#allocation4 + $0x44] sm:$0xf]
    %v238 = vld [vmem:[%s3 + $0x1] sm:$0x1]
    %v239 = vlaneseq
    %v240 = vshrl.u32 %v239, 7
    %v241 = vsub.s32 0, %v240
    %v242 = vrot.slane %v238, %v241
    %v259 = vunpack.c.l.b16 %v222
    %v260 = vunpack.c.l.b16 %v223
    %v261 = vunpack.c.l.b16 %v224
    %v262 = vunpack.c.l.b16 %v225
    %v263 = vunpack.c.l.b16 %v226
    %v264 = vunpack.c.l.b16 %v227
    %v265 = vunpack.c.l.b16 %v228
    %v266 = vunpack.c.l.b16 %v229
    %v267 = vunpack.c.l.b16 %v230
    %v268 = vunpack.c.l.b16 %v231
    %v269 = vunpack.c.l.b16 %v232
    %v270 = vunpack.c.l.b16 %v233
    %v271 = vunpack.c.l.b16 %v234
    %v272 = vunpack.c.l.b16 %v235
    %v273 = vunpack.c.l.b16 %v236
    %v274 = vunpack.c.l.b16 %v237
    %v275 = vpack.c.b16 %v260, %v259
    %v276 = vpack.c.b16 %v262, %v261
    %v277 = vpack.c.b16 %v264, %v263
    %v278 = vpack.c.b16 %v266, %v265
    %v279 = vpack.c.b16 %v268, %v267
    %v280 = vpack.c.b16 %v270, %v269
    %v281 = vpack.c.b16 %v272, %v271
    %v282 = vpack.c.b16 %v274, %v273
    %291 = vmatprep.subr.bf16.mxu0 0
    %292 = vmatpush1.bf16.msra.mxu0 %v282
    %293 = vmatprep.subr.bf16.mxu0 0
    %294 = vmatpush1.bf16.msra.mxu0 %v281
    %295 = vmatprep.subr.bf16.mxu0 0
    %296 = vmatpush1.bf16.msra.mxu0 %v280
    %297 = vmatprep.subr.bf16.mxu0 0
    %298 = vmatpush1.bf16.msra.mxu0 %v279
    %299 = vmatprep.subr.bf16.mxu0 0
    %300 = vmatpush1.bf16.msra.mxu0 %v278
    %301 = vmatprep.subr.bf16.mxu0 0
    %302 = vmatpush1.bf16.msra.mxu0 %v277
    %303 = vmatprep.subr.bf16.mxu0 0
    %304 = vmatpush1.bf16.msra.mxu0 %v276
    %305 = vmatprep.subr.bf16.mxu0 0
    %306 = vmatpush1.bf16.msra.mxu0 %v275
    %307 = vmatprep.subr.bf16.mxu0 0
    %308 = vmatpush2.bf16.msra.mxu0 0
    %309 = vmatprep.subr.bf16.mxu0 0
    %310 = vmatpush2.bf16.msra.mxu0 0
    %311 = vmatprep.subr.bf16.mxu0 0
    %312 = vmatpush2.bf16.msra.mxu0 0
    %313 = vmatprep.subr.bf16.mxu0 0
    %314 = vmatpush2.bf16.msra.mxu0 0
    %315 = vmatprep.subr.bf16.mxu0 0
    %316 = vmatpush2.bf16.msra.mxu0 0
    %317 = vmatprep.subr.bf16.mxu0 0
    %318 = vmatpush2.bf16.msra.mxu0 0
    %319 = vmatprep.subr.bf16.mxu0 0
    %320 = vmatpush2.bf16.msra.mxu0 0
    %321 = vmatprep.subr.bf16.mxu0 0
    %322 = vmatpush2.bf16.msra.mxu0 0
    %323 = vmatprep.mubr.bf16.mxu0 0
    %324 = vmatmul.mubr.bf16.gmra.mxu0 %v218
    %v325 = vpop.f32.mrf.mxu0
    %v326 = vadd.f32 %v242, %v325
    %v327 = vpop.f32.mrf.mxu0
    %v328 = vpop.f32.mrf.mxu0
    %v329 = vadd.f32 %v242, %v328
    %v330 = vpop.f32.mrf.mxu0
    %331 = vmatprep.mubr.bf16.mxu0 0
    %332 = vmatmul.mubr.bf16.gmra.mxu0 %v219
    %v333 = vpop.f32.mrf.mxu0
    %v334 = vadd.f32 %v242, %v333
    %v335 = vpop.f32.mrf.mxu0
    %v336 = vpop.f32.mrf.mxu0
    %v337 = vadd.f32 %v242, %v336
    %v338 = vpop.f32.mrf.mxu0
    %339 = vmatprep.mubr.bf16.mxu0 0
    %340 = vmatmul.mubr.bf16.gmra.mxu0 %v220
    %v341 = vpop.f32.mrf.mxu0
    %v342 = vadd.f32 %v242, %v341
    %v343 = vpop.f32.mrf.mxu0
    %v344 = vpop.f32.mrf.mxu0
    %v345 = vadd.f32 %v242, %v344
    %v346 = vpop.f32.mrf.mxu0
    %347 = vmatprep.mubr.bf16.mxu0 0
    %348 = vmatmul.mubr.bf16.gmra.mxu0 %v221
    %v349 = vpop.f32.mrf.mxu0
    %v350 = vadd.f32 %v242, %v349
    %v351 = vpop.f32.mrf.mxu0
    %v352 = vpop.f32.mrf.mxu0
    %v353 = vadd.f32 %v242, %v352
    %v354 = vpop.f32.mrf.mxu0
    %355 = vdwg.mxu0
    %v356 = vmax.f32 %v326, 0.0
    %v357 = vmax.f32 %v329, 0.0
    %v358 = vmax.f32 %v334, 0.0
    %v359 = vmax.f32 %v337, 0.0
    %v360 = vmax.f32 %v342, 0.0
    %v361 = vmax.f32 %v345, 0.0
    %v362 = vmax.f32 %v350, 0.0
    %v363 = vmax.f32 %v353, 0.0
    %vm364 = vcmask 261120
    %365 = vst.msk [vmem:[#allocation3] sm:$0xff] %vm364, %v356
    %366 = vst.msk [vmem:[#allocation3 + $0x8] sm:$0xff] %vm364, %v357
    %367 = vst.msk [vmem:[#allocation3 + $0x10] sm:$0xff] %vm364, %v358
    %368 = vst.msk [vmem:[#allocation3 + $0x18] sm:$0xff] %vm364, %v359
    %369 = vst.msk [vmem:[#allocation3 + $0x20] sm:$0xff] %vm364, %v360
    %370 = vst.msk [vmem:[#allocation3 + $0x28] sm:$0xff] %vm364, %v361
    %371 = vst.msk [vmem:[#allocation3 + $0x30] sm:$0xff] %vm364, %v362
    %372 = vst.msk [vmem:[#allocation3 + $0x38] sm:$0xff] %vm364, %v363
    %v373 = vld [vmem:[#allocation3] sm:$0xff]
    %v374 = vld [vmem:[#allocation3 + $0x8] sm:$0xff]
    %v375 = vld [vmem:[#allocation3 + $0x10] sm:$0xff]
    %v376 = vld [vmem:[#allocation3 + $0x18] sm:$0xff]
    %v377 = vld [vmem:[#allocation3 + $0x20] sm:$0xff]
    %v378 = vld [vmem:[#allocation3 + $0x28] sm:$0xff]
    %v379 = vld [vmem:[#allocation3 + $0x30] sm:$0xff]
    %v380 = vld [vmem:[#allocation3 + $0x38] sm:$0xff]
    %v381 = vpack.c.bf16 %v374, %v373
    %v382 = vpack.c.bf16 %v376, %v375
    %v383 = vpack.c.bf16 %v378, %v377
    %v384 = vpack.c.bf16 %v380, %v379
    %v385 = vld [vmem:[#allocation4 + $0x48] sm:$0xf]
    %v386 = vld [vmem:[#allocation4 + $0x4c] sm:$0xf]
    %v387 = vld [vmem:[#allocation4 + $0x50] sm:$0xf]
    %v388 = vld [vmem:[#allocation4 + $0x54] sm:$0xf]
    %v393 = vunpack.c.l.b16 %v385
    %v394 = vunpack.c.l.b16 %v386
    %v395 = vunpack.c.l.b16 %v387
    %v396 = vunpack.c.l.b16 %v388
    %v397 = vpack.c.b16 %v394, %v393
    %v398 = vpack.c.b16 %v396, %v395
    %v402 = vsel %vm364, %v381, 0
    %v405 = vsel %vm364, %v382, 0
    %v408 = vsel %vm364, %v383, 0
    %v411 = vsel %vm364, %v384, 0
    %413 = vmatprep.subr.bf16.mxu0 0
    %414 = vmatpush1.bf16.msra.mxu0 0
    %415 = vmatprep.subr.bf16.mxu0 0
    %416 = vmatpush1.bf16.msra.mxu0 0
    %417 = vmatprep.subr.bf16.mxu0 0
    %418 = vmatpush1.bf16.msra.mxu0 0
    %419 = vmatprep.subr.bf16.mxu0 0
    %420 = vmatpush1.bf16.msra.mxu0 0
    %421 = vmatprep.subr.bf16.mxu0 0
    %422 = vmatpush1.bf16.msra.mxu0 0
    %423 = vmatprep.subr.bf16.mxu0 0
    %424 = vmatpush1.bf16.msra.mxu0 0
    %425 = vmatprep.subr.bf16.mxu0 0
    %426 = vmatpush1.bf16.msra.mxu0 %v398
    %427 = vmatprep.subr.bf16.mxu0 0
    %428 = vmatpush1.bf16.msra.mxu0 %v397
    %429 = vmatprep.subr.bf16.mxu0 0
    %430 = vmatpush2.bf16.msra.mxu0 0
    %431 = vmatprep.subr.bf16.mxu0 0
    %432 = vmatpush2.bf16.msra.mxu0 0
    %433 = vmatprep.subr.bf16.mxu0 0
    %434 = vmatpush2.bf16.msra.mxu0 0
    %435 = vmatprep.subr.bf16.mxu0 0
    %436 = vmatpush2.bf16.msra.mxu0 0
    %437 = vmatprep.subr.bf16.mxu0 0
    %438 = vmatpush2.bf16.msra.mxu0 0
    %439 = vmatprep.subr.bf16.mxu0 0
    %440 = vmatpush2.bf16.msra.mxu0 0
    %441 = vmatprep.subr.bf16.mxu0 0
    %442 = vmatpush2.bf16.msra.mxu0 0
    %443 = vmatprep.subr.bf16.mxu0 0
    %444 = vmatpush2.bf16.msra.mxu0 0
    %445 = vmatprep.mubr.bf16.mxu0 0
    %446 = vmatmul.mubr.bf16.gmra.mxu0 %v402
    %v447 = vpop.f32.mrf.mxu0
    %v448 = vadd.f32 0.0, %v447
    %v449 = vpop.f32.mrf.mxu0
    %v450 = vpop.f32.mrf.mxu0
    %v451 = vadd.f32 0.0, %v450
    %v452 = vpop.f32.mrf.mxu0
    %453 = vmatprep.mubr.bf16.mxu0 0
    %454 = vmatmul.mubr.bf16.gmra.mxu0 %v405
    %v455 = vpop.f32.mrf.mxu0
    %v456 = vadd.f32 0.0, %v455
    %v457 = vpop.f32.mrf.mxu0
    %v458 = vpop.f32.mrf.mxu0
    %v459 = vadd.f32 0.0, %v458
    %v460 = vpop.f32.mrf.mxu0
    %461 = vmatprep.mubr.bf16.mxu0 0
    %462 = vmatmul.mubr.bf16.gmra.mxu0 %v408
    %v463 = vpop.f32.mrf.mxu0
    %v464 = vadd.f32 0.0, %v463
    %v465 = vpop.f32.mrf.mxu0
    %v466 = vpop.f32.mrf.mxu0
    %v467 = vadd.f32 0.0, %v466
    %v468 = vpop.f32.mrf.mxu0
    %469 = vmatprep.mubr.bf16.mxu0 0
    %470 = vmatmul.mubr.bf16.gmra.mxu0 %v411
    %v471 = vpop.f32.mrf.mxu0
    %v472 = vadd.f32 0.0, %v471
    %v473 = vpop.f32.mrf.mxu0
    %v474 = vpop.f32.mrf.mxu0
    %v475 = vadd.f32 0.0, %v474
    %v476 = vpop.f32.mrf.mxu0
    %477 = vdwg.mxu0
    %v478 = vld [vmem:[%s3 + $0x2] sm:$0x1]
    %v479 = vpack.c.bf16 %v451, %v448
    %v480 = vpack.c.bf16 %v459, %v456
    %v481 = vpack.c.bf16 %v467, %v464
    %v482 = vpack.c.bf16 %v475, %v472
    %v483 = vlaneseq
    %v484 = vshrl.u32 %v483, 7
    %v485 = vsub.s32 0, %v484
    %v486 = vrot.slane %v478, %v485
    %v495 = vunpack.c.l.b16 %v33
    %v496 = vunpack.c.l.b16 %v34
    %v497 = vunpack.c.l.b16 %v35
    %v498 = vunpack.c.l.b16 %v36
    %v499 = vunpack.c.l.b16 %v37
    %v500 = vunpack.c.l.b16 %v38
    %v501 = vunpack.c.l.b16 %v39
    %v502 = vunpack.c.l.b16 %v40
    %v503 = vpack.c.b16 %v496, %v495
    %v504 = vpack.c.b16 %v498, %v497
    %v505 = vpack.c.b16 %v500, %v499
    %v506 = vpack.c.b16 %v502, %v501
    %vm507 = vcmask 523264
    %v509 = vsel %vm507, %v503, 0
    %v512 = vsel %vm507, %v504, 0
    %v515 = vsel %vm507, %v505, 0
    %v518 = vsel %vm507, %v506, 0
    %520 = vmatprep.subr.bf16.mxu0 0
    %521 = vmatpush1.bf16.msra.mxu0 0
    %522 = vmatprep.subr.bf16.mxu0 0
    %523 = vmatpush1.bf16.msra.mxu0 0
    %524 = vmatprep.subr.bf16.mxu0 0
    %525 = vmatpush1.bf16.msra.mxu0 0
    %526 = vmatprep.subr.bf16.mxu0 0
    %527 = vmatpush1.bf16.msra.mxu0 0
    %528 = vmatprep.subr.bf16.mxu0 0
    %529 = vmatpush1.bf16.msra.mxu0 %v482
    %530 = vmatprep.subr.bf16.mxu0 0
    %531 = vmatpush1.bf16.msra.mxu0 %v481
    %532 = vmatprep.subr.bf16.mxu0 0
    %533 = vmatpush1.bf16.msra.mxu0 %v480
    %534 = vmatprep.subr.bf16.mxu0 0
    %535 = vmatpush1.bf16.msra.mxu0 %v479
    %536 = vmatprep.subr.bf16.mxu0 0
    %537 = vmatpush2.bf16.msra.mxu0 0
    %538 = vmatprep.subr.bf16.mxu0 0
    %539 = vmatpush2.bf16.msra.mxu0 0
    %540 = vmatprep.subr.bf16.mxu0 0
    %541 = vmatpush2.bf16.msra.mxu0 0
    %542 = vmatprep.subr.bf16.mxu0 0
    %543 = vmatpush2.bf16.msra.mxu0 0
    %544 = vmatprep.subr.bf16.mxu0 0
    %545 = vmatpush2.bf16.msra.mxu0 0
    %546 = vmatprep.subr.bf16.mxu0 0
    %547 = vmatpush2.bf16.msra.mxu0 0
    %548 = vmatprep.subr.bf16.mxu0 0
    %549 = vmatpush2.bf16.msra.mxu0 0
    %550 = vmatprep.subr.bf16.mxu0 0
    %551 = vmatpush2.bf16.msra.mxu0 0
    %552 = vmatprep.mubr.bf16.mxu0 0
    %553 = vmatmul.mubr.bf16.gmra.mxu0 %v509
    %v554 = vpop.f32.mrf.mxu0
    %v555 = vadd.f32 %v486, %v554
    %v556 = vpop.f32.mrf.mxu0
    %v557 = vpop.f32.mrf.mxu0
    %v558 = vadd.f32 %v486, %v557
    %v559 = vpop.f32.mrf.mxu0
    %560 = vmatprep.mubr.bf16.mxu0 0
    %561 = vmatmul.mubr.bf16.gmra.mxu0 %v512
    %v562 = vpop.f32.mrf.mxu0
    %v563 = vadd.f32 %v486, %v562
    %v564 = vpop.f32.mrf.mxu0
    %v565 = vpop.f32.mrf.mxu0
    %v566 = vadd.f32 %v486, %v565
    %v567 = vpop.f32.mrf.mxu0
    %568 = vmatprep.mubr.bf16.mxu0 0
    %569 = vmatmul.mubr.bf16.gmra.mxu0 %v515
    %v570 = vpop.f32.mrf.mxu0
    %v571 = vadd.f32 %v486, %v570
    %v572 = vpop.f32.mrf.mxu0
    %v573 = vpop.f32.mrf.mxu0
    %v574 = vadd.f32 %v486, %v573
    %v575 = vpop.f32.mrf.mxu0
    %576 = vmatprep.mubr.bf16.mxu0 0
    %577 = vmatmul.mubr.bf16.gmra.mxu0 %v518
    %v578 = vpop.f32.mrf.mxu0
    %v579 = vadd.f32 %v486, %v578
    %v580 = vpop.f32.mrf.mxu0
    %v581 = vpop.f32.mrf.mxu0
    %v582 = vadd.f32 %v486, %v581
    %v583 = vpop.f32.mrf.mxu0
    %584 = vdwg.mxu0
    %v585 = vmax.f32 %v555, 0.0
    %v586 = vmax.f32 %v558, 0.0
    %v587 = vmax.f32 %v563, 0.0
    %v588 = vmax.f32 %v566, 0.0
    %v589 = vmax.f32 %v571, 0.0
    %v590 = vmax.f32 %v574, 0.0
    %v591 = vmax.f32 %v579, 0.0
    %v592 = vmax.f32 %v582, 0.0
    %v593 = vadd.f32 %v448, %v486
    %v594 = vadd.f32 %v451, %v486
    %v595 = vadd.f32 %v456, %v486
    %v596 = vadd.f32 %v459, %v486
    %v597 = vadd.f32 %v464, %v486
    %v598 = vadd.f32 %v467, %v486
    %v599 = vadd.f32 %v472, %v486
    %v600 = vadd.f32 %v475, %v486
    %v601 = vmax.f32 %v593, 0.0
    %v602 = vmax.f32 %v594, 0.0
    %v603 = vmax.f32 %v595, 0.0
    %v604 = vmax.f32 %v596, 0.0
    %v605 = vmax.f32 %v597, 0.0
    %v606 = vmax.f32 %v598, 0.0
    %v607 = vmax.f32 %v599, 0.0
    %v608 = vmax.f32 %v600, 0.0
    %617 = vrot.lane.b32.xlu0 %v601, 112
    %v618 = vpop.permute.xlu0 %617
    %619 = vrot.lane.b32.xlu0 %v602, 112
    %v620 = vpop.permute.xlu0 %619
    %621 = vrot.lane.b32.xlu0 %v603, 112
    %v622 = vpop.permute.xlu0 %621
    %623 = vrot.lane.b32.xlu0 %v604, 112
    %v624 = vpop.permute.xlu0 %623
    %625 = vrot.lane.b32.xlu0 %v605, 112
    %v626 = vpop.permute.xlu0 %625
    %627 = vrot.lane.b32.xlu0 %v606, 112
    %v628 = vpop.permute.xlu0 %627
    %629 = vrot.lane.b32.xlu0 %v607, 112
    %v630 = vpop.permute.xlu0 %629
    %631 = vrot.lane.b32.xlu0 %v608, 112
    %v632 = vpop.permute.xlu0 %631
    %v641 = vadd.f32 %v585, %v618
    %v642 = vadd.f32 %v586, %v620
    %v643 = vadd.f32 %v587, %v622
    %v644 = vadd.f32 %v588, %v624
    %v645 = vadd.f32 %v589, %v626
    %v646 = vadd.f32 %v590, %v628
    %v647 = vadd.f32 %v591, %v630
    %v648 = vadd.f32 %v592, %v632
    %657 = vrot.lane.b32.xlu0 %v641, 32
    %v658 = vpop.permute.xlu0 %657
    %659 = vrot.lane.b32.xlu0 %v642, 32
    %v660 = vpop.permute.xlu0 %659
    %661 = vrot.lane.b32.xlu0 %v643, 32
    %v662 = vpop.permute.xlu0 %661
    %663 = vrot.lane.b32.xlu0 %v644, 32
    %v664 = vpop.permute.xlu0 %663
    %665 = vrot.lane.b32.xlu0 %v645, 32
    %v666 = vpop.permute.xlu0 %665
    %667 = vrot.lane.b32.xlu0 %v646, 32
    %v668 = vpop.permute.xlu0 %667
    %669 = vrot.lane.b32.xlu0 %v647, 32
    %v670 = vpop.permute.xlu0 %669
    %671 = vrot.lane.b32.xlu0 %v648, 32
    %v672 = vpop.permute.xlu0 %671
    %vm681 = vcmask 392448
    %682 = vst.msk [vmem:[#allocation3] sm:$0xff] %vm681, %v658
    %683 = vst.msk [vmem:[#allocation3 + $0x8] sm:$0xff] %vm681, %v660
    %684 = vst.msk [vmem:[#allocation3 + $0x10] sm:$0xff] %vm681, %v662
    %685 = vst.msk [vmem:[#allocation3 + $0x18] sm:$0xff] %vm681, %v664
    %686 = vst.msk [vmem:[#allocation3 + $0x20] sm:$0xff] %vm681, %v666
    %687 = vst.msk [vmem:[#allocation3 + $0x28] sm:$0xff] %vm681, %v668
    %688 = vst.msk [vmem:[#allocation3 + $0x30] sm:$0xff] %vm681, %v670
    %689 = vst.msk [vmem:[#allocation3 + $0x38] sm:$0xff] %vm681, %v672
    %v690 = vld [vmem:[#allocation3] sm:$0xff]
    %v691 = vld [vmem:[#allocation3 + $0x8] sm:$0xff]
    %v692 = vld [vmem:[#allocation3 + $0x10] sm:$0xff]
    %v693 = vld [vmem:[#allocation3 + $0x18] sm:$0xff]
    %v694 = vld [vmem:[#allocation3 + $0x20] sm:$0xff]
    %v695 = vld [vmem:[#allocation3 + $0x28] sm:$0xff]
    %v696 = vld [vmem:[#allocation3 + $0x30] sm:$0xff]
    %v697 = vld [vmem:[#allocation3 + $0x38] sm:$0xff]
    %v698 = vpack.c.bf16 %v691, %v690
    %v699 = vpack.c.bf16 %v693, %v692
    %v700 = vpack.c.bf16 %v695, %v694
    %v701 = vpack.c.bf16 %v697, %v696
    %v702 = vld [vmem:[#allocation4 + $0x58] sm:$0xf]
    %v703 = vld [vmem:[#allocation4 + $0x5c] sm:$0xf]
    %708 = vrot.lane.b32.xlu0 %v698, 112
    %v709 = vpop.permute.xlu0 %708
    %710 = vrot.lane.b32.xlu0 %v699, 112
    %v711 = vpop.permute.xlu0 %710
    %712 = vrot.lane.b32.xlu0 %v700, 112
    %v713 = vpop.permute.xlu0 %712
    %714 = vrot.lane.b32.xlu0 %v701, 112
    %v715 = vpop.permute.xlu0 %714
    %v718 = vunpack.c.l.b16 %v702
    %v719 = vunpack.c.l.b16 %v703
    %v720 = vpack.c.b16 %v719, %v718
    %v723 = vsel %vm66, %v709, 0
    %v726 = vsel %vm66, %v711, 0
    %v729 = vsel %vm66, %v713, 0
    %v732 = vsel %vm66, %v715, 0
    %734 = vmatprep.subr.bf16.mxu0 0
    %735 = vmatpush1.bf16.msra.mxu0 0
    %736 = vmatprep.subr.bf16.mxu0 0
    %737 = vmatpush1.bf16.msra.mxu0 0
    %738 = vmatprep.subr.bf16.mxu0 0
    %739 = vmatpush1.bf16.msra.mxu0 0
    %740 = vmatprep.subr.bf16.mxu0 0
    %741 = vmatpush1.bf16.msra.mxu0 0
    %742 = vmatprep.subr.bf16.mxu0 0
    %743 = vmatpush1.bf16.msra.mxu0 0
    %744 = vmatprep.subr.bf16.mxu0 0
    %745 = vmatpush1.bf16.msra.mxu0 0
    %746 = vmatprep.subr.bf16.mxu0 0
    %747 = vmatpush1.bf16.msra.mxu0 0
    %748 = vmatprep.subr.bf16.mxu0 0
    %749 = vmatpush1.bf16.msra.mxu0 %v720
    %750 = vmatprep.subr.bf16.mxu0 0
    %751 = vmatpush2.bf16.msra.mxu0 0
    %752 = vmatprep.subr.bf16.mxu0 0
    %753 = vmatpush2.bf16.msra.mxu0 0
    %754 = vmatprep.subr.bf16.mxu0 0
    %755 = vmatpush2.bf16.msra.mxu0 0
    %756 = vmatprep.subr.bf16.mxu0 0
    %757 = vmatpush2.bf16.msra.mxu0 0
    %758 = vmatprep.subr.bf16.mxu0 0
    %759 = vmatpush2.bf16.msra.mxu0 0
    %760 = vmatprep.subr.bf16.mxu0 0
    %761 = vmatpush2.bf16.msra.mxu0 0
    %762 = vmatprep.subr.bf16.mxu0 0
    %763 = vmatpush2.bf16.msra.mxu0 0
    %764 = vmatprep.subr.bf16.mxu0 0
    %765 = vmatpush2.bf16.msra.mxu0 0
    %766 = vmatprep.mubr.bf16.mxu0 0
    %767 = vmatmul.mubr.bf16.gmra.mxu0 %v723
    %v768 = vpop.f32.mrf.mxu0
    %v769 = vadd.f32 0.0, %v768
    %v770 = vpop.f32.mrf.mxu0
    %v771 = vpop.f32.mrf.mxu0
    %v772 = vadd.f32 0.0, %v771
    %v773 = vpop.f32.mrf.mxu0
    %774 = vmatprep.mubr.bf16.mxu0 0
    %775 = vmatmul.mubr.bf16.gmra.mxu0 %v726
    %v776 = vpop.f32.mrf.mxu0
    %v777 = vadd.f32 0.0, %v776
    %v778 = vpop.f32.mrf.mxu0
    %v779 = vpop.f32.mrf.mxu0
    %v780 = vadd.f32 0.0, %v779
    %v781 = vpop.f32.mrf.mxu0
    %782 = vmatprep.mubr.bf16.mxu0 0
    %783 = vmatmul.mubr.bf16.gmra.mxu0 %v729
    %v784 = vpop.f32.mrf.mxu0
    %v785 = vadd.f32 0.0, %v784
    %v786 = vpop.f32.mrf.mxu0
    %v787 = vpop.f32.mrf.mxu0
    %v788 = vadd.f32 0.0, %v787
    %v789 = vpop.f32.mrf.mxu0
    %790 = vmatprep.mubr.bf16.mxu0 0
    %791 = vmatmul.mubr.bf16.gmra.mxu0 %v732
    %v792 = vpop.f32.mrf.mxu0
    %v793 = vadd.f32 0.0, %v792
    %v794 = vpop.f32.mrf.mxu0
    %v795 = vpop.f32.mrf.mxu0
    %v796 = vadd.f32 0.0, %v795
    %v797 = vpop.f32.mrf.mxu0
    %798 = vdwg.mxu0
    %v799 = vld [vmem:[%s3 + $0x3] sm:$0x1]
    %v800 = vpack.c.bf16 %v772, %v769
    %v801 = vpack.c.bf16 %v780, %v777
    %v802 = vpack.c.bf16 %v788, %v785
    %v803 = vpack.c.bf16 %v796, %v793
    %v804 = vlaneseq
    %v805 = vshrl.u32 %v804, 7
    %v806 = vsub.s32 0, %v805
    %v807 = vrot.slane %v799, %v806
    %808 = vmatprep.subr.bf16.mxu0 0
    %809 = vmatpush1.bf16.msra.mxu0 0
    %810 = vmatprep.subr.bf16.mxu0 0
    %811 = vmatpush1.bf16.msra.mxu0 0
    %812 = vmatprep.subr.bf16.mxu0 0
    %813 = vmatpush1.bf16.msra.mxu0 0
    %814 = vmatprep.subr.bf16.mxu0 0
    %815 = vmatpush1.bf16.msra.mxu0 0
    %816 = vmatprep.subr.bf16.mxu0 0
    %817 = vmatpush1.bf16.msra.mxu0 %v803
    %818 = vmatprep.subr.bf16.mxu0 0
    %819 = vmatpush1.bf16.msra.mxu0 %v802
    %820 = vmatprep.subr.bf16.mxu0 0
    %821 = vmatpush1.bf16.msra.mxu0 %v801
    %822 = vmatprep.subr.bf16.mxu0 0
    %823 = vmatpush1.bf16.msra.mxu0 %v800
    %824 = vmatprep.subr.bf16.mxu0 0
    %825 = vmatpush2.bf16.msra.mxu0 0
    %826 = vmatprep.subr.bf16.mxu0 0
    %827 = vmatpush2.bf16.msra.mxu0 0
    %828 = vmatprep.subr.bf16.mxu0 0
    %829 = vmatpush2.bf16.msra.mxu0 0
    %830 = vmatprep.subr.bf16.mxu0 0
    %831 = vmatpush2.bf16.msra.mxu0 0
    %832 = vmatprep.subr.bf16.mxu0 0
    %833 = vmatpush2.bf16.msra.mxu0 0
    %834 = vmatprep.subr.bf16.mxu0 0
    %835 = vmatpush2.bf16.msra.mxu0 0
    %836 = vmatprep.subr.bf16.mxu0 0
    %837 = vmatpush2.bf16.msra.mxu0 0
    %838 = vmatprep.subr.bf16.mxu0 0
    %839 = vmatpush2.bf16.msra.mxu0 0
    %840 = vmatprep.mubr.bf16.mxu0 0
    %841 = vmatmul.mubr.bf16.gmra.mxu0 %v509
    %v842 = vpop.f32.mrf.mxu0
    %v843 = vadd.f32 %v807, %v842
    %v844 = vpop.f32.mrf.mxu0
    %v845 = vpop.f32.mrf.mxu0
    %v846 = vadd.f32 %v807, %v845
    %v847 = vpop.f32.mrf.mxu0
    %848 = vmatprep.mubr.bf16.mxu0 0
    %849 = vmatmul.mubr.bf16.gmra.mxu0 %v512
    %v850 = vpop.f32.mrf.mxu0
    %v851 = vadd.f32 %v807, %v850
    %v852 = vpop.f32.mrf.mxu0
    %v853 = vpop.f32.mrf.mxu0
    %v854 = vadd.f32 %v807, %v853
    %v855 = vpop.f32.mrf.mxu0
    %856 = vmatprep.mubr.bf16.mxu0 0
    %857 = vmatmul.mubr.bf16.gmra.mxu0 %v515
    %v858 = vpop.f32.mrf.mxu0
    %v859 = vadd.f32 %v807, %v858
    %v860 = vpop.f32.mrf.mxu0
    %v861 = vpop.f32.mrf.mxu0
    %v862 = vadd.f32 %v807, %v861
    %v863 = vpop.f32.mrf.mxu0
    %864 = vmatprep.mubr.bf16.mxu0 0
    %865 = vmatmul.mubr.bf16.gmra.mxu0 %v518
    %v866 = vpop.f32.mrf.mxu0
    %v867 = vadd.f32 %v807, %v866
    %v868 = vpop.f32.mrf.mxu0
    %v869 = vpop.f32.mrf.mxu0
    %v870 = vadd.f32 %v807, %v869
    %v871 = vpop.f32.mrf.mxu0
    %872 = vdwg.mxu0
    %v873 = vmax.f32 %v843, 0.0
    %v874 = vmax.f32 %v846, 0.0
    %v875 = vmax.f32 %v851, 0.0
    %v876 = vmax.f32 %v854, 0.0
    %v877 = vmax.f32 %v859, 0.0
    %v878 = vmax.f32 %v862, 0.0
    %v879 = vmax.f32 %v867, 0.0
    %v880 = vmax.f32 %v870, 0.0
    %v881 = vadd.f32 %v690, %v873
    %v882 = vadd.f32 %v691, %v874
    %v883 = vadd.f32 %v692, %v875
    %v884 = vadd.f32 %v693, %v876
    %v885 = vadd.f32 %v694, %v877
    %v886 = vadd.f32 %v695, %v878
    %v887 = vadd.f32 %v696, %v879
    %v888 = vadd.f32 %v697, %v880
    %897 = vrot.lane.b32.xlu0 %v881, 48
    %v898 = vpop.permute.xlu0 %897
    %899 = vrot.lane.b32.xlu0 %v882, 48
    %v900 = vpop.permute.xlu0 %899
    %901 = vrot.lane.b32.xlu0 %v883, 48
    %v902 = vpop.permute.xlu0 %901
    %903 = vrot.lane.b32.xlu0 %v884, 48
    %v904 = vpop.permute.xlu0 %903
    %905 = vrot.lane.b32.xlu0 %v885, 48
    %v906 = vpop.permute.xlu0 %905
    %907 = vrot.lane.b32.xlu0 %v886, 48
    %v908 = vpop.permute.xlu0 %907
    %909 = vrot.lane.b32.xlu0 %v887, 48
    %v910 = vpop.permute.xlu0 %909
    %911 = vrot.lane.b32.xlu0 %v888, 48
    %v912 = vpop.permute.xlu0 %911
    %vm921 = vcmask 523648
    %922 = vst.msk [vmem:[#allocation3] sm:$0xff] %vm921, %v898
    %923 = vst.msk [vmem:[#allocation3 + $0x8] sm:$0xff] %vm921, %v900
    %924 = vst.msk [vmem:[#allocation3 + $0x10] sm:$0xff] %vm921, %v902
    %925 = vst.msk [vmem:[#allocation3 + $0x18] sm:$0xff] %vm921, %v904
    %926 = vst.msk [vmem:[#allocation3 + $0x20] sm:$0xff] %vm921, %v906
    %927 = vst.msk [vmem:[#allocation3 + $0x28] sm:$0xff] %vm921, %v908
    %928 = vst.msk [vmem:[#allocation3 + $0x30] sm:$0xff] %vm921, %v910
    %929 = vst.msk [vmem:[#allocation3 + $0x38] sm:$0xff] %vm921, %v912
    %v930 = vld [vmem:[#allocation3] sm:$0xff]
    %v931 = vld [vmem:[#allocation3 + $0x8] sm:$0xff]
    %v932 = vld [vmem:[#allocation3 + $0x10] sm:$0xff]
    %v933 = vld [vmem:[#allocation3 + $0x18] sm:$0xff]
    %v934 = vld [vmem:[#allocation3 + $0x20] sm:$0xff]
    %v935 = vld [vmem:[#allocation3 + $0x28] sm:$0xff]
    %v936 = vld [vmem:[#allocation3 + $0x30] sm:$0xff]
    %v937 = vld [vmem:[#allocation3 + $0x38] sm:$0xff]
    %v938 = vpack.c.bf16 %v931, %v930
    %v939 = vpack.c.bf16 %v933, %v932
    %v940 = vpack.c.bf16 %v935, %v934
    %v941 = vpack.c.bf16 %v937, %v936
    %v942 = vld [vmem:[#allocation4 + $0x60] sm:$0xf]
    %v943 = vld [vmem:[#allocation4 + $0x64] sm:$0xf]
    %948 = vrot.lane.b32.xlu0 %v938, 96
    %v949 = vpop.permute.xlu0 %948
    %950 = vrot.lane.b32.xlu0 %v939, 96
    %v951 = vpop.permute.xlu0 %950
    %952 = vrot.lane.b32.xlu0 %v940, 96
    %v953 = vpop.permute.xlu0 %952
    %954 = vrot.lane.b32.xlu0 %v941, 96
    %v955 = vpop.permute.xlu0 %954
    %v958 = vunpack.c.l.b16 %v942
    %v959 = vunpack.c.l.b16 %v943
    %v960 = vpack.c.b16 %v959, %v958
    %v963 = vsel %vm66, %v949, 0
    %v966 = vsel %vm66, %v951, 0
    %v969 = vsel %vm66, %v953, 0
    %v972 = vsel %vm66, %v955, 0
    %974 = vmatprep.subr.bf16.mxu0 0
    %975 = vmatpush1.bf16.msra.mxu0 0
    %976 = vmatprep.subr.bf16.mxu0 0
    %977 = vmatpush1.bf16.msra.mxu0 0
    %978 = vmatprep.subr.bf16.mxu0 0
    %979 = vmatpush1.bf16.msra.mxu0 0
    %980 = vmatprep.subr.bf16.mxu0 0
    %981 = vmatpush1.bf16.msra.mxu0 0
    %982 = vmatprep.subr.bf16.mxu0 0
    %983 = vmatpush1.bf16.msra.mxu0 0
    %984 = vmatprep.subr.bf16.mxu0 0
    %985 = vmatpush1.bf16.msra.mxu0 0
    %986 = vmatprep.subr.bf16.mxu0 0
    %987 = vmatpush1.bf16.msra.mxu0 0
    %988 = vmatprep.subr.bf16.mxu0 0
    %989 = vmatpush1.bf16.msra.mxu0 %v960
    %990 = vmatprep.subr.bf16.mxu0 0
    %991 = vmatpush2.bf16.msra.mxu0 0
    %992 = vmatprep.subr.bf16.mxu0 0
    %993 = vmatpush2.bf16.msra.mxu0 0
    %994 = vmatprep.subr.bf16.mxu0 0
    %995 = vmatpush2.bf16.msra.mxu0 0
    %996 = vmatprep.subr.bf16.mxu0 0
    %997 = vmatpush2.bf16.msra.mxu0 0
    %998 = vmatprep.subr.bf16.mxu0 0
    %999 = vmatpush2.bf16.msra.mxu0 0
    %1000 = vmatprep.subr.bf16.mxu0 0
    %1001 = vmatpush2.bf16.msra.mxu0 0
    %1002 = vmatprep.subr.bf16.mxu0 0
    %1003 = vmatpush2.bf16.msra.mxu0 0
    %1004 = vmatprep.subr.bf16.mxu0 0
    %1005 = vmatpush2.bf16.msra.mxu0 0
    %1006 = vmatprep.mubr.bf16.mxu0 0
    %1007 = vmatmul.mubr.bf16.gmra.mxu0 %v963
    %v1008 = vpop.f32.mrf.mxu0
    %v1009 = vadd.f32 0.0, %v1008
    %v1010 = vpop.f32.mrf.mxu0
    %v1011 = vpop.f32.mrf.mxu0
    %v1012 = vadd.f32 0.0, %v1011
    %v1013 = vpop.f32.mrf.mxu0
    %1014 = vmatprep.mubr.bf16.mxu0 0
    %1015 = vmatmul.mubr.bf16.gmra.mxu0 %v966
    %v1016 = vpop.f32.mrf.mxu0
    %v1017 = vadd.f32 0.0, %v1016
    %v1018 = vpop.f32.mrf.mxu0
    %v1019 = vpop.f32.mrf.mxu0
    %v1020 = vadd.f32 0.0, %v1019
    %v1021 = vpop.f32.mrf.mxu0
    %1022 = vmatprep.mubr.bf16.mxu0 0
    %1023 = vmatmul.mubr.bf16.gmra.mxu0 %v969
    %v1024 = vpop.f32.mrf.mxu0
    %v1025 = vadd.f32 0.0, %v1024
    %v1026 = vpop.f32.mrf.mxu0
    %v1027 = vpop.f32.mrf.mxu0
    %v1028 = vadd.f32 0.0, %v1027
    %v1029 = vpop.f32.mrf.mxu0
    %1030 = vmatprep.mubr.bf16.mxu0 0
    %1031 = vmatmul.mubr.bf16.gmra.mxu0 %v972
    %v1032 = vpop.f32.mrf.mxu0
    %v1033 = vadd.f32 0.0, %v1032
    %v1034 = vpop.f32.mrf.mxu0
    %v1035 = vpop.f32.mrf.mxu0
    %v1036 = vadd.f32 0.0, %v1035
    %v1037 = vpop.f32.mrf.mxu0
    %1038 = vdwg.mxu0
    %v1039 = vld [vmem:[%s3 + $0x4] sm:$0x1]
    %v1040 = vlaneseq
    %v1041 = vshrl.u32 %v1040, 7
    %v1042 = vsub.s32 0, %v1041
    %v1043 = vrot.slane %v1039, %v1042
    %v1044 = vadd.f32 %v1009, %v1043
    %v1045 = vadd.f32 %v1012, %v1043
    %v1046 = vadd.f32 %v1017, %v1043
    %v1047 = vadd.f32 %v1020, %v1043
    %v1048 = vadd.f32 %v1025, %v1043
    %v1049 = vadd.f32 %v1028, %v1043
    %v1050 = vadd.f32 %v1033, %v1043
    %v1051 = vadd.f32 %v1036, %v1043
    %v1052 = vmax.f32 %v1044, 0.0
    %v1053 = vmax.f32 %v1045, 0.0
    %v1054 = vmax.f32 %v1046, 0.0
    %v1055 = vmax.f32 %v1047, 0.0
    %v1056 = vmax.f32 %v1048, 0.0
    %v1057 = vmax.f32 %v1049, 0.0
    %v1058 = vmax.f32 %v1050, 0.0
    %v1059 = vmax.f32 %v1051, 0.0
    %1068 = vrot.lane.b32.xlu0 %v930, 80
    %v1069 = vpop.permute.xlu0 %1068
    %1070 = vrot.lane.b32.xlu0 %v931, 80
    %v1071 = vpop.permute.xlu0 %1070
    %1072 = vrot.lane.b32.xlu0 %v932, 80
    %v1073 = vpop.permute.xlu0 %1072
    %1074 = vrot.lane.b32.xlu0 %v933, 80
    %v1075 = vpop.permute.xlu0 %1074
    %1076 = vrot.lane.b32.xlu0 %v934, 80
    %v1077 = vpop.permute.xlu0 %1076
    %1078 = vrot.lane.b32.xlu0 %v935, 80
    %v1079 = vpop.permute.xlu0 %1078
    %1080 = vrot.lane.b32.xlu0 %v936, 80
    %v1081 = vpop.permute.xlu0 %1080
    %1082 = vrot.lane.b32.xlu0 %v937, 80
    %v1083 = vpop.permute.xlu0 %1082
    %v1092 = vadd.f32 %v1052, %v1069
    %v1093 = vadd.f32 %v1053, %v1071
    %v1094 = vadd.f32 %v1054, %v1073
    %v1095 = vadd.f32 %v1055, %v1075
    %v1096 = vadd.f32 %v1056, %v1077
    %v1097 = vadd.f32 %v1057, %v1079
    %v1098 = vadd.f32 %v1058, %v1081
    %v1099 = vadd.f32 %v1059, %v1083
    %1108 = vrot.lane.b32.xlu0 %v1092, 64
    %v1109 = vpop.permute.xlu0 %1108
    %1110 = vrot.lane.b32.xlu0 %v1093, 64
    %v1111 = vpop.permute.xlu0 %1110
    %1112 = vrot.lane.b32.xlu0 %v1094, 64
    %v1113 = vpop.permute.xlu0 %1112
    %1114 = vrot.lane.b32.xlu0 %v1095, 64
    %v1115 = vpop.permute.xlu0 %1114
    %1116 = vrot.lane.b32.xlu0 %v1096, 64
    %v1117 = vpop.permute.xlu0 %1116
    %1118 = vrot.lane.b32.xlu0 %v1097, 64
    %v1119 = vpop.permute.xlu0 %1118
    %1120 = vrot.lane.b32.xlu0 %v1098, 64
    %v1121 = vpop.permute.xlu0 %1120
    %1122 = vrot.lane.b32.xlu0 %v1099, 64
    %v1123 = vpop.permute.xlu0 %1122
    %vm1132 = vcmask 654848
    %1133 = vst.msk [vmem:[#allocation3] sm:$0xff] %vm1132, %v1109
    %1134 = vst.msk [vmem:[#allocation3 + $0x8] sm:$0xff] %vm1132, %v1111
    %1135 = vst.msk [vmem:[#allocation3 + $0x10] sm:$0xff] %vm1132, %v1113
    %1136 = vst.msk [vmem:[#allocation3 + $0x18] sm:$0xff] %vm1132, %v1115
    %1137 = vst.msk [vmem:[#allocation3 + $0x20] sm:$0xff] %vm1132, %v1117
    %1138 = vst.msk [vmem:[#allocation3 + $0x28] sm:$0xff] %vm1132, %v1119
    %1139 = vst.msk [vmem:[#allocation3 + $0x30] sm:$0xff] %vm1132, %v1121
    %1140 = vst.msk [vmem:[#allocation3 + $0x38] sm:$0xff] %vm1132, %v1123
    %v1141 = vld [vmem:[#allocation3] sm:$0xff]
    %v1142 = vld [vmem:[#allocation3 + $0x8] sm:$0xff]
    %v1143 = vld [vmem:[#allocation3 + $0x10] sm:$0xff]
    %v1144 = vld [vmem:[#allocation3 + $0x18] sm:$0xff]
    %v1145 = vld [vmem:[#allocation3 + $0x20] sm:$0xff]
    %v1146 = vld [vmem:[#allocation3 + $0x28] sm:$0xff]
    %v1147 = vld [vmem:[#allocation3 + $0x30] sm:$0xff]
    %v1148 = vld [vmem:[#allocation3 + $0x38] sm:$0xff]
    %v1149 = vpack.c.bf16 %v1142, %v1141
    %v1150 = vpack.c.bf16 %v1144, %v1143
    %v1151 = vpack.c.bf16 %v1146, %v1145
    %v1152 = vpack.c.bf16 %v1148, %v1147
    %v1153 = vld [vmem:[#allocation4 + $0x68] sm:$0xf]
    %v1154 = vld [vmem:[#allocation4 + $0x6c] sm:$0xf]
    %v1155 = vld [vmem:[#allocation4 + $0x70] sm:$0xf]
    %v1156 = vld [vmem:[#allocation4 + $0x74] sm:$0xf]
    %v1157 = vld [vmem:[#allocation4 + $0x78] sm:$0xf]
    %v1158 = vld [vmem:[#allocation4 + $0x7c] sm:$0xf]
    %1163 = vrot.lane.b32.xlu0 %v1149, 96
    %v1164 = vpop.permute.xlu0 %1163
    %1165 = vrot.lane.b32.xlu0 %v1150, 96
    %v1166 = vpop.permute.xlu0 %1165
    %1167 = vrot.lane.b32.xlu0 %v1151, 96
    %v1168 = vpop.permute.xlu0 %1167
    %1169 = vrot.lane.b32.xlu0 %v1152, 96
    %v1170 = vpop.permute.xlu0 %1169
    %v1177 = vunpack.c.l.b16 %v1153
    %v1178 = vunpack.c.l.b16 %v1154
    %v1179 = vunpack.c.l.b16 %v1155
    %v1180 = vunpack.c.l.b16 %v1156
    %v1181 = vunpack.c.l.b16 %v1157
    %v1182 = vunpack.c.l.b16 %v1158
    %v1183 = vpack.c.b16 %v1178, %v1177
    %v1184 = vpack.c.b16 %v1180, %v1179
    %v1185 = vpack.c.b16 %v1182, %v1181
    %v1190 = vsel %vm152, %v1164, 0
    %v1193 = vsel %vm152, %v1166, 0
    %v1196 = vsel %vm152, %v1168, 0
    %v1199 = vsel %vm152, %v1170, 0
    %1201 = vmatprep.subr.bf16.mxu0 0
    %1202 = vmatpush1.bf16.msra.mxu0 0
    %1203 = vmatprep.subr.bf16.mxu0 0
    %1204 = vmatpush1.bf16.msra.mxu0 0
    %1205 = vmatprep.subr.bf16.mxu0 0
    %1206 = vmatpush1.bf16.msra.mxu0 0
    %1207 = vmatprep.subr.bf16.mxu0 0
    %1208 = vmatpush1.bf16.msra.mxu0 0
    %1209 = vmatprep.subr.bf16.mxu0 0
    %1210 = vmatpush1.bf16.msra.mxu0 0
    %1211 = vmatprep.subr.bf16.mxu0 0
    %1212 = vmatpush1.bf16.msra.mxu0 %v1185
    %1213 = vmatprep.subr.bf16.mxu0 0
    %1214 = vmatpush1.bf16.msra.mxu0 %v1184
    %1215 = vmatprep.subr.bf16.mxu0 0
    %1216 = vmatpush1.bf16.msra.mxu0 %v1183
    %1217 = vmatprep.subr.bf16.mxu0 0
    %1218 = vmatpush2.bf16.msra.mxu0 0
    %1219 = vmatprep.subr.bf16.mxu0 0
    %1220 = vmatpush2.bf16.msra.mxu0 0
    %1221 = vmatprep.subr.bf16.mxu0 0
    %1222 = vmatpush2.bf16.msra.mxu0 0
    %1223 = vmatprep.subr.bf16.mxu0 0
    %1224 = vmatpush2.bf16.msra.mxu0 0
    %1225 = vmatprep.subr.bf16.mxu0 0
    %1226 = vmatpush2.bf16.msra.mxu0 0
    %1227 = vmatprep.subr.bf16.mxu0 0
    %1228 = vmatpush2.bf16.msra.mxu0 0
    %1229 = vmatprep.subr.bf16.mxu0 0
    %1230 = vmatpush2.bf16.msra.mxu0 0
    %1231 = vmatprep.subr.bf16.mxu0 0
    %1232 = vmatpush2.bf16.msra.mxu0 0
    %1233 = vmatprep.mubr.bf16.mxu0 0
    %1234 = vmatmul.mubr.bf16.gmra.mxu0 %v1190
    %v1235 = vpop.f32.mrf.mxu0
    %v1236 = vadd.f32 0.0, %v1235
    %v1237 = vpop.f32.mrf.mxu0
    %v1238 = vpop.f32.mrf.mxu0
    %v1239 = vadd.f32 0.0, %v1238
    %v1240 = vpop.f32.mrf.mxu0
    %1241 = vmatprep.mubr.bf16.mxu0 0
    %1242 = vmatmul.mubr.bf16.gmra.mxu0 %v1193
    %v1243 = vpop.f32.mrf.mxu0
    %v1244 = vadd.f32 0.0, %v1243
    %v1245 = vpop.f32.mrf.mxu0
    %v1246 = vpop.f32.mrf.mxu0
    %v1247 = vadd.f32 0.0, %v1246
    %v1248 = vpop.f32.mrf.mxu0
    %1249 = vmatprep.mubr.bf16.mxu0 0
    %1250 = vmatmul.mubr.bf16.gmra.mxu0 %v1196
    %v1251 = vpop.f32.mrf.mxu0
    %v1252 = vadd.f32 0.0, %v1251
    %v1253 = vpop.f32.mrf.mxu0
    %v1254 = vpop.f32.mrf.mxu0
    %v1255 = vadd.f32 0.0, %v1254
    %v1256 = vpop.f32.mrf.mxu0
    %1257 = vmatprep.mubr.bf16.mxu0 0
    %1258 = vmatmul.mubr.bf16.gmra.mxu0 %v1199
    %v1259 = vpop.f32.mrf.mxu0
    %v1260 = vadd.f32 0.0, %v1259
    %v1261 = vpop.f32.mrf.mxu0
    %v1262 = vpop.f32.mrf.mxu0
    %v1263 = vadd.f32 0.0, %v1262
    %v1264 = vpop.f32.mrf.mxu0
    %1265 = vdwg.mxu0
    %v1266 = vld [vmem:[%s3 + $0x5] sm:$0x1]
    %v1267 = vpack.c.bf16 %v1239, %v1236
    %v1268 = vpack.c.bf16 %v1247, %v1244
    %v1269 = vpack.c.bf16 %v1255, %v1252
    %v1270 = vpack.c.bf16 %v1263, %v1260
    %v1271 = vlaneseq
    %v1272 = vshrl.u32 %v1271, 7
    %v1273 = vsub.s32 0, %v1272
    %v1274 = vrot.slane %v1266, %v1273
    %1275 = vmatprep.subr.bf16.mxu0 0
    %1276 = vmatpush1.bf16.msra.mxu0 0
    %1277 = vmatprep.subr.bf16.mxu0 0
    %1278 = vmatpush1.bf16.msra.mxu0 0
    %1279 = vmatprep.subr.bf16.mxu0 0
    %1280 = vmatpush1.bf16.msra.mxu0 0
    %1281 = vmatprep.subr.bf16.mxu0 0
    %1282 = vmatpush1.bf16.msra.mxu0 0
    %1283 = vmatprep.subr.bf16.mxu0 0
    %1284 = vmatpush1.bf16.msra.mxu0 %v1270
    %1285 = vmatprep.subr.bf16.mxu0 0
    %1286 = vmatpush1.bf16.msra.mxu0 %v1269
    %1287 = vmatprep.subr.bf16.mxu0 0
    %1288 = vmatpush1.bf16.msra.mxu0 %v1268
    %1289 = vmatprep.subr.bf16.mxu0 0
    %1290 = vmatpush1.bf16.msra.mxu0 %v1267
    %1291 = vmatprep.subr.bf16.mxu0 0
    %1292 = vmatpush2.bf16.msra.mxu0 0
    %1293 = vmatprep.subr.bf16.mxu0 0
    %1294 = vmatpush2.bf16.msra.mxu0 0
    %1295 = vmatprep.subr.bf16.mxu0 0
    %1296 = vmatpush2.bf16.msra.mxu0 0
    %1297 = vmatprep.subr.bf16.mxu0 0
    %1298 = vmatpush2.bf16.msra.mxu0 0
    %1299 = vmatprep.subr.bf16.mxu0 0
    %1300 = vmatpush2.bf16.msra.mxu0 0
    %1301 = vmatprep.subr.bf16.mxu0 0
    %1302 = vmatpush2.bf16.msra.mxu0 0
    %1303 = vmatprep.subr.bf16.mxu0 0
    %1304 = vmatpush2.bf16.msra.mxu0 0
    %1305 = vmatprep.subr.bf16.mxu0 0
    %1306 = vmatpush2.bf16.msra.mxu0 0
    %1307 = vmatprep.mubr.bf16.mxu0 0
    %1308 = vmatmul.mubr.bf16.gmra.mxu0 %v509
    %v1309 = vpop.f32.mrf.mxu0
    %v1310 = vadd.f32 %v1274, %v1309
    %v1311 = vpop.f32.mrf.mxu0
    %v1312 = vpop.f32.mrf.mxu0
    %v1313 = vadd.f32 %v1274, %v1312
    %v1314 = vpop.f32.mrf.mxu0
    %1315 = vmatprep.mubr.bf16.mxu0 0
    %1316 = vmatmul.mubr.bf16.gmra.mxu0 %v512
    %v1317 = vpop.f32.mrf.mxu0
    %v1318 = vadd.f32 %v1274, %v1317
    %v1319 = vpop.f32.mrf.mxu0
    %v1320 = vpop.f32.mrf.mxu0
    %v1321 = vadd.f32 %v1274, %v1320
    %v1322 = vpop.f32.mrf.mxu0
    %1323 = vmatprep.mubr.bf16.mxu0 0
    %1324 = vmatmul.mubr.bf16.gmra.mxu0 %v515
    %v1325 = vpop.f32.mrf.mxu0
    %v1326 = vadd.f32 %v1274, %v1325
    %v1327 = vpop.f32.mrf.mxu0
    %v1328 = vpop.f32.mrf.mxu0
    %v1329 = vadd.f32 %v1274, %v1328
    %v1330 = vpop.f32.mrf.mxu0
    %1331 = vmatprep.mubr.bf16.mxu0 0
    %1332 = vmatmul.mubr.bf16.gmra.mxu0 %v518
    %v1333 = vpop.f32.mrf.mxu0
    %v1334 = vadd.f32 %v1274, %v1333
    %v1335 = vpop.f32.mrf.mxu0
    %v1336 = vpop.f32.mrf.mxu0
    %v1337 = vadd.f32 %v1274, %v1336
    %v1338 = vpop.f32.mrf.mxu0
    %1339 = vdwg.mxu0
    %v1340 = vmax.f32 %v1310, 0.0
    %v1341 = vmax.f32 %v1313, 0.0
    %v1342 = vmax.f32 %v1318, 0.0
    %v1343 = vmax.f32 %v1321, 0.0
    %v1344 = vmax.f32 %v1326, 0.0
    %v1345 = vmax.f32 %v1329, 0.0
    %v1346 = vmax.f32 %v1334, 0.0
    %v1347 = vmax.f32 %v1337, 0.0
    %v1348 = vadd.f32 %v1236, %v1274
    %v1349 = vadd.f32 %v1239, %v1274
    %v1350 = vadd.f32 %v1244, %v1274
    %v1351 = vadd.f32 %v1247, %v1274
    %v1352 = vadd.f32 %v1252, %v1274
    %v1353 = vadd.f32 %v1255, %v1274
    %v1354 = vadd.f32 %v1260, %v1274
    %v1355 = vadd.f32 %v1263, %v1274
    %v1356 = vmax.f32 %v1348, 0.0
    %v1357 = vmax.f32 %v1349, 0.0
    %v1358 = vmax.f32 %v1350, 0.0
    %v1359 = vmax.f32 %v1351, 0.0
    %v1360 = vmax.f32 %v1352, 0.0
    %v1361 = vmax.f32 %v1353, 0.0
    %v1362 = vmax.f32 %v1354, 0.0
    %v1363 = vmax.f32 %v1355, 0.0
    %1372 = vrot.lane.b32.xlu0 %v1356, 112
    %v1373 = vpop.permute.xlu0 %1372
    %1374 = vrot.lane.b32.xlu0 %v1357, 112
    %v1375 = vpop.permute.xlu0 %1374
    %1376 = vrot.lane.b32.xlu0 %v1358, 112
    %v1377 = vpop.permute.xlu0 %1376
    %1378 = vrot.lane.b32.xlu0 %v1359, 112
    %v1379 = vpop.permute.xlu0 %1378
    %1380 = vrot.lane.b32.xlu0 %v1360, 112
    %v1381 = vpop.permute.xlu0 %1380
    %1382 = vrot.lane.b32.xlu0 %v1361, 112
    %v1383 = vpop.permute.xlu0 %1382
    %1384 = vrot.lane.b32.xlu0 %v1362, 112
    %v1385 = vpop.permute.xlu0 %1384
    %1386 = vrot.lane.b32.xlu0 %v1363, 112
    %v1387 = vpop.permute.xlu0 %1386
    %v1396 = vadd.f32 %v1340, %v1373
    %v1397 = vadd.f32 %v1341, %v1375
    %v1398 = vadd.f32 %v1342, %v1377
    %v1399 = vadd.f32 %v1343, %v1379
    %v1400 = vadd.f32 %v1344, %v1381
    %v1401 = vadd.f32 %v1345, %v1383
    %v1402 = vadd.f32 %v1346, %v1385
    %v1403 = vadd.f32 %v1347, %v1387
    %1412 = vrot.lane.b32.xlu0 %v1396, 80
    %v1413 = vpop.permute.xlu0 %1412
    %1414 = vrot.lane.b32.xlu0 %v1397, 80
    %v1415 = vpop.permute.xlu0 %1414
    %1416 = vrot.lane.b32.xlu0 %v1398, 80
    %v1417 = vpop.permute.xlu0 %1416
    %1418 = vrot.lane.b32.xlu0 %v1399, 80
    %v1419 = vpop.permute.xlu0 %1418
    %1420 = vrot.lane.b32.xlu0 %v1400, 80
    %v1421 = vpop.permute.xlu0 %1420
    %1422 = vrot.lane.b32.xlu0 %v1401, 80
    %v1423 = vpop.permute.xlu0 %1422
    %1424 = vrot.lane.b32.xlu0 %v1402, 80
    %v1425 = vpop.permute.xlu0 %1424
    %1426 = vrot.lane.b32.xlu0 %v1403, 80
    %v1427 = vpop.permute.xlu0 %1426
    %vm1436 = vcmask 786048
    %1437 = vst.msk [vmem:[#allocation3] sm:$0xff] %vm1436, %v1413
    %1438 = vst.msk [vmem:[#allocation3 + $0x8] sm:$0xff] %vm1436, %v1415
    %1439 = vst.msk [vmem:[#allocation3 + $0x10] sm:$0xff] %vm1436, %v1417
    %1440 = vst.msk [vmem:[#allocation3 + $0x18] sm:$0xff] %vm1436, %v1419
    %1441 = vst.msk [vmem:[#allocation3 + $0x20] sm:$0xff] %vm1436, %v1421
    %1442 = vst.msk [vmem:[#allocation3 + $0x28] sm:$0xff] %vm1436, %v1423
    %1443 = vst.msk [vmem:[#allocation3 + $0x30] sm:$0xff] %vm1436, %v1425
    %1444 = vst.msk [vmem:[#allocation3 + $0x38] sm:$0xff] %vm1436, %v1427
    %v1445 = vld [vmem:[#allocation2] sm:$0xff]
    %v1446 = vld [vmem:[#allocation2 + $0x8] sm:$0xff]
    %v1447 = vld [vmem:[#allocation2 + $0x10] sm:$0xff]
    %v1448 = vld [vmem:[#allocation2 + $0x18] sm:$0xff]
    %v1449 = vld [vmem:[#allocation2 + $0x20] sm:$0xff]
    %v1450 = vld [vmem:[#allocation2 + $0x28] sm:$0xff]
    %v1451 = vld [vmem:[#allocation2 + $0x30] sm:$0xff]
    %v1452 = vld [vmem:[#allocation2 + $0x38] sm:$0xff]
    %1461 = vrot.lane.b32.xlu0 %v1445, 64
    %v1462 = vpop.permute.xlu0 %1461
    %1463 = vrot.lane.b32.xlu0 %v1446, 64
    %v1464 = vpop.permute.xlu0 %1463
    %1465 = vrot.lane.b32.xlu0 %v1447, 64
    %v1466 = vpop.permute.xlu0 %1465
    %1467 = vrot.lane.b32.xlu0 %v1448, 64
    %v1468 = vpop.permute.xlu0 %1467
    %1469 = vrot.lane.b32.xlu0 %v1449, 64
    %v1470 = vpop.permute.xlu0 %1469
    %1471 = vrot.lane.b32.xlu0 %v1450, 64
    %v1472 = vpop.permute.xlu0 %1471
    %1473 = vrot.lane.b32.xlu0 %v1451, 64
    %v1474 = vpop.permute.xlu0 %1473
    %1475 = vrot.lane.b32.xlu0 %v1452, 64
    %v1476 = vpop.permute.xlu0 %1475
    %1485 = vst.msk [vmem:[#allocation2] sm:$0xff] %vm507, %v1462
    %1486 = vst.msk [vmem:[#allocation2 + $0x8] sm:$0xff] %vm507, %v1464
    %1487 = vst.msk [vmem:[#allocation2 + $0x10] sm:$0xff] %vm507, %v1466
    %1488 = vst.msk [vmem:[#allocation2 + $0x18] sm:$0xff] %vm507, %v1468
    %1489 = vst.msk [vmem:[#allocation2 + $0x20] sm:$0xff] %vm507, %v1470
    %1490 = vst.msk [vmem:[#allocation2 + $0x28] sm:$0xff] %vm507, %v1472
    %1491 = vst.msk [vmem:[#allocation2 + $0x30] sm:$0xff] %vm507, %v1474
    %1492 = vst.msk [vmem:[#allocation2 + $0x38] sm:$0xff] %vm507, %v1476
    %v1493 = vld [vmem:[#allocation3] sm:$0xff]
    %v1494 = vld [vmem:[#allocation3 + $0x8] sm:$0xff]
    %v1495 = vld [vmem:[#allocation3 + $0x10] sm:$0xff]
    %v1496 = vld [vmem:[#allocation3 + $0x18] sm:$0xff]
    %v1497 = vld [vmem:[#allocation3 + $0x20] sm:$0xff]
    %v1498 = vld [vmem:[#allocation3 + $0x28] sm:$0xff]
    %v1499 = vld [vmem:[#allocation3 + $0x30] sm:$0xff]
    %v1500 = vld [vmem:[#allocation3 + $0x38] sm:$0xff]
    %1509 = vrot.lane.b32.xlu0 %v1493, 32
    %v1510 = vpop.permute.xlu0 %1509
    %1511 = vrot.lane.b32.xlu0 %v1494, 32
    %v1512 = vpop.permute.xlu0 %1511
    %1513 = vrot.lane.b32.xlu0 %v1495, 32
    %v1514 = vpop.permute.xlu0 %1513
    %1515 = vrot.lane.b32.xlu0 %v1496, 32
    %v1516 = vpop.permute.xlu0 %1515
    %1517 = vrot.lane.b32.xlu0 %v1497, 32
    %v1518 = vpop.permute.xlu0 %1517
    %1519 = vrot.lane.b32.xlu0 %v1498, 32
    %v1520 = vpop.permute.xlu0 %1519
    %1521 = vrot.lane.b32.xlu0 %v1499, 32
    %v1522 = vpop.permute.xlu0 %1521
    %1523 = vrot.lane.b32.xlu0 %v1500, 32
    %v1524 = vpop.permute.xlu0 %1523
    %vm1533 = vcmask 1048064
    %1534 = vst.msk [vmem:[#allocation2] sm:$0xff] %vm1533, %v1510
    %1535 = vst.msk [vmem:[#allocation2 + $0x8] sm:$0xff] %vm1533, %v1512
    %1536 = vst.msk [vmem:[#allocation2 + $0x10] sm:$0xff] %vm1533, %v1514
    %1537 = vst.msk [vmem:[#allocation2 + $0x18] sm:$0xff] %vm1533, %v1516
    %1538 = vst.msk [vmem:[#allocation2 + $0x20] sm:$0xff] %vm1533, %v1518
    %1539 = vst.msk [vmem:[#allocation2 + $0x28] sm:$0xff] %vm1533, %v1520
    %1540 = vst.msk [vmem:[#allocation2 + $0x30] sm:$0xff] %vm1533, %v1522
    %1541 = vst.msk [vmem:[#allocation2 + $0x38] sm:$0xff] %vm1533, %v1524
    %1542 = vst [vmem:[#allocation3] sm:$0xff] 0.0
    %1543 = vst [vmem:[#allocation3 + $0x8] sm:$0xff] 0.0
    %1544 = vst [vmem:[#allocation3 + $0x10] sm:$0xff] 0.0
    %1545 = vst [vmem:[#allocation3 + $0x18] sm:$0xff] 0.0
    %1546 = vst [vmem:[#allocation3 + $0x20] sm:$0xff] 0.0
    %1547 = vst [vmem:[#allocation3 + $0x28] sm:$0xff] 0.0
    %1548 = vst [vmem:[#allocation3 + $0x30] sm:$0xff] 0.0
    %1549 = vst [vmem:[#allocation3 + $0x38] sm:$0xff] 0.0
    %v1550 = vld [vmem:[#allocation2] sm:$0xff]
    %v1551 = vld [vmem:[#allocation2 + $0x8] sm:$0xff]
    %v1552 = vld [vmem:[#allocation2 + $0x10] sm:$0xff]
    %v1553 = vld [vmem:[#allocation2 + $0x18] sm:$0xff]
    %v1554 = vld [vmem:[#allocation2 + $0x20] sm:$0xff]
    %v1555 = vld [vmem:[#allocation2 + $0x28] sm:$0xff]
    %v1556 = vld [vmem:[#allocation2 + $0x30] sm:$0xff]
    %v1557 = vld [vmem:[#allocation2 + $0x38] sm:$0xff]
    %v1558 = vpack.c.bf16 %v1551, %v1550
    %v1559 = vpack.c.bf16 %v1553, %v1552
    %v1560 = vpack.c.bf16 %v1555, %v1554
    %v1561 = vpack.c.bf16 %v1557, %v1556
    %v1562 = vld [vmem:[#allocation4 + $0x80] sm:$0xf]
    %v1563 = vld [vmem:[#allocation4 + $0x84] sm:$0xf]
    %v1564 = vld [vmem:[#allocation4 + $0x88] sm:$0xf]
    %v1565 = vld [vmem:[#allocation4 + $0x8c] sm:$0xf]
    %v1566 = vld [vmem:[#allocation4 + $0x90] sm:$0xf]
    %v1567 = vld [vmem:[#allocation4 + $0x94] sm:$0xf]
    %v1568 = vld [vmem:[#allocation4 + $0x98] sm:$0xf]
    %v1569 = vld [vmem:[#allocation4 + $0x9c] sm:$0xf]
    %v1570 = vld [vmem:[#allocation4 + $0xa0] sm:$0xf]
    %v1571 = vld [vmem:[#allocation4 + $0xa4] sm:$0xf]
    %v1572 = vld [vmem:[#allocation4 + $0xa8] sm:$0xf]
    %v1573 = vld [vmem:[#allocation4 + $0xac] sm:$0xf]
    %v1574 = vld [vmem:[#allocation4 + $0xb0] sm:$0xf]
    %v1575 = vld [vmem:[#allocation4 + $0xb4] sm:$0xf]
    %v1576 = vld [vmem:[#allocation4 + $0xb8] sm:$0xf]
    %v1577 = vld [vmem:[#allocation4 + $0xbc] sm:$0xf]
    %v1578 = vld [vmem:[%s3 + $0x6] sm:$0x1]
    %v1579 = vlaneseq
    %v1580 = vshrl.u32 %v1579, 7
    %v1581 = vsub.s32 0, %v1580
    %v1582 = vrot.slane %v1578, %v1581
    %v1599 = vunpack.c.l.b16 %v1562
    %v1600 = vunpack.c.l.b16 %v1563
    %v1601 = vunpack.c.l.b16 %v1564
    %v1602 = vunpack.c.l.b16 %v1565
    %v1603 = vunpack.c.l.b16 %v1566
    %v1604 = vunpack.c.l.b16 %v1567
    %v1605 = vunpack.c.l.b16 %v1568
    %v1606 = vunpack.c.l.b16 %v1569
    %v1607 = vunpack.c.l.b16 %v1570
    %v1608 = vunpack.c.l.b16 %v1571
    %v1609 = vunpack.c.l.b16 %v1572
    %v1610 = vunpack.c.l.b16 %v1573
    %v1611 = vunpack.c.l.b16 %v1574
    %v1612 = vunpack.c.l.b16 %v1575
    %v1613 = vunpack.c.l.b16 %v1576
    %v1614 = vunpack.c.l.b16 %v1577
    %v1615 = vpack.c.b16 %v1600, %v1599
    %v1616 = vpack.c.b16 %v1602, %v1601
    %v1617 = vpack.c.b16 %v1604, %v1603
    %v1618 = vpack.c.b16 %v1606, %v1605
    %v1619 = vpack.c.b16 %v1608, %v1607
    %v1620 = vpack.c.b16 %v1610, %v1609
    %v1621 = vpack.c.b16 %v1612, %v1611
    %v1622 = vpack.c.b16 %v1614, %v1613
    %1631 = vmatprep.subr.bf16.mxu0 0
    %1632 = vmatpush1.bf16.msra.mxu0 %v1622
    %1633 = vmatprep.subr.bf16.mxu0 0
    %1634 = vmatpush1.bf16.msra.mxu0 %v1621
    %1635 = vmatprep.subr.bf16.mxu0 0
    %1636 = vmatpush1.bf16.msra.mxu0 %v1620
    %1637 = vmatprep.subr.bf16.mxu0 0
    %1638 = vmatpush1.bf16.msra.mxu0 %v1619
    %1639 = vmatprep.subr.bf16.mxu0 0
    %1640 = vmatpush1.bf16.msra.mxu0 %v1618
    %1641 = vmatprep.subr.bf16.mxu0 0
    %1642 = vmatpush1.bf16.msra.mxu0 %v1617
    %1643 = vmatprep.subr.bf16.mxu0 0
    %1644 = vmatpush1.bf16.msra.mxu0 %v1616
    %1645 = vmatprep.subr.bf16.mxu0 0
    %1646 = vmatpush1.bf16.msra.mxu0 %v1615
    %1647 = vmatprep.subr.bf16.mxu0 0
    %1648 = vmatpush2.bf16.msra.mxu0 0
    %1649 = vmatprep.subr.bf16.mxu0 0
    %1650 = vmatpush2.bf16.msra.mxu0 0
    %1651 = vmatprep.subr.bf16.mxu0 0
    %1652 = vmatpush2.bf16.msra.mxu0 0
    %1653 = vmatprep.subr.bf16.mxu0 0
    %1654 = vmatpush2.bf16.msra.mxu0 0
    %1655 = vmatprep.subr.bf16.mxu0 0
    %1656 = vmatpush2.bf16.msra.mxu0 0
    %1657 = vmatprep.subr.bf16.mxu0 0
    %1658 = vmatpush2.bf16.msra.mxu0 0
    %1659 = vmatprep.subr.bf16.mxu0 0
    %1660 = vmatpush2.bf16.msra.mxu0 0
    %1661 = vmatprep.subr.bf16.mxu0 0
    %1662 = vmatpush2.bf16.msra.mxu0 0
    %1663 = vmatprep.mubr.bf16.mxu0 0
    %1664 = vmatmul.mubr.bf16.gmra.mxu0 %v1558
    %v1665 = vpop.f32.mrf.mxu0
    %v1666 = vadd.f32 %v1582, %v1665
    %v1667 = vpop.f32.mrf.mxu0
    %v1668 = vpop.f32.mrf.mxu0
    %v1669 = vadd.f32 %v1582, %v1668
    %v1670 = vpop.f32.mrf.mxu0
    %1671 = vmatprep.mubr.bf16.mxu0 0
    %1672 = vmatmul.mubr.bf16.gmra.mxu0 %v1559
    %v1673 = vpop.f32.mrf.mxu0
    %v1674 = vadd.f32 %v1582, %v1673
    %v1675 = vpop.f32.mrf.mxu0
    %v1676 = vpop.f32.mrf.mxu0
    %v1677 = vadd.f32 %v1582, %v1676
    %v1678 = vpop.f32.mrf.mxu0
    %1679 = vmatprep.mubr.bf16.mxu0 0
    %1680 = vmatmul.mubr.bf16.gmra.mxu0 %v1560
    %v1681 = vpop.f32.mrf.mxu0
    %v1682 = vadd.f32 %v1582, %v1681
    %v1683 = vpop.f32.mrf.mxu0
    %v1684 = vpop.f32.mrf.mxu0
    %v1685 = vadd.f32 %v1582, %v1684
    %v1686 = vpop.f32.mrf.mxu0
    %1687 = vmatprep.mubr.bf16.mxu0 0
    %1688 = vmatmul.mubr.bf16.gmra.mxu0 %v1561
    %v1689 = vpop.f32.mrf.mxu0
    %v1690 = vadd.f32 %v1582, %v1689
    %v1691 = vpop.f32.mrf.mxu0
    %v1692 = vpop.f32.mrf.mxu0
    %v1693 = vadd.f32 %v1582, %v1692
    %v1694 = vpop.f32.mrf.mxu0
    %1695 = vdwg.mxu0
    %v1696 = vmax.f32 %v1666, 0.0
    %v1697 = vmax.f32 %v1669, 0.0
    %v1698 = vmax.f32 %v1674, 0.0
    %v1699 = vmax.f32 %v1677, 0.0
    %v1700 = vmax.f32 %v1682, 0.0
    %v1701 = vmax.f32 %v1685, 0.0
    %v1702 = vmax.f32 %v1690, 0.0
    %v1703 = vmax.f32 %v1693, 0.0
    %1704 = vst.msk [vmem:[#allocation3] sm:$0xff] %vm364, %v1696
    %1705 = vst.msk [vmem:[#allocation3 + $0x8] sm:$0xff] %vm364, %v1697
    %1706 = vst.msk [vmem:[#allocation3 + $0x10] sm:$0xff] %vm364, %v1698
    %1707 = vst.msk [vmem:[#allocation3 + $0x18] sm:$0xff] %vm364, %v1699
    %1708 = vst.msk [vmem:[#allocation3 + $0x20] sm:$0xff] %vm364, %v1700
    %1709 = vst.msk [vmem:[#allocation3 + $0x28] sm:$0xff] %vm364, %v1701
    %1710 = vst.msk [vmem:[#allocation3 + $0x30] sm:$0xff] %vm364, %v1702
    %1711 = vst.msk [vmem:[#allocation3 + $0x38] sm:$0xff] %vm364, %v1703
    %v1712 = vld [vmem:[#allocation3] sm:$0xff]
    %v1713 = vld [vmem:[#allocation3 + $0x8] sm:$0xff]
    %v1714 = vld [vmem:[#allocation3 + $0x10] sm:$0xff]
    %v1715 = vld [vmem:[#allocation3 + $0x18] sm:$0xff]
    %v1716 = vld [vmem:[#allocation3 + $0x20] sm:$0xff]
    %v1717 = vld [vmem:[#allocation3 + $0x28] sm:$0xff]
    %v1718 = vld [vmem:[#allocation3 + $0x30] sm:$0xff]
    %v1719 = vld [vmem:[#allocation3 + $0x38] sm:$0xff]
    %v1720 = vpack.c.bf16 %v1713, %v1712
    %v1721 = vpack.c.bf16 %v1715, %v1714
    %v1722 = vpack.c.bf16 %v1717, %v1716
    %v1723 = vpack.c.bf16 %v1719, %v1718
    %v1724 = vld [vmem:[#allocation4 + $0xc0] sm:$0xf]
    %v1725 = vld [vmem:[#allocation4 + $0xc4] sm:$0xf]
    %v1726 = vld [vmem:[#allocation4 + $0xc8] sm:$0xf]
    %v1727 = vld [vmem:[#allocation4 + $0xcc] sm:$0xf]
    %v1732 = vunpack.c.l.b16 %v1724
    %v1733 = vunpack.c.l.b16 %v1725
    %v1734 = vunpack.c.l.b16 %v1726
    %v1735 = vunpack.c.l.b16 %v1727
    %v1736 = vpack.c.b16 %v1733, %v1732
    %v1737 = vpack.c.b16 %v1735, %v1734
    %v1741 = vsel %vm364, %v1720, 0
    %v1744 = vsel %vm364, %v1721, 0
    %v1747 = vsel %vm364, %v1722, 0
    %v1750 = vsel %vm364, %v1723, 0
    %1752 = vmatprep.subr.bf16.mxu0 0
    %1753 = vmatpush1.bf16.msra.mxu0 0
    %1754 = vmatprep.subr.bf16.mxu0 0
    %1755 = vmatpush1.bf16.msra.mxu0 0
    %1756 = vmatprep.subr.bf16.mxu0 0
    %1757 = vmatpush1.bf16.msra.mxu0 0
    %1758 = vmatprep.subr.bf16.mxu0 0
    %1759 = vmatpush1.bf16.msra.mxu0 0
    %1760 = vmatprep.subr.bf16.mxu0 0
    %1761 = vmatpush1.bf16.msra.mxu0 0
    %1762 = vmatprep.subr.bf16.mxu0 0
    %1763 = vmatpush1.bf16.msra.mxu0 0
    %1764 = vmatprep.subr.bf16.mxu0 0
    %1765 = vmatpush1.bf16.msra.mxu0 %v1737
    %1766 = vmatprep.subr.bf16.mxu0 0
    %1767 = vmatpush1.bf16.msra.mxu0 %v1736
    %1768 = vmatprep.subr.bf16.mxu0 0
    %1769 = vmatpush2.bf16.msra.mxu0 0
    %1770 = vmatprep.subr.bf16.mxu0 0
    %1771 = vmatpush2.bf16.msra.mxu0 0
    %1772 = vmatprep.subr.bf16.mxu0 0
    %1773 = vmatpush2.bf16.msra.mxu0 0
    %1774 = vmatprep.subr.bf16.mxu0 0
    %1775 = vmatpush2.bf16.msra.mxu0 0
    %1776 = vmatprep.subr.bf16.mxu0 0
    %1777 = vmatpush2.bf16.msra.mxu0 0
    %1778 = vmatprep.subr.bf16.mxu0 0
    %1779 = vmatpush2.bf16.msra.mxu0 0
    %1780 = vmatprep.subr.bf16.mxu0 0
    %1781 = vmatpush2.bf16.msra.mxu0 0
    %1782 = vmatprep.subr.bf16.mxu0 0
    %1783 = vmatpush2.bf16.msra.mxu0 0
    %1784 = vmatprep.mubr.bf16.mxu0 0
    %1785 = vmatmul.mubr.bf16.gmra.mxu0 %v1741
    %v1786 = vpop.f32.mrf.mxu0
    %v1787 = vadd.f32 0.0, %v1786
    %v1788 = vpop.f32.mrf.mxu0
    %v1789 = vpop.f32.mrf.mxu0
    %v1790 = vadd.f32 0.0, %v1789
    %v1791 = vpop.f32.mrf.mxu0
    %1792 = vmatprep.mubr.bf16.mxu0 0
    %1793 = vmatmul.mubr.bf16.gmra.mxu0 %v1744
    %v1794 = vpop.f32.mrf.mxu0
    %v1795 = vadd.f32 0.0, %v1794
    %v1796 = vpop.f32.mrf.mxu0
    %v1797 = vpop.f32.mrf.mxu0
    %v1798 = vadd.f32 0.0, %v1797
    %v1799 = vpop.f32.mrf.mxu0
    %1800 = vmatprep.mubr.bf16.mxu0 0
    %1801 = vmatmul.mubr.bf16.gmra.mxu0 %v1747
    %v1802 = vpop.f32.mrf.mxu0
    %v1803 = vadd.f32 0.0, %v1802
    %v1804 = vpop.f32.mrf.mxu0
    %v1805 = vpop.f32.mrf.mxu0
    %v1806 = vadd.f32 0.0, %v1805
    %v1807 = vpop.f32.mrf.mxu0
    %1808 = vmatprep.mubr.bf16.mxu0 0
    %1809 = vmatmul.mubr.bf16.gmra.mxu0 %v1750
    %v1810 = vpop.f32.mrf.mxu0
    %v1811 = vadd.f32 0.0, %v1810
    %v1812 = vpop.f32.mrf.mxu0
    %v1813 = vpop.f32.mrf.mxu0
    %v1814 = vadd.f32 0.0, %v1813
    %v1815 = vpop.f32.mrf.mxu0
    %1816 = vdwg.mxu0
    %v1817 = vld [vmem:[%s3 + $0x7] sm:$0x1]
    %v1818 = vpack.c.bf16 %v1790, %v1787
    %v1819 = vpack.c.bf16 %v1798, %v1795
    %v1820 = vpack.c.bf16 %v1806, %v1803
    %v1821 = vpack.c.bf16 %v1814, %v1811
    %v1822 = vlaneseq
    %v1823 = vshrl.u32 %v1822, 7
    %v1824 = vsub.s32 0, %v1823
    %v1825 = vrot.slane %v1817, %v1824
    %1826 = vmatprep.subr.bf16.mxu0 0
    %1827 = vmatpush1.bf16.msra.mxu0 0
    %1828 = vmatprep.subr.bf16.mxu0 0
    %1829 = vmatpush1.bf16.msra.mxu0 0
    %1830 = vmatprep.subr.bf16.mxu0 0
    %1831 = vmatpush1.bf16.msra.mxu0 0
    %1832 = vmatprep.subr.bf16.mxu0 0
    %1833 = vmatpush1.bf16.msra.mxu0 0
    %1834 = vmatprep.subr.bf16.mxu0 0
    %1835 = vmatpush1.bf16.msra.mxu0 %v1821
    %1836 = vmatprep.subr.bf16.mxu0 0
    %1837 = vmatpush1.bf16.msra.mxu0 %v1820
    %1838 = vmatprep.subr.bf16.mxu0 0
    %1839 = vmatpush1.bf16.msra.mxu0 %v1819
    %1840 = vmatprep.subr.bf16.mxu0 0
    %1841 = vmatpush1.bf16.msra.mxu0 %v1818
    %1842 = vmatprep.subr.bf16.mxu0 0
    %1843 = vmatpush2.bf16.msra.mxu0 0
    %1844 = vmatprep.subr.bf16.mxu0 0
    %1845 = vmatpush2.bf16.msra.mxu0 0
    %1846 = vmatprep.subr.bf16.mxu0 0
    %1847 = vmatpush2.bf16.msra.mxu0 0
    %1848 = vmatprep.subr.bf16.mxu0 0
    %1849 = vmatpush2.bf16.msra.mxu0 0
    %1850 = vmatprep.subr.bf16.mxu0 0
    %1851 = vmatpush2.bf16.msra.mxu0 0
    %1852 = vmatprep.subr.bf16.mxu0 0
    %1853 = vmatpush2.bf16.msra.mxu0 0
    %1854 = vmatprep.subr.bf16.mxu0 0
    %1855 = vmatpush2.bf16.msra.mxu0 0
    %1856 = vmatprep.subr.bf16.mxu0 0
    %1857 = vmatpush2.bf16.msra.mxu0 0
    %1858 = vmatprep.mubr.bf16.mxu0 0
    %1859 = vmatmul.mubr.bf16.gmra.mxu0 %v509
    %v1860 = vpop.f32.mrf.mxu0
    %v1861 = vadd.f32 %v1825, %v1860
    %v1862 = vpop.f32.mrf.mxu0
    %v1863 = vpop.f32.mrf.mxu0
    %v1864 = vadd.f32 %v1825, %v1863
    %v1865 = vpop.f32.mrf.mxu0
    %1866 = vmatprep.mubr.bf16.mxu0 0
    %1867 = vmatmul.mubr.bf16.gmra.mxu0 %v512
    %v1868 = vpop.f32.mrf.mxu0
    %v1869 = vadd.f32 %v1825, %v1868
    %v1870 = vpop.f32.mrf.mxu0
    %v1871 = vpop.f32.mrf.mxu0
    %v1872 = vadd.f32 %v1825, %v1871
    %v1873 = vpop.f32.mrf.mxu0
    %1874 = vmatprep.mubr.bf16.mxu0 0
    %1875 = vmatmul.mubr.bf16.gmra.mxu0 %v515
    %v1876 = vpop.f32.mrf.mxu0
    %v1877 = vadd.f32 %v1825, %v1876
    %v1878 = vpop.f32.mrf.mxu0
    %v1879 = vpop.f32.mrf.mxu0
    %v1880 = vadd.f32 %v1825, %v1879
    %v1881 = vpop.f32.mrf.mxu0
    %1882 = vmatprep.mubr.bf16.mxu0 0
    %1883 = vmatmul.mubr.bf16.gmra.mxu0 %v518
    %v1884 = vpop.f32.mrf.mxu0
    %v1885 = vadd.f32 %v1825, %v1884
    %v1886 = vpop.f32.mrf.mxu0
    %v1887 = vpop.f32.mrf.mxu0
    %v1888 = vadd.f32 %v1825, %v1887
    %v1889 = vpop.f32.mrf.mxu0
    %1890 = vdwg.mxu0
    %v1891 = vmax.f32 %v1861, 0.0
    %v1892 = vmax.f32 %v1864, 0.0
    %v1893 = vmax.f32 %v1869, 0.0
    %v1894 = vmax.f32 %v1872, 0.0
    %v1895 = vmax.f32 %v1877, 0.0
    %v1896 = vmax.f32 %v1880, 0.0
    %v1897 = vmax.f32 %v1885, 0.0
    %v1898 = vmax.f32 %v1888, 0.0
    %v1899 = vadd.f32 %v1787, %v1825
    %v1900 = vadd.f32 %v1790, %v1825
    %v1901 = vadd.f32 %v1795, %v1825
    %v1902 = vadd.f32 %v1798, %v1825
    %v1903 = vadd.f32 %v1803, %v1825
    %v1904 = vadd.f32 %v1806, %v1825
    %v1905 = vadd.f32 %v1811, %v1825
    %v1906 = vadd.f32 %v1814, %v1825
    %v1907 = vmax.f32 %v1899, 0.0
    %v1908 = vmax.f32 %v1900, 0.0
    %v1909 = vmax.f32 %v1901, 0.0
    %v1910 = vmax.f32 %v1902, 0.0
    %v1911 = vmax.f32 %v1903, 0.0
    %v1912 = vmax.f32 %v1904, 0.0
    %v1913 = vmax.f32 %v1905, 0.0
    %v1914 = vmax.f32 %v1906, 0.0
    %1923 = vrot.lane.b32.xlu0 %v1907, 112
    %v1924 = vpop.permute.xlu0 %1923
    %1925 = vrot.lane.b32.xlu0 %v1908, 112
    %v1926 = vpop.permute.xlu0 %1925
    %1927 = vrot.lane.b32.xlu0 %v1909, 112
    %v1928 = vpop.permute.xlu0 %1927
    %1929 = vrot.lane.b32.xlu0 %v1910, 112
    %v1930 = vpop.permute.xlu0 %1929
    %1931 = vrot.lane.b32.xlu0 %v1911, 112
    %v1932 = vpop.permute.xlu0 %1931
    %1933 = vrot.lane.b32.xlu0 %v1912, 112
    %v1934 = vpop.permute.xlu0 %1933
    %1935 = vrot.lane.b32.xlu0 %v1913, 112
    %v1936 = vpop.permute.xlu0 %1935
    %1937 = vrot.lane.b32.xlu0 %v1914, 112
    %v1938 = vpop.permute.xlu0 %1937
    %v1947 = vadd.f32 %v1891, %v1924
    %v1948 = vadd.f32 %v1892, %v1926
    %v1949 = vadd.f32 %v1893, %v1928
    %v1950 = vadd.f32 %v1894, %v1930
    %v1951 = vadd.f32 %v1895, %v1932
    %v1952 = vadd.f32 %v1896, %v1934
    %v1953 = vadd.f32 %v1897, %v1936
    %v1954 = vadd.f32 %v1898, %v1938
    %1963 = vrot.lane.b32.xlu0 %v1947, 32
    %v1964 = vpop.permute.xlu0 %1963
    %1965 = vrot.lane.b32.xlu0 %v1948, 32
    %v1966 = vpop.permute.xlu0 %1965
    %1967 = vrot.lane.b32.xlu0 %v1949, 32
    %v1968 = vpop.permute.xlu0 %1967
    %1969 = vrot.lane.b32.xlu0 %v1950, 32
    %v1970 = vpop.permute.xlu0 %1969
    %1971 = vrot.lane.b32.xlu0 %v1951, 32
    %v1972 = vpop.permute.xlu0 %1971
    %1973 = vrot.lane.b32.xlu0 %v1952, 32
    %v1974 = vpop.permute.xlu0 %1973
    %1975 = vrot.lane.b32.xlu0 %v1953, 32
    %v1976 = vpop.permute.xlu0 %1975
    %1977 = vrot.lane.b32.xlu0 %v1954, 32
    %v1978 = vpop.permute.xlu0 %1977
    %1987 = vst.msk [vmem:[#allocation3] sm:$0xff] %vm681, %v1964
    %1988 = vst.msk [vmem:[#allocation3 + $0x8] sm:$0xff] %vm681, %v1966
    %1989 = vst.msk [vmem:[#allocation3 + $0x10] sm:$0xff] %vm681, %v1968
    %1990 = vst.msk [vmem:[#allocation3 + $0x18] sm:$0xff] %vm681, %v1970
    %1991 = vst.msk [vmem:[#allocation3 + $0x20] sm:$0xff] %vm681, %v1972
    %1992 = vst.msk [vmem:[#allocation3 + $0x28] sm:$0xff] %vm681, %v1974
    %1993 = vst.msk [vmem:[#allocation3 + $0x30] sm:$0xff] %vm681, %v1976
    %1994 = vst.msk [vmem:[#allocation3 + $0x38] sm:$0xff] %vm681, %v1978
    %v1995 = vld [vmem:[#allocation3] sm:$0xff]
    %v1996 = vld [vmem:[#allocation3 + $0x8] sm:$0xff]
    %v1997 = vld [vmem:[#allocation3 + $0x10] sm:$0xff]
    %v1998 = vld [vmem:[#allocation3 + $0x18] sm:$0xff]
    %v1999 = vld [vmem:[#allocation3 + $0x20] sm:$0xff]
    %v2000 = vld [vmem:[#allocation3 + $0x28] sm:$0xff]
    %v2001 = vld [vmem:[#allocation3 + $0x30] sm:$0xff]
    %v2002 = vld [vmem:[#allocation3 + $0x38] sm:$0xff]
    %v2003 = vpack.c.bf16 %v1996, %v1995
    %v2004 = vpack.c.bf16 %v1998, %v1997
    %v2005 = vpack.c.bf16 %v2000, %v1999
    %v2006 = vpack.c.bf16 %v2002, %v2001
    %v2007 = vld [vmem:[#allocation4 + $0xd0] sm:$0xf]
    %v2008 = vld [vmem:[#allocation4 + $0xd4] sm:$0xf]
    %2013 = vrot.lane.b32.xlu0 %v2003, 112
    %v2014 = vpop.permute.xlu0 %2013
    %2015 = vrot.lane.b32.xlu0 %v2004, 112
    %v2016 = vpop.permute.xlu0 %2015
    %2017 = vrot.lane.b32.xlu0 %v2005, 112
    %v2018 = vpop.permute.xlu0 %2017
    %2019 = vrot.lane.b32.xlu0 %v2006, 112
    %v2020 = vpop.permute.xlu0 %2019
    %v2023 = vunpack.c.l.b16 %v2007
    %v2024 = vunpack.c.l.b16 %v2008
    %v2025 = vpack.c.b16 %v2024, %v2023
    %v2028 = vsel %vm66, %v2014, 0
    %v2031 = vsel %vm66, %v2016, 0
    %v2034 = vsel %vm66, %v2018, 0
    %v2037 = vsel %vm66, %v2020, 0
    %2039 = vmatprep.subr.bf16.mxu0 0
    %2040 = vmatpush1.bf16.msra.mxu0 0
    %2041 = vmatprep.subr.bf16.mxu0 0
    %2042 = vmatpush1.bf16.msra.mxu0 0
    %2043 = vmatprep.subr.bf16.mxu0 0
    %2044 = vmatpush1.bf16.msra.mxu0 0
    %2045 = vmatprep.subr.bf16.mxu0 0
    %2046 = vmatpush1.bf16.msra.mxu0 0
    %2047 = vmatprep.subr.bf16.mxu0 0
    %2048 = vmatpush1.bf16.msra.mxu0 0
    %2049 = vmatprep.subr.bf16.mxu0 0
    %2050 = vmatpush1.bf16.msra.mxu0 0
    %2051 = vmatprep.subr.bf16.mxu0 0
    %2052 = vmatpush1.bf16.msra.mxu0 0
    %2053 = vmatprep.subr.bf16.mxu0 0
    %2054 = vmatpush1.bf16.msra.mxu0 %v2025
    %2055 = vmatprep.subr.bf16.mxu0 0
    %2056 = vmatpush2.bf16.msra.mxu0 0
    %2057 = vmatprep.subr.bf16.mxu0 0
    %2058 = vmatpush2.bf16.msra.mxu0 0
    %2059 = vmatprep.subr.bf16.mxu0 0
    %2060 = vmatpush2.bf16.msra.mxu0 0
    %2061 = vmatprep.subr.bf16.mxu0 0
    %2062 = vmatpush2.bf16.msra.mxu0 0
    %2063 = vmatprep.subr.bf16.mxu0 0
    %2064 = vmatpush2.bf16.msra.mxu0 0
    %2065 = vmatprep.subr.bf16.mxu0 0
    %2066 = vmatpush2.bf16.msra.mxu0 0
    %2067 = vmatprep.subr.bf16.mxu0 0
    %2068 = vmatpush2.bf16.msra.mxu0 0
    %2069 = vmatprep.subr.bf16.mxu0 0
    %2070 = vmatpush2.bf16.msra.mxu0 0
    %2071 = vmatprep.mubr.bf16.mxu0 0
    %2072 = vmatmul.mubr.bf16.gmra.mxu0 %v2028
    %v2073 = vpop.f32.mrf.mxu0
    %v2074 = vadd.f32 0.0, %v2073
    %v2075 = vpop.f32.mrf.mxu0
    %v2076 = vpop.f32.mrf.mxu0
    %v2077 = vadd.f32 0.0, %v2076
    %v2078 = vpop.f32.mrf.mxu0
    %2079 = vmatprep.mubr.bf16.mxu0 0
    %2080 = vmatmul.mubr.bf16.gmra.mxu0 %v2031
    %v2081 = vpop.f32.mrf.mxu0
    %v2082 = vadd.f32 0.0, %v2081
    %v2083 = vpop.f32.mrf.mxu0
    %v2084 = vpop.f32.mrf.mxu0
    %v2085 = vadd.f32 0.0, %v2084
    %v2086 = vpop.f32.mrf.mxu0
    %2087 = vmatprep.mubr.bf16.mxu0 0
    %2088 = vmatmul.mubr.bf16.gmra.mxu0 %v2034
    %v2089 = vpop.f32.mrf.mxu0
    %v2090 = vadd.f32 0.0, %v2089
    %v2091 = vpop.f32.mrf.mxu0
    %v2092 = vpop.f32.mrf.mxu0
    %v2093 = vadd.f32 0.0, %v2092
    %v2094 = vpop.f32.mrf.mxu0
    %2095 = vmatprep.mubr.bf16.mxu0 0
    %2096 = vmatmul.mubr.bf16.gmra.mxu0 %v2037
    %v2097 = vpop.f32.mrf.mxu0
    %v2098 = vadd.f32 0.0, %v2097
    %v2099 = vpop.f32.mrf.mxu0
    %v2100 = vpop.f32.mrf.mxu0
    %v2101 = vadd.f32 0.0, %v2100
    %v2102 = vpop.f32.mrf.mxu0
    %2103 = vdwg.mxu0
    %v2104 = vld [vmem:[%s3 + $0x8] sm:$0x1]
    %v2105 = vpack.c.bf16 %v2077, %v2074
    %v2106 = vpack.c.bf16 %v2085, %v2082
    %v2107 = vpack.c.bf16 %v2093, %v2090
    %v2108 = vpack.c.bf16 %v2101, %v2098
    %v2109 = vlaneseq
    %v2110 = vshrl.u32 %v2109, 7
    %v2111 = vsub.s32 0, %v2110
    %v2112 = vrot.slane %v2104, %v2111
    %2113 = vmatprep.subr.bf16.mxu0 0
    %2114 = vmatpush1.bf16.msra.mxu0 0
    %2115 = vmatprep.subr.bf16.mxu0 0
    %2116 = vmatpush1.bf16.msra.mxu0 0
    %2117 = vmatprep.subr.bf16.mxu0 0
    %2118 = vmatpush1.bf16.msra.mxu0 0
    %2119 = vmatprep.subr.bf16.mxu0 0
    %2120 = vmatpush1.bf16.msra.mxu0 0
    %2121 = vmatprep.subr.bf16.mxu0 0
    %2122 = vmatpush1.bf16.msra.mxu0 %v2108
    %2123 = vmatprep.subr.bf16.mxu0 0
    %2124 = vmatpush1.bf16.msra.mxu0 %v2107
    %2125 = vmatprep.subr.bf16.mxu0 0
    %2126 = vmatpush1.bf16.msra.mxu0 %v2106
    %2127 = vmatprep.subr.bf16.mxu0 0
    %2128 = vmatpush1.bf16.msra.mxu0 %v2105
    %2129 = vmatprep.subr.bf16.mxu0 0
    %2130 = vmatpush2.bf16.msra.mxu0 0
    %2131 = vmatprep.subr.bf16.mxu0 0
    %2132 = vmatpush2.bf16.msra.mxu0 0
    %2133 = vmatprep.subr.bf16.mxu0 0
    %2134 = vmatpush2.bf16.msra.mxu0 0
    %2135 = vmatprep.subr.bf16.mxu0 0
    %2136 = vmatpush2.bf16.msra.mxu0 0
    %2137 = vmatprep.subr.bf16.mxu0 0
    %2138 = vmatpush2.bf16.msra.mxu0 0
    %2139 = vmatprep.subr.bf16.mxu0 0
    %2140 = vmatpush2.bf16.msra.mxu0 0
    %2141 = vmatprep.subr.bf16.mxu0 0
    %2142 = vmatpush2.bf16.msra.mxu0 0
    %2143 = vmatprep.subr.bf16.mxu0 0
    %2144 = vmatpush2.bf16.msra.mxu0 0
    %2145 = vmatprep.mubr.bf16.mxu0 0
    %2146 = vmatmul.mubr.bf16.gmra.mxu0 %v509
    %v2147 = vpop.f32.mrf.mxu0
    %v2148 = vadd.f32 %v2112, %v2147
    %v2149 = vpop.f32.mrf.mxu0
    %v2150 = vpop.f32.mrf.mxu0
    %v2151 = vadd.f32 %v2112, %v2150
    %v2152 = vpop.f32.mrf.mxu0
    %2153 = vmatprep.mubr.bf16.mxu0 0
    %2154 = vmatmul.mubr.bf16.gmra.mxu0 %v512
    %v2155 = vpop.f32.mrf.mxu0
    %v2156 = vadd.f32 %v2112, %v2155
    %v2157 = vpop.f32.mrf.mxu0
    %v2158 = vpop.f32.mrf.mxu0
    %v2159 = vadd.f32 %v2112, %v2158
    %v2160 = vpop.f32.mrf.mxu0
    %2161 = vmatprep.mubr.bf16.mxu0 0
    %2162 = vmatmul.mubr.bf16.gmra.mxu0 %v515
    %v2163 = vpop.f32.mrf.mxu0
    %v2164 = vadd.f32 %v2112, %v2163
    %v2165 = vpop.f32.mrf.mxu0
    %v2166 = vpop.f32.mrf.mxu0
    %v2167 = vadd.f32 %v2112, %v2166
    %v2168 = vpop.f32.mrf.mxu0
    %2169 = vmatprep.mubr.bf16.mxu0 0
    %2170 = vmatmul.mubr.bf16.gmra.mxu0 %v518
    %v2171 = vpop.f32.mrf.mxu0
    %v2172 = vadd.f32 %v2112, %v2171
    %v2173 = vpop.f32.mrf.mxu0
    %v2174 = vpop.f32.mrf.mxu0
    %v2175 = vadd.f32 %v2112, %v2174
    %v2176 = vpop.f32.mrf.mxu0
    %2177 = vdwg.mxu0
    %v2178 = vmax.f32 %v2148, 0.0
    %v2179 = vmax.f32 %v2151, 0.0
    %v2180 = vmax.f32 %v2156, 0.0
    %v2181 = vmax.f32 %v2159, 0.0
    %v2182 = vmax.f32 %v2164, 0.0
    %v2183 = vmax.f32 %v2167, 0.0
    %v2184 = vmax.f32 %v2172, 0.0
    %v2185 = vmax.f32 %v2175, 0.0
    %v2186 = vadd.f32 %v1995, %v2178
    %v2187 = vadd.f32 %v1996, %v2179
    %v2188 = vadd.f32 %v1997, %v2180
    %v2189 = vadd.f32 %v1998, %v2181
    %v2190 = vadd.f32 %v1999, %v2182
    %v2191 = vadd.f32 %v2000, %v2183
    %v2192 = vadd.f32 %v2001, %v2184
    %v2193 = vadd.f32 %v2002, %v2185
    %2202 = vrot.lane.b32.xlu0 %v2186, 48
    %v2203 = vpop.permute.xlu0 %2202
    %2204 = vrot.lane.b32.xlu0 %v2187, 48
    %v2205 = vpop.permute.xlu0 %2204
    %2206 = vrot.lane.b32.xlu0 %v2188, 48
    %v2207 = vpop.permute.xlu0 %2206
    %2208 = vrot.lane.b32.xlu0 %v2189, 48
    %v2209 = vpop.permute.xlu0 %2208
    %2210 = vrot.lane.b32.xlu0 %v2190, 48
    %v2211 = vpop.permute.xlu0 %2210
    %2212 = vrot.lane.b32.xlu0 %v2191, 48
    %v2213 = vpop.permute.xlu0 %2212
    %2214 = vrot.lane.b32.xlu0 %v2192, 48
    %v2215 = vpop.permute.xlu0 %2214
    %2216 = vrot.lane.b32.xlu0 %v2193, 48
    %v2217 = vpop.permute.xlu0 %2216
    %2226 = vst.msk [vmem:[#allocation3] sm:$0xff] %vm921, %v2203
    %2227 = vst.msk [vmem:[#allocation3 + $0x8] sm:$0xff] %vm921, %v2205
    %2228 = vst.msk [vmem:[#allocation3 + $0x10] sm:$0xff] %vm921, %v2207
    %2229 = vst.msk [vmem:[#allocation3 + $0x18] sm:$0xff] %vm921, %v2209
    %2230 = vst.msk [vmem:[#allocation3 + $0x20] sm:$0xff] %vm921, %v2211
    %2231 = vst.msk [vmem:[#allocation3 + $0x28] sm:$0xff] %vm921, %v2213
    %2232 = vst.msk [vmem:[#allocation3 + $0x30] sm:$0xff] %vm921, %v2215
    %2233 = vst.msk [vmem:[#allocation3 + $0x38] sm:$0xff] %vm921, %v2217
    %v2234 = vld [vmem:[#allocation3] sm:$0xff]
    %v2235 = vld [vmem:[#allocation3 + $0x8] sm:$0xff]
    %v2236 = vld [vmem:[#allocation3 + $0x10] sm:$0xff]
    %v2237 = vld [vmem:[#allocation3 + $0x18] sm:$0xff]
    %v2238 = vld [vmem:[#allocation3 + $0x20] sm:$0xff]
    %v2239 = vld [vmem:[#allocation3 + $0x28] sm:$0xff]
    %v2240 = vld [vmem:[#allocation3 + $0x30] sm:$0xff]
    %v2241 = vld [vmem:[#allocation3 + $0x38] sm:$0xff]
    %v2242 = vpack.c.bf16 %v2235, %v2234
    %v2243 = vpack.c.bf16 %v2237, %v2236
    %v2244 = vpack.c.bf16 %v2239, %v2238
    %v2245 = vpack.c.bf16 %v2241, %v2240
    %v2246 = vld [vmem:[#allocation4 + $0xd8] sm:$0xf]
    %v2247 = vld [vmem:[#allocation4 + $0xdc] sm:$0xf]
    %2252 = vrot.lane.b32.xlu0 %v2242, 96
    %v2253 = vpop.permute.xlu0 %2252
    %2254 = vrot.lane.b32.xlu0 %v2243, 96
    %v2255 = vpop.permute.xlu0 %2254
    %2256 = vrot.lane.b32.xlu0 %v2244, 96
    %v2257 = vpop.permute.xlu0 %2256
    %2258 = vrot.lane.b32.xlu0 %v2245, 96
    %v2259 = vpop.permute.xlu0 %2258
    %v2262 = vunpack.c.l.b16 %v2246
    %v2263 = vunpack.c.l.b16 %v2247
    %v2264 = vpack.c.b16 %v2263, %v2262
    %v2267 = vsel %vm66, %v2253, 0
    %v2270 = vsel %vm66, %v2255, 0
    %v2273 = vsel %vm66, %v2257, 0
    %v2276 = vsel %vm66, %v2259, 0
    %2278 = vmatprep.subr.bf16.mxu0 0
    %2279 = vmatpush1.bf16.msra.mxu0 0
    %2280 = vmatprep.subr.bf16.mxu0 0
    %2281 = vmatpush1.bf16.msra.mxu0 0
    %2282 = vmatprep.subr.bf16.mxu0 0
    %2283 = vmatpush1.bf16.msra.mxu0 0
    %2284 = vmatprep.subr.bf16.mxu0 0
    %2285 = vmatpush1.bf16.msra.mxu0 0
    %2286 = vmatprep.subr.bf16.mxu0 0
    %2287 = vmatpush1.bf16.msra.mxu0 0
    %2288 = vmatprep.subr.bf16.mxu0 0
    %2289 = vmatpush1.bf16.msra.mxu0 0
    %2290 = vmatprep.subr.bf16.mxu0 0
    %2291 = vmatpush1.bf16.msra.mxu0 0
    %2292 = vmatprep.subr.bf16.mxu0 0
    %2293 = vmatpush1.bf16.msra.mxu0 %v2264
    %2294 = vmatprep.subr.bf16.mxu0 0
    %2295 = vmatpush2.bf16.msra.mxu0 0
    %2296 = vmatprep.subr.bf16.mxu0 0
    %2297 = vmatpush2.bf16.msra.mxu0 0
    %2298 = vmatprep.subr.bf16.mxu0 0
    %2299 = vmatpush2.bf16.msra.mxu0 0
    %2300 = vmatprep.subr.bf16.mxu0 0
    %2301 = vmatpush2.bf16.msra.mxu0 0
    %2302 = vmatprep.subr.bf16.mxu0 0
    %2303 = vmatpush2.bf16.msra.mxu0 0
    %2304 = vmatprep.subr.bf16.mxu0 0
    %2305 = vmatpush2.bf16.msra.mxu0 0
    %2306 = vmatprep.subr.bf16.mxu0 0
    %2307 = vmatpush2.bf16.msra.mxu0 0
    %2308 = vmatprep.subr.bf16.mxu0 0
    %2309 = vmatpush2.bf16.msra.mxu0 0
    %2310 = vmatprep.mubr.bf16.mxu0 0
    %2311 = vmatmul.mubr.bf16.gmra.mxu0 %v2267
    %v2312 = vpop.f32.mrf.mxu0
    %v2313 = vadd.f32 0.0, %v2312
    %v2314 = vpop.f32.mrf.mxu0
    %v2315 = vpop.f32.mrf.mxu0
    %v2316 = vadd.f32 0.0, %v2315
    %v2317 = vpop.f32.mrf.mxu0
    %2318 = vmatprep.mubr.bf16.mxu0 0
    %2319 = vmatmul.mubr.bf16.gmra.mxu0 %v2270
    %v2320 = vpop.f32.mrf.mxu0
    %v2321 = vadd.f32 0.0, %v2320
    %v2322 = vpop.f32.mrf.mxu0
    %v2323 = vpop.f32.mrf.mxu0
    %v2324 = vadd.f32 0.0, %v2323
    %v2325 = vpop.f32.mrf.mxu0
    %2326 = vmatprep.mubr.bf16.mxu0 0
    %2327 = vmatmul.mubr.bf16.gmra.mxu0 %v2273
    %v2328 = vpop.f32.mrf.mxu0
    %v2329 = vadd.f32 0.0, %v2328
    %v2330 = vpop.f32.mrf.mxu0
    %v2331 = vpop.f32.mrf.mxu0
    %v2332 = vadd.f32 0.0, %v2331
    %v2333 = vpop.f32.mrf.mxu0
    %2334 = vmatprep.mubr.bf16.mxu0 0
    %2335 = vmatmul.mubr.bf16.gmra.mxu0 %v2276
    %v2336 = vpop.f32.mrf.mxu0
    %v2337 = vadd.f32 0.0, %v2336
    %v2338 = vpop.f32.mrf.mxu0
    %v2339 = vpop.f32.mrf.mxu0
    %v2340 = vadd.f32 0.0, %v2339
    %v2341 = vpop.f32.mrf.mxu0
    %2342 = vdwg.mxu0
    %v2343 = vld [vmem:[%s3 + $0x9] sm:$0x1]
    %v2344 = vlaneseq
    %v2345 = vshrl.u32 %v2344, 7
    %v2346 = vsub.s32 0, %v2345
    %v2347 = vrot.slane %v2343, %v2346
    %v2348 = vadd.f32 %v2313, %v2347
    %v2349 = vadd.f32 %v2316, %v2347
    %v2350 = vadd.f32 %v2321, %v2347
    %v2351 = vadd.f32 %v2324, %v2347
    %v2352 = vadd.f32 %v2329, %v2347
    %v2353 = vadd.f32 %v2332, %v2347
    %v2354 = vadd.f32 %v2337, %v2347
    %v2355 = vadd.f32 %v2340, %v2347
    %v2356 = vmax.f32 %v2348, 0.0
    %v2357 = vmax.f32 %v2349, 0.0
    %v2358 = vmax.f32 %v2350, 0.0
    %v2359 = vmax.f32 %v2351, 0.0
    %v2360 = vmax.f32 %v2352, 0.0
    %v2361 = vmax.f32 %v2353, 0.0
    %v2362 = vmax.f32 %v2354, 0.0
    %v2363 = vmax.f32 %v2355, 0.0
    %2372 = vrot.lane.b32.xlu0 %v2234, 80
    %v2373 = vpop.permute.xlu0 %2372
    %2374 = vrot.lane.b32.xlu0 %v2235, 80
    %v2375 = vpop.permute.xlu0 %2374
    %2376 = vrot.lane.b32.xlu0 %v2236, 80
    %v2377 = vpop.permute.xlu0 %2376
    %2378 = vrot.lane.b32.xlu0 %v2237, 80
    %v2379 = vpop.permute.xlu0 %2378
    %2380 = vrot.lane.b32.xlu0 %v2238, 80
    %v2381 = vpop.permute.xlu0 %2380
    %2382 = vrot.lane.b32.xlu0 %v2239, 80
    %v2383 = vpop.permute.xlu0 %2382
    %2384 = vrot.lane.b32.xlu0 %v2240, 80
    %v2385 = vpop.permute.xlu0 %2384
    %2386 = vrot.lane.b32.xlu0 %v2241, 80
    %v2387 = vpop.permute.xlu0 %2386
    %v2396 = vadd.f32 %v2356, %v2373
    %v2397 = vadd.f32 %v2357, %v2375
    %v2398 = vadd.f32 %v2358, %v2377
    %v2399 = vadd.f32 %v2359, %v2379
    %v2400 = vadd.f32 %v2360, %v2381
    %v2401 = vadd.f32 %v2361, %v2383
    %v2402 = vadd.f32 %v2362, %v2385
    %v2403 = vadd.f32 %v2363, %v2387
    %2412 = vrot.lane.b32.xlu0 %v2396, 64
    %v2413 = vpop.permute.xlu0 %2412
    %2414 = vrot.lane.b32.xlu0 %v2397, 64
    %v2415 = vpop.permute.xlu0 %2414
    %2416 = vrot.lane.b32.xlu0 %v2398, 64
    %v2417 = vpop.permute.xlu0 %2416
    %2418 = vrot.lane.b32.xlu0 %v2399, 64
    %v2419 = vpop.permute.xlu0 %2418
    %2420 = vrot.lane.b32.xlu0 %v2400, 64
    %v2421 = vpop.permute.xlu0 %2420
    %2422 = vrot.lane.b32.xlu0 %v2401, 64
    %v2423 = vpop.permute.xlu0 %2422
    %2424 = vrot.lane.b32.xlu0 %v2402, 64
    %v2425 = vpop.permute.xlu0 %2424
    %2426 = vrot.lane.b32.xlu0 %v2403, 64
    %v2427 = vpop.permute.xlu0 %2426
    %2436 = vst.msk [vmem:[#allocation3] sm:$0xff] %vm1132, %v2413
    %2437 = vst.msk [vmem:[#allocation3 + $0x8] sm:$0xff] %vm1132, %v2415
    %2438 = vst.msk [vmem:[#allocation3 + $0x10] sm:$0xff] %vm1132, %v2417
    %2439 = vst.msk [vmem:[#allocation3 + $0x18] sm:$0xff] %vm1132, %v2419
    %2440 = vst.msk [vmem:[#allocation3 + $0x20] sm:$0xff] %vm1132, %v2421
    %2441 = vst.msk [vmem:[#allocation3 + $0x28] sm:$0xff] %vm1132, %v2423
    %2442 = vst.msk [vmem:[#allocation3 + $0x30] sm:$0xff] %vm1132, %v2425
    %2443 = vst.msk [vmem:[#allocation3 + $0x38] sm:$0xff] %vm1132, %v2427
    %v2444 = vld [vmem:[#allocation3] sm:$0xff]
    %v2445 = vld [vmem:[#allocation3 + $0x8] sm:$0xff]
    %v2446 = vld [vmem:[#allocation3 + $0x10] sm:$0xff]
    %v2447 = vld [vmem:[#allocation3 + $0x18] sm:$0xff]
    %v2448 = vld [vmem:[#allocation3 + $0x20] sm:$0xff]
    %v2449 = vld [vmem:[#allocation3 + $0x28] sm:$0xff]
    %v2450 = vld [vmem:[#allocation3 + $0x30] sm:$0xff]
    %v2451 = vld [vmem:[#allocation3 + $0x38] sm:$0xff]
    %v2452 = vpack.c.bf16 %v2445, %v2444
    %v2453 = vpack.c.bf16 %v2447, %v2446
    %v2454 = vpack.c.bf16 %v2449, %v2448
    %v2455 = vpack.c.bf16 %v2451, %v2450
    %v2456 = vld [vmem:[#allocation4 + $0xe0] sm:$0xf]
    %v2457 = vld [vmem:[#allocation4 + $0xe4] sm:$0xf]
    %v2458 = vld [vmem:[#allocation4 + $0xe8] sm:$0xf]
    %v2459 = vld [vmem:[#allocation4 + $0xec] sm:$0xf]
    %v2460 = vld [vmem:[#allocation4 + $0xf0] sm:$0xf]
    %v2461 = vld [vmem:[#allocation4 + $0xf4] sm:$0xf]
    %2466 = vrot.lane.b32.xlu0 %v2452, 96
    %v2467 = vpop.permute.xlu0 %2466
    %2468 = vrot.lane.b32.xlu0 %v2453, 96
    %v2469 = vpop.permute.xlu0 %2468
    %2470 = vrot.lane.b32.xlu0 %v2454, 96
    %v2471 = vpop.permute.xlu0 %2470
    %2472 = vrot.lane.b32.xlu0 %v2455, 96
    %v2473 = vpop.permute.xlu0 %2472
    %v2480 = vunpack.c.l.b16 %v2456
    %v2481 = vunpack.c.l.b16 %v2457
    %v2482 = vunpack.c.l.b16 %v2458
    %v2483 = vunpack.c.l.b16 %v2459
    %v2484 = vunpack.c.l.b16 %v2460
    %v2485 = vunpack.c.l.b16 %v2461
    %v2486 = vpack.c.b16 %v2481, %v2480
    %v2487 = vpack.c.b16 %v2483, %v2482
    %v2488 = vpack.c.b16 %v2485, %v2484
    %v2493 = vsel %vm152, %v2467, 0
    %v2496 = vsel %vm152, %v2469, 0
    %v2499 = vsel %vm152, %v2471, 0
    %v2502 = vsel %vm152, %v2473, 0
    %2504 = vmatprep.subr.bf16.mxu0 0
    %2505 = vmatpush1.bf16.msra.mxu0 0
    %2506 = vmatprep.subr.bf16.mxu0 0
    %2507 = vmatpush1.bf16.msra.mxu0 0
    %2508 = vmatprep.subr.bf16.mxu0 0
    %2509 = vmatpush1.bf16.msra.mxu0 0
    %2510 = vmatprep.subr.bf16.mxu0 0
    %2511 = vmatpush1.bf16.msra.mxu0 0
    %2512 = vmatprep.subr.bf16.mxu0 0
    %2513 = vmatpush1.bf16.msra.mxu0 0
    %2514 = vmatprep.subr.bf16.mxu0 0
    %2515 = vmatpush1.bf16.msra.mxu0 %v2488
    %2516 = vmatprep.subr.bf16.mxu0 0
    %2517 = vmatpush1.bf16.msra.mxu0 %v2487
    %2518 = vmatprep.subr.bf16.mxu0 0
    %2519 = vmatpush1.bf16.msra.mxu0 %v2486
    %2520 = vmatprep.subr.bf16.mxu0 0
    %2521 = vmatpush2.bf16.msra.mxu0 0
    %2522 = vmatprep.subr.bf16.mxu0 0
    %2523 = vmatpush2.bf16.msra.mxu0 0
    %2524 = vmatprep.subr.bf16.mxu0 0
    %2525 = vmatpush2.bf16.msra.mxu0 0
    %2526 = vmatprep.subr.bf16.mxu0 0
    %2527 = vmatpush2.bf16.msra.mxu0 0
    %2528 = vmatprep.subr.bf16.mxu0 0
    %2529 = vmatpush2.bf16.msra.mxu0 0
    %2530 = vmatprep.subr.bf16.mxu0 0
    %2531 = vmatpush2.bf16.msra.mxu0 0
    %2532 = vmatprep.subr.bf16.mxu0 0
    %2533 = vmatpush2.bf16.msra.mxu0 0
    %2534 = vmatprep.subr.bf16.mxu0 0
    %2535 = vmatpush2.bf16.msra.mxu0 0
    %2536 = vmatprep.mubr.bf16.mxu0 0
    %2537 = vmatmul.mubr.bf16.gmra.mxu0 %v2493
    %v2538 = vpop.f32.mrf.mxu0
    %v2539 = vadd.f32 0.0, %v2538
    %v2540 = vpop.f32.mrf.mxu0
    %v2541 = vpop.f32.mrf.mxu0
    %v2542 = vadd.f32 0.0, %v2541
    %v2543 = vpop.f32.mrf.mxu0
    %2544 = vmatprep.mubr.bf16.mxu0 0
    %2545 = vmatmul.mubr.bf16.gmra.mxu0 %v2496
    %v2546 = vpop.f32.mrf.mxu0
    %v2547 = vadd.f32 0.0, %v2546
    %v2548 = vpop.f32.mrf.mxu0
    %v2549 = vpop.f32.mrf.mxu0
    %v2550 = vadd.f32 0.0, %v2549
    %v2551 = vpop.f32.mrf.mxu0
    %2552 = vmatprep.mubr.bf16.mxu0 0
    %2553 = vmatmul.mubr.bf16.gmra.mxu0 %v2499
    %v2554 = vpop.f32.mrf.mxu0
    %v2555 = vadd.f32 0.0, %v2554
    %v2556 = vpop.f32.mrf.mxu0
    %v2557 = vpop.f32.mrf.mxu0
    %v2558 = vadd.f32 0.0, %v2557
    %v2559 = vpop.f32.mrf.mxu0
    %2560 = vmatprep.mubr.bf16.mxu0 0
    %2561 = vmatmul.mubr.bf16.gmra.mxu0 %v2502
    %v2562 = vpop.f32.mrf.mxu0
    %v2563 = vadd.f32 0.0, %v2562
    %v2564 = vpop.f32.mrf.mxu0
    %v2565 = vpop.f32.mrf.mxu0
    %v2566 = vadd.f32 0.0, %v2565
    %v2567 = vpop.f32.mrf.mxu0
    %2568 = vdwg.mxu0
    %v2569 = vld [vmem:[%s3 + $0xa] sm:$0x1]
    %v2570 = vpack.c.bf16 %v2542, %v2539
    %v2571 = vpack.c.bf16 %v2550, %v2547
    %v2572 = vpack.c.bf16 %v2558, %v2555
    %v2573 = vpack.c.bf16 %v2566, %v2563
    %v2574 = vlaneseq
    %v2575 = vshrl.u32 %v2574, 7
    %v2576 = vsub.s32 0, %v2575
    %v2577 = vrot.slane %v2569, %v2576
    %2578 = vmatprep.subr.bf16.mxu0 0
    %2579 = vmatpush1.bf16.msra.mxu0 0
    %2580 = vmatprep.subr.bf16.mxu0 0
    %2581 = vmatpush1.bf16.msra.mxu0 0
    %2582 = vmatprep.subr.bf16.mxu0 0
    %2583 = vmatpush1.bf16.msra.mxu0 0
    %2584 = vmatprep.subr.bf16.mxu0 0
    %2585 = vmatpush1.bf16.msra.mxu0 0
    %2586 = vmatprep.subr.bf16.mxu0 0
    %2587 = vmatpush1.bf16.msra.mxu0 %v2573
    %2588 = vmatprep.subr.bf16.mxu0 0
    %2589 = vmatpush1.bf16.msra.mxu0 %v2572
    %2590 = vmatprep.subr.bf16.mxu0 0
    %2591 = vmatpush1.bf16.msra.mxu0 %v2571
    %2592 = vmatprep.subr.bf16.mxu0 0
    %2593 = vmatpush1.bf16.msra.mxu0 %v2570
    %2594 = vmatprep.subr.bf16.mxu0 0
    %2595 = vmatpush2.bf16.msra.mxu0 0
    %2596 = vmatprep.subr.bf16.mxu0 0
    %2597 = vmatpush2.bf16.msra.mxu0 0
    %2598 = vmatprep.subr.bf16.mxu0 0
    %2599 = vmatpush2.bf16.msra.mxu0 0
    %2600 = vmatprep.subr.bf16.mxu0 0
    %2601 = vmatpush2.bf16.msra.mxu0 0
    %2602 = vmatprep.subr.bf16.mxu0 0
    %2603 = vmatpush2.bf16.msra.mxu0 0
    %2604 = vmatprep.subr.bf16.mxu0 0
    %2605 = vmatpush2.bf16.msra.mxu0 0
    %2606 = vmatprep.subr.bf16.mxu0 0
    %2607 = vmatpush2.bf16.msra.mxu0 0
    %2608 = vmatprep.subr.bf16.mxu0 0
    %2609 = vmatpush2.bf16.msra.mxu0 0
    %2610 = vmatprep.mubr.bf16.mxu0 0
    %2611 = vmatmul.mubr.bf16.gmra.mxu0 %v509
    %v2612 = vpop.f32.mrf.mxu0
    %v2613 = vadd.f32 %v2577, %v2612
    %v2614 = vpop.f32.mrf.mxu0
    %v2615 = vpop.f32.mrf.mxu0
    %v2616 = vadd.f32 %v2577, %v2615
    %v2617 = vpop.f32.mrf.mxu0
    %2618 = vmatprep.mubr.bf16.mxu0 0
    %2619 = vmatmul.mubr.bf16.gmra.mxu0 %v512
    %v2620 = vpop.f32.mrf.mxu0
    %v2621 = vadd.f32 %v2577, %v2620
    %v2622 = vpop.f32.mrf.mxu0
    %v2623 = vpop.f32.mrf.mxu0
    %v2624 = vadd.f32 %v2577, %v2623
    %v2625 = vpop.f32.mrf.mxu0
    %2626 = vmatprep.mubr.bf16.mxu0 0
    %2627 = vmatmul.mubr.bf16.gmra.mxu0 %v515
    %v2628 = vpop.f32.mrf.mxu0
    %v2629 = vadd.f32 %v2577, %v2628
    %v2630 = vpop.f32.mrf.mxu0
    %v2631 = vpop.f32.mrf.mxu0
    %v2632 = vadd.f32 %v2577, %v2631
    %v2633 = vpop.f32.mrf.mxu0
    %2634 = vmatprep.mubr.bf16.mxu0 0
    %2635 = vmatmul.mubr.bf16.gmra.mxu0 %v518
    %v2636 = vpop.f32.mrf.mxu0
    %v2637 = vadd.f32 %v2577, %v2636
    %v2638 = vpop.f32.mrf.mxu0
    %v2639 = vpop.f32.mrf.mxu0
    %v2640 = vadd.f32 %v2577, %v2639
    %v2641 = vpop.f32.mrf.mxu0
    %2642 = vdwg.mxu0
    %v2643 = vmax.f32 %v2613, 0.0
    %v2644 = vmax.f32 %v2616, 0.0
    %v2645 = vmax.f32 %v2621, 0.0
    %v2646 = vmax.f32 %v2624, 0.0
    %v2647 = vmax.f32 %v2629, 0.0
    %v2648 = vmax.f32 %v2632, 0.0
    %v2649 = vmax.f32 %v2637, 0.0
    %v2650 = vmax.f32 %v2640, 0.0
    %v2651 = vadd.f32 %v2539, %v2577
    %v2652 = vadd.f32 %v2542, %v2577
    %v2653 = vadd.f32 %v2547, %v2577
    %v2654 = vadd.f32 %v2550, %v2577
    %v2655 = vadd.f32 %v2555, %v2577
    %v2656 = vadd.f32 %v2558, %v2577
    %v2657 = vadd.f32 %v2563, %v2577
    %v2658 = vadd.f32 %v2566, %v2577
    %v2659 = vmax.f32 %v2651, 0.0
    %v2660 = vmax.f32 %v2652, 0.0
    %v2661 = vmax.f32 %v2653, 0.0
    %v2662 = vmax.f32 %v2654, 0.0
    %v2663 = vmax.f32 %v2655, 0.0
    %v2664 = vmax.f32 %v2656, 0.0
    %v2665 = vmax.f32 %v2657, 0.0
    %v2666 = vmax.f32 %v2658, 0.0
    %2675 = vrot.lane.b32.xlu0 %v2659, 112
    %v2676 = vpop.permute.xlu0 %2675
    %2677 = vrot.lane.b32.xlu0 %v2660, 112
    %v2678 = vpop.permute.xlu0 %2677
    %2679 = vrot.lane.b32.xlu0 %v2661, 112
    %v2680 = vpop.permute.xlu0 %2679
    %2681 = vrot.lane.b32.xlu0 %v2662, 112
    %v2682 = vpop.permute.xlu0 %2681
    %2683 = vrot.lane.b32.xlu0 %v2663, 112
    %v2684 = vpop.permute.xlu0 %2683
    %2685 = vrot.lane.b32.xlu0 %v2664, 112
    %v2686 = vpop.permute.xlu0 %2685
    %2687 = vrot.lane.b32.xlu0 %v2665, 112
    %v2688 = vpop.permute.xlu0 %2687
    %2689 = vrot.lane.b32.xlu0 %v2666, 112
    %v2690 = vpop.permute.xlu0 %2689
    %v2699 = vadd.f32 %v2643, %v2676
    %v2700 = vadd.f32 %v2644, %v2678
    %v2701 = vadd.f32 %v2645, %v2680
    %v2702 = vadd.f32 %v2646, %v2682
    %v2703 = vadd.f32 %v2647, %v2684
    %v2704 = vadd.f32 %v2648, %v2686
    %v2705 = vadd.f32 %v2649, %v2688
    %v2706 = vadd.f32 %v2650, %v2690
    %2715 = vrot.lane.b32.xlu0 %v2699, 80
    %v2716 = vpop.permute.xlu0 %2715
    %2717 = vrot.lane.b32.xlu0 %v2700, 80
    %v2718 = vpop.permute.xlu0 %2717
    %2719 = vrot.lane.b32.xlu0 %v2701, 80
    %v2720 = vpop.permute.xlu0 %2719
    %2721 = vrot.lane.b32.xlu0 %v2702, 80
    %v2722 = vpop.permute.xlu0 %2721
    %2723 = vrot.lane.b32.xlu0 %v2703, 80
    %v2724 = vpop.permute.xlu0 %2723
    %2725 = vrot.lane.b32.xlu0 %v2704, 80
    %v2726 = vpop.permute.xlu0 %2725
    %2727 = vrot.lane.b32.xlu0 %v2705, 80
    %v2728 = vpop.permute.xlu0 %2727
    %2729 = vrot.lane.b32.xlu0 %v2706, 80
    %v2730 = vpop.permute.xlu0 %2729
    %2739 = vst.msk [vmem:[#allocation3] sm:$0xff] %vm1436, %v2716
    %2740 = vst.msk [vmem:[#allocation3 + $0x8] sm:$0xff] %vm1436, %v2718
    %2741 = vst.msk [vmem:[#allocation3 + $0x10] sm:$0xff] %vm1436, %v2720
    %2742 = vst.msk [vmem:[#allocation3 + $0x18] sm:$0xff] %vm1436, %v2722
    %2743 = vst.msk [vmem:[#allocation3 + $0x20] sm:$0xff] %vm1436, %v2724
    %2744 = vst.msk [vmem:[#allocation3 + $0x28] sm:$0xff] %vm1436, %v2726
    %2745 = vst.msk [vmem:[#allocation3 + $0x30] sm:$0xff] %vm1436, %v2728
    %2746 = vst.msk [vmem:[#allocation3 + $0x38] sm:$0xff] %vm1436, %v2730
    %v2747 = vld [vmem:[#allocation2] sm:$0xff]
    %v2748 = vld [vmem:[#allocation2 + $0x8] sm:$0xff]
    %v2749 = vld [vmem:[#allocation2 + $0x10] sm:$0xff]
    %v2750 = vld [vmem:[#allocation2 + $0x18] sm:$0xff]
    %v2751 = vld [vmem:[#allocation2 + $0x20] sm:$0xff]
    %v2752 = vld [vmem:[#allocation2 + $0x28] sm:$0xff]
    %v2753 = vld [vmem:[#allocation2 + $0x30] sm:$0xff]
    %v2754 = vld [vmem:[#allocation2 + $0x38] sm:$0xff]
    %2763 = vrot.lane.b32.xlu0 %v2747, 64
    %v2764 = vpop.permute.xlu0 %2763
    %2765 = vrot.lane.b32.xlu0 %v2748, 64
    %v2766 = vpop.permute.xlu0 %2765
    %2767 = vrot.lane.b32.xlu0 %v2749, 64
    %v2768 = vpop.permute.xlu0 %2767
    %2769 = vrot.lane.b32.xlu0 %v2750, 64
    %v2770 = vpop.permute.xlu0 %2769
    %2771 = vrot.lane.b32.xlu0 %v2751, 64
    %v2772 = vpop.permute.xlu0 %2771
    %2773 = vrot.lane.b32.xlu0 %v2752, 64
    %v2774 = vpop.permute.xlu0 %2773
    %2775 = vrot.lane.b32.xlu0 %v2753, 64
    %v2776 = vpop.permute.xlu0 %2775
    %2777 = vrot.lane.b32.xlu0 %v2754, 64
    %v2778 = vpop.permute.xlu0 %2777
    %2787 = vst.msk [vmem:[#allocation2] sm:$0xff] %vm507, %v2764
    %2788 = vst.msk [vmem:[#allocation2 + $0x8] sm:$0xff] %vm507, %v2766
    %2789 = vst.msk [vmem:[#allocation2 + $0x10] sm:$0xff] %vm507, %v2768
    %2790 = vst.msk [vmem:[#allocation2 + $0x18] sm:$0xff] %vm507, %v2770
    %2791 = vst.msk [vmem:[#allocation2 + $0x20] sm:$0xff] %vm507, %v2772
    %2792 = vst.msk [vmem:[#allocation2 + $0x28] sm:$0xff] %vm507, %v2774
    %2793 = vst.msk [vmem:[#allocation2 + $0x30] sm:$0xff] %vm507, %v2776
    %2794 = vst.msk [vmem:[#allocation2 + $0x38] sm:$0xff] %vm507, %v2778
    %v2795 = vld [vmem:[#allocation3] sm:$0xff]
    %v2796 = vld [vmem:[#allocation3 + $0x8] sm:$0xff]
    %v2797 = vld [vmem:[#allocation3 + $0x10] sm:$0xff]
    %v2798 = vld [vmem:[#allocation3 + $0x18] sm:$0xff]
    %v2799 = vld [vmem:[#allocation3 + $0x20] sm:$0xff]
    %v2800 = vld [vmem:[#allocation3 + $0x28] sm:$0xff]
    %v2801 = vld [vmem:[#allocation3 + $0x30] sm:$0xff]
    %v2802 = vld [vmem:[#allocation3 + $0x38] sm:$0xff]
    %2811 = vrot.lane.b32.xlu0 %v2795, 32
    %v2812 = vpop.permute.xlu0 %2811
    %2813 = vrot.lane.b32.xlu0 %v2796, 32
    %v2814 = vpop.permute.xlu0 %2813
    %2815 = vrot.lane.b32.xlu0 %v2797, 32
    %v2816 = vpop.permute.xlu0 %2815
    %2817 = vrot.lane.b32.xlu0 %v2798, 32
    %v2818 = vpop.permute.xlu0 %2817
    %2819 = vrot.lane.b32.xlu0 %v2799, 32
    %v2820 = vpop.permute.xlu0 %2819
    %2821 = vrot.lane.b32.xlu0 %v2800, 32
    %v2822 = vpop.permute.xlu0 %2821
    %2823 = vrot.lane.b32.xlu0 %v2801, 32
    %v2824 = vpop.permute.xlu0 %2823
    %2825 = vrot.lane.b32.xlu0 %v2802, 32
    %v2826 = vpop.permute.xlu0 %2825
    %2835 = vst.msk [vmem:[#allocation2] sm:$0xff] %vm1533, %v2812
    %2836 = vst.msk [vmem:[#allocation2 + $0x8] sm:$0xff] %vm1533, %v2814
    %2837 = vst.msk [vmem:[#allocation2 + $0x10] sm:$0xff] %vm1533, %v2816
    %2838 = vst.msk [vmem:[#allocation2 + $0x18] sm:$0xff] %vm1533, %v2818
    %2839 = vst.msk [vmem:[#allocation2 + $0x20] sm:$0xff] %vm1533, %v2820
    %2840 = vst.msk [vmem:[#allocation2 + $0x28] sm:$0xff] %vm1533, %v2822
    %2841 = vst.msk [vmem:[#allocation2 + $0x30] sm:$0xff] %vm1533, %v2824
    %2842 = vst.msk [vmem:[#allocation2 + $0x38] sm:$0xff] %vm1533, %v2826
    %2843 = vst [vmem:[#allocation3] sm:$0xff] 0.0
    %2844 = vst [vmem:[#allocation3 + $0x8] sm:$0xff] 0.0
    %2845 = vst [vmem:[#allocation3 + $0x10] sm:$0xff] 0.0
    %2846 = vst [vmem:[#allocation3 + $0x18] sm:$0xff] 0.0
    %2847 = vst [vmem:[#allocation3 + $0x20] sm:$0xff] 0.0
    %2848 = vst [vmem:[#allocation3 + $0x28] sm:$0xff] 0.0
    %2849 = vst [vmem:[#allocation3 + $0x30] sm:$0xff] 0.0
    %2850 = vst [vmem:[#allocation3 + $0x38] sm:$0xff] 0.0
    %v2851 = vld [vmem:[#allocation2] sm:$0xff]
    %v2852 = vld [vmem:[#allocation2 + $0x8] sm:$0xff]
    %v2853 = vld [vmem:[#allocation2 + $0x10] sm:$0xff]
    %v2854 = vld [vmem:[#allocation2 + $0x18] sm:$0xff]
    %v2855 = vld [vmem:[#allocation2 + $0x20] sm:$0xff]
    %v2856 = vld [vmem:[#allocation2 + $0x28] sm:$0xff]
    %v2857 = vld [vmem:[#allocation2 + $0x30] sm:$0xff]
    %v2858 = vld [vmem:[#allocation2 + $0x38] sm:$0xff]
    %v2859 = vpack.c.bf16 %v2852, %v2851
    %v2860 = vpack.c.bf16 %v2854, %v2853
    %v2861 = vpack.c.bf16 %v2856, %v2855
    %v2862 = vpack.c.bf16 %v2858, %v2857
    %v2863 = vld [vmem:[#allocation4 + $0xf8] sm:$0xf]
    %v2864 = vld [vmem:[#allocation4 + $0xfc] sm:$0xf]
    %v2865 = vld [vmem:[#allocation4 + $0x100] sm:$0xf]
    %v2866 = vld [vmem:[#allocation4 + $0x104] sm:$0xf]
    %v2867 = vld [vmem:[#allocation4 + $0x108] sm:$0xf]
    %v2868 = vld [vmem:[#allocation4 + $0x10c] sm:$0xf]
    %v2869 = vld [vmem:[#allocation4 + $0x110] sm:$0xf]
    %v2870 = vld [vmem:[#allocation4 + $0x114] sm:$0xf]
    %v2871 = vld [vmem:[#allocation4 + $0x118] sm:$0xf]
    %v2872 = vld [vmem:[#allocation4 + $0x11c] sm:$0xf]
    %v2873 = vld [vmem:[#allocation4 + $0x120] sm:$0xf]
    %v2874 = vld [vmem:[#allocation4 + $0x124] sm:$0xf]
    %v2875 = vld [vmem:[#allocation4 + $0x128] sm:$0xf]
    %v2876 = vld [vmem:[#allocation4 + $0x12c] sm:$0xf]
    %v2877 = vld [vmem:[#allocation4 + $0x130] sm:$0xf]
    %v2878 = vld [vmem:[#allocation4 + $0x134] sm:$0xf]
    %v2879 = vld [vmem:[%s3 + $0xb] sm:$0x1]
    %v2880 = vlaneseq
    %v2881 = vshrl.u32 %v2880, 7
    %v2882 = vsub.s32 0, %v2881
    %v2883 = vrot.slane %v2879, %v2882
    %v2900 = vunpack.c.l.b16 %v2863
    %v2901 = vunpack.c.l.b16 %v2864
    %v2902 = vunpack.c.l.b16 %v2865
    %v2903 = vunpack.c.l.b16 %v2866
    %v2904 = vunpack.c.l.b16 %v2867
    %v2905 = vunpack.c.l.b16 %v2868
    %v2906 = vunpack.c.l.b16 %v2869
    %v2907 = vunpack.c.l.b16 %v2870
    %v2908 = vunpack.c.l.b16 %v2871
    %v2909 = vunpack.c.l.b16 %v2872
    %v2910 = vunpack.c.l.b16 %v2873
    %v2911 = vunpack.c.l.b16 %v2874
    %v2912 = vunpack.c.l.b16 %v2875
    %v2913 = vunpack.c.l.b16 %v2876
    %v2914 = vunpack.c.l.b16 %v2877
    %v2915 = vunpack.c.l.b16 %v2878
    %v2916 = vpack.c.b16 %v2901, %v2900
    %v2917 = vpack.c.b16 %v2903, %v2902
    %v2918 = vpack.c.b16 %v2905, %v2904
    %v2919 = vpack.c.b16 %v2907, %v2906
    %v2920 = vpack.c.b16 %v2909, %v2908
    %v2921 = vpack.c.b16 %v2911, %v2910
    %v2922 = vpack.c.b16 %v2913, %v2912
    %v2923 = vpack.c.b16 %v2915, %v2914
    %2932 = vmatprep.subr.bf16.mxu0 0
    %2933 = vmatpush1.bf16.msra.mxu0 %v2923
    %2934 = vmatprep.subr.bf16.mxu0 0
    %2935 = vmatpush1.bf16.msra.mxu0 %v2922
    %2936 = vmatprep.subr.bf16.mxu0 0
    %2937 = vmatpush1.bf16.msra.mxu0 %v2921
    %2938 = vmatprep.subr.bf16.mxu0 0
    %2939 = vmatpush1.bf16.msra.mxu0 %v2920
    %2940 = vmatprep.subr.bf16.mxu0 0
    %2941 = vmatpush1.bf16.msra.mxu0 %v2919
    %2942 = vmatprep.subr.bf16.mxu0 0
    %2943 = vmatpush1.bf16.msra.mxu0 %v2918
    %2944 = vmatprep.subr.bf16.mxu0 0
    %2945 = vmatpush1.bf16.msra.mxu0 %v2917
    %2946 = vmatprep.subr.bf16.mxu0 0
    %2947 = vmatpush1.bf16.msra.mxu0 %v2916
    %2948 = vmatprep.subr.bf16.mxu0 0
    %2949 = vmatpush2.bf16.msra.mxu0 0
    %2950 = vmatprep.subr.bf16.mxu0 0
    %2951 = vmatpush2.bf16.msra.mxu0 0
    %2952 = vmatprep.subr.bf16.mxu0 0
    %2953 = vmatpush2.bf16.msra.mxu0 0
    %2954 = vmatprep.subr.bf16.mxu0 0
    %2955 = vmatpush2.bf16.msra.mxu0 0
    %2956 = vmatprep.subr.bf16.mxu0 0
    %2957 = vmatpush2.bf16.msra.mxu0 0
    %2958 = vmatprep.subr.bf16.mxu0 0
    %2959 = vmatpush2.bf16.msra.mxu0 0
    %2960 = vmatprep.subr.bf16.mxu0 0
    %2961 = vmatpush2.bf16.msra.mxu0 0
    %2962 = vmatprep.subr.bf16.mxu0 0
    %2963 = vmatpush2.bf16.msra.mxu0 0
    %2964 = vmatprep.mubr.bf16.mxu0 0
    %2965 = vmatmul.mubr.bf16.gmra.mxu0 %v2859
    %v2966 = vpop.f32.mrf.mxu0
    %v2967 = vadd.f32 %v2883, %v2966
    %v2968 = vpop.f32.mrf.mxu0
    %v2969 = vpop.f32.mrf.mxu0
    %v2970 = vadd.f32 %v2883, %v2969
    %v2971 = vpop.f32.mrf.mxu0
    %2972 = vmatprep.mubr.bf16.mxu0 0
    %2973 = vmatmul.mubr.bf16.gmra.mxu0 %v2860
    %v2974 = vpop.f32.mrf.mxu0
    %v2975 = vadd.f32 %v2883, %v2974
    %v2976 = vpop.f32.mrf.mxu0
    %v2977 = vpop.f32.mrf.mxu0
    %v2978 = vadd.f32 %v2883, %v2977
    %v2979 = vpop.f32.mrf.mxu0
    %2980 = vmatprep.mubr.bf16.mxu0 0
    %2981 = vmatmul.mubr.bf16.gmra.mxu0 %v2861
    %v2982 = vpop.f32.mrf.mxu0
    %v2983 = vadd.f32 %v2883, %v2982
    %v2984 = vpop.f32.mrf.mxu0
    %v2985 = vpop.f32.mrf.mxu0
    %v2986 = vadd.f32 %v2883, %v2985
    %v2987 = vpop.f32.mrf.mxu0
    %2988 = vmatprep.mubr.bf16.mxu0 0
    %2989 = vmatmul.mubr.bf16.gmra.mxu0 %v2862
    %v2990 = vpop.f32.mrf.mxu0
    %v2991 = vadd.f32 %v2883, %v2990
    %v2992 = vpop.f32.mrf.mxu0
    %v2993 = vpop.f32.mrf.mxu0
    %v2994 = vadd.f32 %v2883, %v2993
    %v2995 = vpop.f32.mrf.mxu0
    %2996 = vdwg.mxu0
    %v2997 = vmax.f32 %v2967, 0.0
    %v2998 = vmax.f32 %v2970, 0.0
    %v2999 = vmax.f32 %v2975, 0.0
    %v3000 = vmax.f32 %v2978, 0.0
    %v3001 = vmax.f32 %v2983, 0.0
    %v3002 = vmax.f32 %v2986, 0.0
    %v3003 = vmax.f32 %v2991, 0.0
    %v3004 = vmax.f32 %v2994, 0.0
    %3005 = vst.msk [vmem:[#allocation3] sm:$0xff] %vm364, %v2997
    %3006 = vst.msk [vmem:[#allocation3 + $0x8] sm:$0xff] %vm364, %v2998
    %3007 = vst.msk [vmem:[#allocation3 + $0x10] sm:$0xff] %vm364, %v2999
    %3008 = vst.msk [vmem:[#allocation3 + $0x18] sm:$0xff] %vm364, %v3000
    %3009 = vst.msk [vmem:[#allocation3 + $0x20] sm:$0xff] %vm364, %v3001
    %3010 = vst.msk [vmem:[#allocation3 + $0x28] sm:$0xff] %vm364, %v3002
    %3011 = vst.msk [vmem:[#allocation3 + $0x30] sm:$0xff] %vm364, %v3003
    %3012 = vst.msk [vmem:[#allocation3 + $0x38] sm:$0xff] %vm364, %v3004
    %v3013 = vld [vmem:[#allocation3] sm:$0xff]
    %v3014 = vld [vmem:[#allocation3 + $0x8] sm:$0xff]
    %v3015 = vld [vmem:[#allocation3 + $0x10] sm:$0xff]
    %v3016 = vld [vmem:[#allocation3 + $0x18] sm:$0xff]
    %v3017 = vld [vmem:[#allocation3 + $0x20] sm:$0xff]
    %v3018 = vld [vmem:[#allocation3 + $0x28] sm:$0xff]
    %v3019 = vld [vmem:[#allocation3 + $0x30] sm:$0xff]
    %v3020 = vld [vmem:[#allocation3 + $0x38] sm:$0xff]
    %v3021 = vpack.c.bf16 %v3014, %v3013
    %v3022 = vpack.c.bf16 %v3016, %v3015
    %v3023 = vpack.c.bf16 %v3018, %v3017
    %v3024 = vpack.c.bf16 %v3020, %v3019
    %v3025 = vld [vmem:[#allocation4 + $0x138] sm:$0xf]
    %v3026 = vld [vmem:[#allocation4 + $0x13c] sm:$0xf]
    %v3027 = vld [vmem:[#allocation4 + $0x140] sm:$0xf]
    %v3028 = vld [vmem:[#allocation4 + $0x144] sm:$0xf]
    %v3033 = vunpack.c.l.b16 %v3025
    %v3034 = vunpack.c.l.b16 %v3026
    %v3035 = vunpack.c.l.b16 %v3027
    %v3036 = vunpack.c.l.b16 %v3028
    %v3037 = vpack.c.b16 %v3034, %v3033
    %v3038 = vpack.c.b16 %v3036, %v3035
    %v3042 = vsel %vm364, %v3021, 0
    %v3045 = vsel %vm364, %v3022, 0
    %v3048 = vsel %vm364, %v3023, 0
    %v3051 = vsel %vm364, %v3024, 0
    %3053 = vmatprep.subr.bf16.mxu0 0
    %3054 = vmatpush1.bf16.msra.mxu0 0
    %3055 = vmatprep.subr.bf16.mxu0 0
    %3056 = vmatpush1.bf16.msra.mxu0 0
    %3057 = vmatprep.subr.bf16.mxu0 0
    %3058 = vmatpush1.bf16.msra.mxu0 0
    %3059 = vmatprep.subr.bf16.mxu0 0
    %3060 = vmatpush1.bf16.msra.mxu0 0
    %3061 = vmatprep.subr.bf16.mxu0 0
    %3062 = vmatpush1.bf16.msra.mxu0 0
    %3063 = vmatprep.subr.bf16.mxu0 0
    %3064 = vmatpush1.bf16.msra.mxu0 0
    %3065 = vmatprep.subr.bf16.mxu0 0
    %3066 = vmatpush1.bf16.msra.mxu0 %v3038
    %3067 = vmatprep.subr.bf16.mxu0 0
    %3068 = vmatpush1.bf16.msra.mxu0 %v3037
    %3069 = vmatprep.subr.bf16.mxu0 0
    %3070 = vmatpush2.bf16.msra.mxu0 0
    %3071 = vmatprep.subr.bf16.mxu0 0
    %3072 = vmatpush2.bf16.msra.mxu0 0
    %3073 = vmatprep.subr.bf16.mxu0 0
    %3074 = vmatpush2.bf16.msra.mxu0 0
    %3075 = vmatprep.subr.bf16.mxu0 0
    %3076 = vmatpush2.bf16.msra.mxu0 0
    %3077 = vmatprep.subr.bf16.mxu0 0
    %3078 = vmatpush2.bf16.msra.mxu0 0
    %3079 = vmatprep.subr.bf16.mxu0 0
    %3080 = vmatpush2.bf16.msra.mxu0 0
    %3081 = vmatprep.subr.bf16.mxu0 0
    %3082 = vmatpush2.bf16.msra.mxu0 0
    %3083 = vmatprep.subr.bf16.mxu0 0
    %3084 = vmatpush2.bf16.msra.mxu0 0
    %3085 = vmatprep.mubr.bf16.mxu0 0
    %3086 = vmatmul.mubr.bf16.gmra.mxu0 %v3042
    %v3087 = vpop.f32.mrf.mxu0
    %v3088 = vadd.f32 0.0, %v3087
    %v3089 = vpop.f32.mrf.mxu0
    %v3090 = vpop.f32.mrf.mxu0
    %v3091 = vadd.f32 0.0, %v3090
    %v3092 = vpop.f32.mrf.mxu0
    %3093 = vmatprep.mubr.bf16.mxu0 0
    %3094 = vmatmul.mubr.bf16.gmra.mxu0 %v3045
    %v3095 = vpop.f32.mrf.mxu0
    %v3096 = vadd.f32 0.0, %v3095
    %v3097 = vpop.f32.mrf.mxu0
    %v3098 = vpop.f32.mrf.mxu0
    %v3099 = vadd.f32 0.0, %v3098
    %v3100 = vpop.f32.mrf.mxu0
    %3101 = vmatprep.mubr.bf16.mxu0 0
    %3102 = vmatmul.mubr.bf16.gmra.mxu0 %v3048
    %v3103 = vpop.f32.mrf.mxu0
    %v3104 = vadd.f32 0.0, %v3103
    %v3105 = vpop.f32.mrf.mxu0
    %v3106 = vpop.f32.mrf.mxu0
    %v3107 = vadd.f32 0.0, %v3106
    %v3108 = vpop.f32.mrf.mxu0
    %3109 = vmatprep.mubr.bf16.mxu0 0
    %3110 = vmatmul.mubr.bf16.gmra.mxu0 %v3051
    %v3111 = vpop.f32.mrf.mxu0
    %v3112 = vadd.f32 0.0, %v3111
    %v3113 = vpop.f32.mrf.mxu0
    %v3114 = vpop.f32.mrf.mxu0
    %v3115 = vadd.f32 0.0, %v3114
    %v3116 = vpop.f32.mrf.mxu0
    %3117 = vdwg.mxu0
    %v3118 = vld [vmem:[%s3 + $0xc] sm:$0x1]
    %v3119 = vpack.c.bf16 %v3091, %v3088
    %v3120 = vpack.c.bf16 %v3099, %v3096
    %v3121 = vpack.c.bf16 %v3107, %v3104
    %v3122 = vpack.c.bf16 %v3115, %v3112
    %v3123 = vlaneseq
    %v3124 = vshrl.u32 %v3123, 7
    %v3125 = vsub.s32 0, %v3124
    %v3126 = vrot.slane %v3118, %v3125
    %3127 = vmatprep.subr.bf16.mxu0 0
    %3128 = vmatpush1.bf16.msra.mxu0 0
    %3129 = vmatprep.subr.bf16.mxu0 0
    %3130 = vmatpush1.bf16.msra.mxu0 0
    %3131 = vmatprep.subr.bf16.mxu0 0
    %3132 = vmatpush1.bf16.msra.mxu0 0
    %3133 = vmatprep.subr.bf16.mxu0 0
    %3134 = vmatpush1.bf16.msra.mxu0 0
    %3135 = vmatprep.subr.bf16.mxu0 0
    %3136 = vmatpush1.bf16.msra.mxu0 %v3122
    %3137 = vmatprep.subr.bf16.mxu0 0
    %3138 = vmatpush1.bf16.msra.mxu0 %v3121
    %3139 = vmatprep.subr.bf16.mxu0 0
    %3140 = vmatpush1.bf16.msra.mxu0 %v3120
    %3141 = vmatprep.subr.bf16.mxu0 0
    %3142 = vmatpush1.bf16.msra.mxu0 %v3119
    %3143 = vmatprep.subr.bf16.mxu0 0
    %3144 = vmatpush2.bf16.msra.mxu0 0
    %3145 = vmatprep.subr.bf16.mxu0 0
    %3146 = vmatpush2.bf16.msra.mxu0 0
    %3147 = vmatprep.subr.bf16.mxu0 0
    %3148 = vmatpush2.bf16.msra.mxu0 0
    %3149 = vmatprep.subr.bf16.mxu0 0
    %3150 = vmatpush2.bf16.msra.mxu0 0
    %3151 = vmatprep.subr.bf16.mxu0 0
    %3152 = vmatpush2.bf16.msra.mxu0 0
    %3153 = vmatprep.subr.bf16.mxu0 0
    %3154 = vmatpush2.bf16.msra.mxu0 0
    %3155 = vmatprep.subr.bf16.mxu0 0
    %3156 = vmatpush2.bf16.msra.mxu0 0
    %3157 = vmatprep.subr.bf16.mxu0 0
    %3158 = vmatpush2.bf16.msra.mxu0 0
    %3159 = vmatprep.mubr.bf16.mxu0 0
    %3160 = vmatmul.mubr.bf16.gmra.mxu0 %v509
    %v3161 = vpop.f32.mrf.mxu0
    %v3162 = vadd.f32 %v3126, %v3161
    %v3163 = vpop.f32.mrf.mxu0
    %v3164 = vpop.f32.mrf.mxu0
    %v3165 = vadd.f32 %v3126, %v3164
    %v3166 = vpop.f32.mrf.mxu0
    %3167 = vmatprep.mubr.bf16.mxu0 0
    %3168 = vmatmul.mubr.bf16.gmra.mxu0 %v512
    %v3169 = vpop.f32.mrf.mxu0
    %v3170 = vadd.f32 %v3126, %v3169
    %v3171 = vpop.f32.mrf.mxu0
    %v3172 = vpop.f32.mrf.mxu0
    %v3173 = vadd.f32 %v3126, %v3172
    %v3174 = vpop.f32.mrf.mxu0
    %3175 = vmatprep.mubr.bf16.mxu0 0
    %3176 = vmatmul.mubr.bf16.gmra.mxu0 %v515
    %v3177 = vpop.f32.mrf.mxu0
    %v3178 = vadd.f32 %v3126, %v3177
    %v3179 = vpop.f32.mrf.mxu0
    %v3180 = vpop.f32.mrf.mxu0
    %v3181 = vadd.f32 %v3126, %v3180
    %v3182 = vpop.f32.mrf.mxu0
    %3183 = vmatprep.mubr.bf16.mxu0 0
    %3184 = vmatmul.mubr.bf16.gmra.mxu0 %v518
    %v3185 = vpop.f32.mrf.mxu0
    %v3186 = vadd.f32 %v3126, %v3185
    %v3187 = vpop.f32.mrf.mxu0
    %v3188 = vpop.f32.mrf.mxu0
    %v3189 = vadd.f32 %v3126, %v3188
    %v3190 = vpop.f32.mrf.mxu0
    %3191 = vdwg.mxu0
    %v3192 = vmax.f32 %v3162, 0.0
    %v3193 = vmax.f32 %v3165, 0.0
    %v3194 = vmax.f32 %v3170, 0.0
    %v3195 = vmax.f32 %v3173, 0.0
    %v3196 = vmax.f32 %v3178, 0.0
    %v3197 = vmax.f32 %v3181, 0.0
    %v3198 = vmax.f32 %v3186, 0.0
    %v3199 = vmax.f32 %v3189, 0.0
    %v3200 = vadd.f32 %v3088, %v3126
    %v3201 = vadd.f32 %v3091, %v3126
    %v3202 = vadd.f32 %v3096, %v3126
    %v3203 = vadd.f32 %v3099, %v3126
    %v3204 = vadd.f32 %v3104, %v3126
    %v3205 = vadd.f32 %v3107, %v3126
    %v3206 = vadd.f32 %v3112, %v3126
    %v3207 = vadd.f32 %v3115, %v3126
    %v3208 = vmax.f32 %v3200, 0.0
    %v3209 = vmax.f32 %v3201, 0.0
    %v3210 = vmax.f32 %v3202, 0.0
    %v3211 = vmax.f32 %v3203, 0.0
    %v3212 = vmax.f32 %v3204, 0.0
    %v3213 = vmax.f32 %v3205, 0.0
    %v3214 = vmax.f32 %v3206, 0.0
    %v3215 = vmax.f32 %v3207, 0.0
    %3224 = vrot.lane.b32.xlu0 %v3208, 112
    %v3225 = vpop.permute.xlu0 %3224
    %3226 = vrot.lane.b32.xlu0 %v3209, 112
    %v3227 = vpop.permute.xlu0 %3226
    %3228 = vrot.lane.b32.xlu0 %v3210, 112
    %v3229 = vpop.permute.xlu0 %3228
    %3230 = vrot.lane.b32.xlu0 %v3211, 112
    %v3231 = vpop.permute.xlu0 %3230
    %3232 = vrot.lane.b32.xlu0 %v3212, 112
    %v3233 = vpop.permute.xlu0 %3232
    %3234 = vrot.lane.b32.xlu0 %v3213, 112
    %v3235 = vpop.permute.xlu0 %3234
    %3236 = vrot.lane.b32.xlu0 %v3214, 112
    %v3237 = vpop.permute.xlu0 %3236
    %3238 = vrot.lane.b32.xlu0 %v3215, 112
    %v3239 = vpop.permute.xlu0 %3238
    %v3248 = vadd.f32 %v3192, %v3225
    %v3249 = vadd.f32 %v3193, %v3227
    %v3250 = vadd.f32 %v3194, %v3229
    %v3251 = vadd.f32 %v3195, %v3231
    %v3252 = vadd.f32 %v3196, %v3233
    %v3253 = vadd.f32 %v3197, %v3235
    %v3254 = vadd.f32 %v3198, %v3237
    %v3255 = vadd.f32 %v3199, %v3239
    %3264 = vrot.lane.b32.xlu0 %v3248, 32
    %v3265 = vpop.permute.xlu0 %3264
    %3266 = vrot.lane.b32.xlu0 %v3249, 32
    %v3267 = vpop.permute.xlu0 %3266
    %3268 = vrot.lane.b32.xlu0 %v3250, 32
    %v3269 = vpop.permute.xlu0 %3268
    %3270 = vrot.lane.b32.xlu0 %v3251, 32
    %v3271 = vpop.permute.xlu0 %3270
    %3272 = vrot.lane.b32.xlu0 %v3252, 32
    %v3273 = vpop.permute.xlu0 %3272
    %3274 = vrot.lane.b32.xlu0 %v3253, 32
    %v3275 = vpop.permute.xlu0 %3274
    %3276 = vrot.lane.b32.xlu0 %v3254, 32
    %v3277 = vpop.permute.xlu0 %3276
    %3278 = vrot.lane.b32.xlu0 %v3255, 32
    %v3279 = vpop.permute.xlu0 %3278
    %3288 = vst.msk [vmem:[#allocation3] sm:$0xff] %vm681, %v3265
    %3289 = vst.msk [vmem:[#allocation3 + $0x8] sm:$0xff] %vm681, %v3267
    %3290 = vst.msk [vmem:[#allocation3 + $0x10] sm:$0xff] %vm681, %v3269
    %3291 = vst.msk [vmem:[#allocation3 + $0x18] sm:$0xff] %vm681, %v3271
    %3292 = vst.msk [vmem:[#allocation3 + $0x20] sm:$0xff] %vm681, %v3273
    %3293 = vst.msk [vmem:[#allocation3 + $0x28] sm:$0xff] %vm681, %v3275
    %3294 = vst.msk [vmem:[#allocation3 + $0x30] sm:$0xff] %vm681, %v3277
    %3295 = vst.msk [vmem:[#allocation3 + $0x38] sm:$0xff] %vm681, %v3279
    %v3296 = vld [vmem:[#allocation3] sm:$0xff]
    %v3297 = vld [vmem:[#allocation3 + $0x8] sm:$0xff]
    %v3298 = vld [vmem:[#allocation3 + $0x10] sm:$0xff]
    %v3299 = vld [vmem:[#allocation3 + $0x18] sm:$0xff]
    %v3300 = vld [vmem:[#allocation3 + $0x20] sm:$0xff]
    %v3301 = vld [vmem:[#allocation3 + $0x28] sm:$0xff]
    %v3302 = vld [vmem:[#allocation3 + $0x30] sm:$0xff]
    %v3303 = vld [vmem:[#allocation3 + $0x38] sm:$0xff]
    %v3304 = vpack.c.bf16 %v3297, %v3296
    %v3305 = vpack.c.bf16 %v3299, %v3298
    %v3306 = vpack.c.bf16 %v3301, %v3300
    %v3307 = vpack.c.bf16 %v3303, %v3302
    %v3308 = vld [vmem:[#allocation4 + $0x148] sm:$0xf]
    %v3309 = vld [vmem:[#allocation4 + $0x14c] sm:$0xf]
    %3314 = vrot.lane.b32.xlu0 %v3304, 112
    %v3315 = vpop.permute.xlu0 %3314
    %3316 = vrot.lane.b32.xlu0 %v3305, 112
    %v3317 = vpop.permute.xlu0 %3316
    %3318 = vrot.lane.b32.xlu0 %v3306, 112
    %v3319 = vpop.permute.xlu0 %3318
    %3320 = vrot.lane.b32.xlu0 %v3307, 112
    %v3321 = vpop.permute.xlu0 %3320
    %v3324 = vunpack.c.l.b16 %v3308
    %v3325 = vunpack.c.l.b16 %v3309
    %v3326 = vpack.c.b16 %v3325, %v3324
    %v3329 = vsel %vm66, %v3315, 0
    %v3332 = vsel %vm66, %v3317, 0
    %v3335 = vsel %vm66, %v3319, 0
    %v3338 = vsel %vm66, %v3321, 0
    %3340 = vmatprep.subr.bf16.mxu0 0
    %3341 = vmatpush1.bf16.msra.mxu0 0
    %3342 = vmatprep.subr.bf16.mxu0 0
    %3343 = vmatpush1.bf16.msra.mxu0 0
    %3344 = vmatprep.subr.bf16.mxu0 0
    %3345 = vmatpush1.bf16.msra.mxu0 0
    %3346 = vmatprep.subr.bf16.mxu0 0
    %3347 = vmatpush1.bf16.msra.mxu0 0
    %3348 = vmatprep.subr.bf16.mxu0 0
    %3349 = vmatpush1.bf16.msra.mxu0 0
    %3350 = vmatprep.subr.bf16.mxu0 0
    %3351 = vmatpush1.bf16.msra.mxu0 0
    %3352 = vmatprep.subr.bf16.mxu0 0
    %3353 = vmatpush1.bf16.msra.mxu0 0
    %3354 = vmatprep.subr.bf16.mxu0 0
    %3355 = vmatpush1.bf16.msra.mxu0 %v3326
    %3356 = vmatprep.subr.bf16.mxu0 0
    %3357 = vmatpush2.bf16.msra.mxu0 0
    %3358 = vmatprep.subr.bf16.mxu0 0
    %3359 = vmatpush2.bf16.msra.mxu0 0
    %3360 = vmatprep.subr.bf16.mxu0 0
    %3361 = vmatpush2.bf16.msra.mxu0 0
    %3362 = vmatprep.subr.bf16.mxu0 0
    %3363 = vmatpush2.bf16.msra.mxu0 0
    %3364 = vmatprep.subr.bf16.mxu0 0
    %3365 = vmatpush2.bf16.msra.mxu0 0
    %3366 = vmatprep.subr.bf16.mxu0 0
    %3367 = vmatpush2.bf16.msra.mxu0 0
    %3368 = vmatprep.subr.bf16.mxu0 0
    %3369 = vmatpush2.bf16.msra.mxu0 0
    %3370 = vmatprep.subr.bf16.mxu0 0
    %3371 = vmatpush2.bf16.msra.mxu0 0
    %3372 = vmatprep.mubr.bf16.mxu0 0
    %3373 = vmatmul.mubr.bf16.gmra.mxu0 %v3329
    %v3374 = vpop.f32.mrf.mxu0
    %v3375 = vadd.f32 0.0, %v3374
    %v3376 = vpop.f32.mrf.mxu0
    %v3377 = vpop.f32.mrf.mxu0
    %v3378 = vadd.f32 0.0, %v3377
    %v3379 = vpop.f32.mrf.mxu0
    %3380 = vmatprep.mubr.bf16.mxu0 0
    %3381 = vmatmul.mubr.bf16.gmra.mxu0 %v3332
    %v3382 = vpop.f32.mrf.mxu0
    %v3383 = vadd.f32 0.0, %v3382
    %v3384 = vpop.f32.mrf.mxu0
    %v3385 = vpop.f32.mrf.mxu0
    %v3386 = vadd.f32 0.0, %v3385
    %v3387 = vpop.f32.mrf.mxu0
    %3388 = vmatprep.mubr.bf16.mxu0 0
    %3389 = vmatmul.mubr.bf16.gmra.mxu0 %v3335
    %v3390 = vpop.f32.mrf.mxu0
    %v3391 = vadd.f32 0.0, %v3390
    %v3392 = vpop.f32.mrf.mxu0
    %v3393 = vpop.f32.mrf.mxu0
    %v3394 = vadd.f32 0.0, %v3393
    %v3395 = vpop.f32.mrf.mxu0
    %3396 = vmatprep.mubr.bf16.mxu0 0
    %3397 = vmatmul.mubr.bf16.gmra.mxu0 %v3338
    %v3398 = vpop.f32.mrf.mxu0
    %v3399 = vadd.f32 0.0, %v3398
    %v3400 = vpop.f32.mrf.mxu0
    %v3401 = vpop.f32.mrf.mxu0
    %v3402 = vadd.f32 0.0, %v3401
    %v3403 = vpop.f32.mrf.mxu0
    %3404 = vdwg.mxu0
    %v3405 = vld [vmem:[%s3 + $0xd] sm:$0x1]
    %v3406 = vpack.c.bf16 %v3378, %v3375
    %v3407 = vpack.c.bf16 %v3386, %v3383
    %v3408 = vpack.c.bf16 %v3394, %v3391
    %v3409 = vpack.c.bf16 %v3402, %v3399
    %v3410 = vlaneseq
    %v3411 = vshrl.u32 %v3410, 7
    %v3412 = vsub.s32 0, %v3411
    %v3413 = vrot.slane %v3405, %v3412
    %3414 = vmatprep.subr.bf16.mxu0 0
    %3415 = vmatpush1.bf16.msra.mxu0 0
    %3416 = vmatprep.subr.bf16.mxu0 0
    %3417 = vmatpush1.bf16.msra.mxu0 0
    %3418 = vmatprep.subr.bf16.mxu0 0
    %3419 = vmatpush1.bf16.msra.mxu0 0
    %3420 = vmatprep.subr.bf16.mxu0 0
    %3421 = vmatpush1.bf16.msra.mxu0 0
    %3422 = vmatprep.subr.bf16.mxu0 0
    %3423 = vmatpush1.bf16.msra.mxu0 %v3409
    %3424 = vmatprep.subr.bf16.mxu0 0
    %3425 = vmatpush1.bf16.msra.mxu0 %v3408
    %3426 = vmatprep.subr.bf16.mxu0 0
    %3427 = vmatpush1.bf16.msra.mxu0 %v3407
    %3428 = vmatprep.subr.bf16.mxu0 0
    %3429 = vmatpush1.bf16.msra.mxu0 %v3406
    %3430 = vmatprep.subr.bf16.mxu0 0
    %3431 = vmatpush2.bf16.msra.mxu0 0
    %3432 = vmatprep.subr.bf16.mxu0 0
    %3433 = vmatpush2.bf16.msra.mxu0 0
    %3434 = vmatprep.subr.bf16.mxu0 0
    %3435 = vmatpush2.bf16.msra.mxu0 0
    %3436 = vmatprep.subr.bf16.mxu0 0
    %3437 = vmatpush2.bf16.msra.mxu0 0
    %3438 = vmatprep.subr.bf16.mxu0 0
    %3439 = vmatpush2.bf16.msra.mxu0 0
    %3440 = vmatprep.subr.bf16.mxu0 0
    %3441 = vmatpush2.bf16.msra.mxu0 0
    %3442 = vmatprep.subr.bf16.mxu0 0
    %3443 = vmatpush2.bf16.msra.mxu0 0
    %3444 = vmatprep.subr.bf16.mxu0 0
    %3445 = vmatpush2.bf16.msra.mxu0 0
    %3446 = vmatprep.mubr.bf16.mxu0 0
    %3447 = vmatmul.mubr.bf16.gmra.mxu0 %v509
    %v3448 = vpop.f32.mrf.mxu0
    %v3449 = vadd.f32 %v3413, %v3448
    %v3450 = vpop.f32.mrf.mxu0
    %v3451 = vpop.f32.mrf.mxu0
    %v3452 = vadd.f32 %v3413, %v3451
    %v3453 = vpop.f32.mrf.mxu0
    %3454 = vmatprep.mubr.bf16.mxu0 0
    %3455 = vmatmul.mubr.bf16.gmra.mxu0 %v512
    %v3456 = vpop.f32.mrf.mxu0
    %v3457 = vadd.f32 %v3413, %v3456
    %v3458 = vpop.f32.mrf.mxu0
    %v3459 = vpop.f32.mrf.mxu0
    %v3460 = vadd.f32 %v3413, %v3459
    %v3461 = vpop.f32.mrf.mxu0
    %3462 = vmatprep.mubr.bf16.mxu0 0
    %3463 = vmatmul.mubr.bf16.gmra.mxu0 %v515
    %v3464 = vpop.f32.mrf.mxu0
    %v3465 = vadd.f32 %v3413, %v3464
    %v3466 = vpop.f32.mrf.mxu0
    %v3467 = vpop.f32.mrf.mxu0
    %v3468 = vadd.f32 %v3413, %v3467
    %v3469 = vpop.f32.mrf.mxu0
    %3470 = vmatprep.mubr.bf16.mxu0 0
    %3471 = vmatmul.mubr.bf16.gmra.mxu0 %v518
    %v3472 = vpop.f32.mrf.mxu0
    %v3473 = vadd.f32 %v3413, %v3472
    %v3474 = vpop.f32.mrf.mxu0
    %v3475 = vpop.f32.mrf.mxu0
    %v3476 = vadd.f32 %v3413, %v3475
    %v3477 = vpop.f32.mrf.mxu0
    %3478 = vdwg.mxu0
    %v3479 = vmax.f32 %v3449, 0.0
    %v3480 = vmax.f32 %v3452, 0.0
    %v3481 = vmax.f32 %v3457, 0.0
    %v3482 = vmax.f32 %v3460, 0.0
    %v3483 = vmax.f32 %v3465, 0.0
    %v3484 = vmax.f32 %v3468, 0.0
    %v3485 = vmax.f32 %v3473, 0.0
    %v3486 = vmax.f32 %v3476, 0.0
    %v3487 = vadd.f32 %v3296, %v3479
    %v3488 = vadd.f32 %v3297, %v3480
    %v3489 = vadd.f32 %v3298, %v3481
    %v3490 = vadd.f32 %v3299, %v3482
    %v3491 = vadd.f32 %v3300, %v3483
    %v3492 = vadd.f32 %v3301, %v3484
    %v3493 = vadd.f32 %v3302, %v3485
    %v3494 = vadd.f32 %v3303, %v3486
    %3503 = vrot.lane.b32.xlu0 %v3487, 48
    %v3504 = vpop.permute.xlu0 %3503
    %3505 = vrot.lane.b32.xlu0 %v3488, 48
    %v3506 = vpop.permute.xlu0 %3505
    %3507 = vrot.lane.b32.xlu0 %v3489, 48
    %v3508 = vpop.permute.xlu0 %3507
    %3509 = vrot.lane.b32.xlu0 %v3490, 48
    %v3510 = vpop.permute.xlu0 %3509
    %3511 = vrot.lane.b32.xlu0 %v3491, 48
    %v3512 = vpop.permute.xlu0 %3511
    %3513 = vrot.lane.b32.xlu0 %v3492, 48
    %v3514 = vpop.permute.xlu0 %3513
    %3515 = vrot.lane.b32.xlu0 %v3493, 48
    %v3516 = vpop.permute.xlu0 %3515
    %3517 = vrot.lane.b32.xlu0 %v3494, 48
    %v3518 = vpop.permute.xlu0 %3517
    %3527 = vst.msk [vmem:[#allocation3] sm:$0xff] %vm921, %v3504
    %3528 = vst.msk [vmem:[#allocation3 + $0x8] sm:$0xff] %vm921, %v3506
    %3529 = vst.msk [vmem:[#allocation3 + $0x10] sm:$0xff] %vm921, %v3508
    %3530 = vst.msk [vmem:[#allocation3 + $0x18] sm:$0xff] %vm921, %v3510
    %3531 = vst.msk [vmem:[#allocation3 + $0x20] sm:$0xff] %vm921, %v3512
    %3532 = vst.msk [vmem:[#allocation3 + $0x28] sm:$0xff] %vm921, %v3514
    %3533 = vst.msk [vmem:[#allocation3 + $0x30] sm:$0xff] %vm921, %v3516
    %3534 = vst.msk [vmem:[#allocation3 + $0x38] sm:$0xff] %vm921, %v3518
    %v3535 = vld [vmem:[#allocation3] sm:$0xff]
    %v3536 = vld [vmem:[#allocation3 + $0x8] sm:$0xff]
    %v3537 = vld [vmem:[#allocation3 + $0x10] sm:$0xff]
    %v3538 = vld [vmem:[#allocation3 + $0x18] sm:$0xff]
    %v3539 = vld [vmem:[#allocation3 + $0x20] sm:$0xff]
    %v3540 = vld [vmem:[#allocation3 + $0x28] sm:$0xff]
    %v3541 = vld [vmem:[#allocation3 + $0x30] sm:$0xff]
    %v3542 = vld [vmem:[#allocation3 + $0x38] sm:$0xff]
    %v3543 = vpack.c.bf16 %v3536, %v3535
    %v3544 = vpack.c.bf16 %v3538, %v3537
    %v3545 = vpack.c.bf16 %v3540, %v3539
    %v3546 = vpack.c.bf16 %v3542, %v3541
    %v3547 = vld [vmem:[#allocation4 + $0x150] sm:$0xf]
    %v3548 = vld [vmem:[#allocation4 + $0x154] sm:$0xf]
    %3553 = vrot.lane.b32.xlu0 %v3543, 96
    %v3554 = vpop.permute.xlu0 %3553
    %3555 = vrot.lane.b32.xlu0 %v3544, 96
    %v3556 = vpop.permute.xlu0 %3555
    %3557 = vrot.lane.b32.xlu0 %v3545, 96
    %v3558 = vpop.permute.xlu0 %3557
    %3559 = vrot.lane.b32.xlu0 %v3546, 96
    %v3560 = vpop.permute.xlu0 %3559
    %v3563 = vunpack.c.l.b16 %v3547
    %v3564 = vunpack.c.l.b16 %v3548
    %v3565 = vpack.c.b16 %v3564, %v3563
    %v3568 = vsel %vm66, %v3554, 0
    %v3571 = vsel %vm66, %v3556, 0
    %v3574 = vsel %vm66, %v3558, 0
    %v3577 = vsel %vm66, %v3560, 0
    %3579 = vmatprep.subr.bf16.mxu0 0
    %3580 = vmatpush1.bf16.msra.mxu0 0
    %3581 = vmatprep.subr.bf16.mxu0 0
    %3582 = vmatpush1.bf16.msra.mxu0 0
    %3583 = vmatprep.subr.bf16.mxu0 0
    %3584 = vmatpush1.bf16.msra.mxu0 0
    %3585 = vmatprep.subr.bf16.mxu0 0
    %3586 = vmatpush1.bf16.msra.mxu0 0
    %3587 = vmatprep.subr.bf16.mxu0 0
    %3588 = vmatpush1.bf16.msra.mxu0 0
    %3589 = vmatprep.subr.bf16.mxu0 0
    %3590 = vmatpush1.bf16.msra.mxu0 0
    %3591 = vmatprep.subr.bf16.mxu0 0
    %3592 = vmatpush1.bf16.msra.mxu0 0
    %3593 = vmatprep.subr.bf16.mxu0 0
    %3594 = vmatpush1.bf16.msra.mxu0 %v3565
    %3595 = vmatprep.subr.bf16.mxu0 0
    %3596 = vmatpush2.bf16.msra.mxu0 0
    %3597 = vmatprep.subr.bf16.mxu0 0
    %3598 = vmatpush2.bf16.msra.mxu0 0
    %3599 = vmatprep.subr.bf16.mxu0 0
    %3600 = vmatpush2.bf16.msra.mxu0 0
    %3601 = vmatprep.subr.bf16.mxu0 0
    %3602 = vmatpush2.bf16.msra.mxu0 0
    %3603 = vmatprep.subr.bf16.mxu0 0
    %3604 = vmatpush2.bf16.msra.mxu0 0
    %3605 = vmatprep.subr.bf16.mxu0 0
    %3606 = vmatpush2.bf16.msra.mxu0 0
    %3607 = vmatprep.subr.bf16.mxu0 0
    %3608 = vmatpush2.bf16.msra.mxu0 0
    %3609 = vmatprep.subr.bf16.mxu0 0
    %3610 = vmatpush2.bf16.msra.mxu0 0
    %3611 = vmatprep.mubr.bf16.mxu0 0
    %3612 = vmatmul.mubr.bf16.gmra.mxu0 %v3568
    %v3613 = vpop.f32.mrf.mxu0
    %v3614 = vadd.f32 0.0, %v3613
    %v3615 = vpop.f32.mrf.mxu0
    %v3616 = vpop.f32.mrf.mxu0
    %v3617 = vadd.f32 0.0, %v3616
    %v3618 = vpop.f32.mrf.mxu0
    %3619 = vmatprep.mubr.bf16.mxu0 0
    %3620 = vmatmul.mubr.bf16.gmra.mxu0 %v3571
    %v3621 = vpop.f32.mrf.mxu0
    %v3622 = vadd.f32 0.0, %v3621
    %v3623 = vpop.f32.mrf.mxu0
    %v3624 = vpop.f32.mrf.mxu0
    %v3625 = vadd.f32 0.0, %v3624
    %v3626 = vpop.f32.mrf.mxu0
    %3627 = vmatprep.mubr.bf16.mxu0 0
    %3628 = vmatmul.mubr.bf16.gmra.mxu0 %v3574
    %v3629 = vpop.f32.mrf.mxu0
    %v3630 = vadd.f32 0.0, %v3629
    %v3631 = vpop.f32.mrf.mxu0
    %v3632 = vpop.f32.mrf.mxu0
    %v3633 = vadd.f32 0.0, %v3632
    %v3634 = vpop.f32.mrf.mxu0
    %3635 = vmatprep.mubr.bf16.mxu0 0
    %3636 = vmatmul.mubr.bf16.gmra.mxu0 %v3577
    %v3637 = vpop.f32.mrf.mxu0
    %v3638 = vadd.f32 0.0, %v3637
    %v3639 = vpop.f32.mrf.mxu0
    %v3640 = vpop.f32.mrf.mxu0
    %v3641 = vadd.f32 0.0, %v3640
    %v3642 = vpop.f32.mrf.mxu0
    %3643 = vdwg.mxu0
    %v3644 = vld [vmem:[%s3 + $0xe] sm:$0x1]
    %v3645 = vlaneseq
    %v3646 = vshrl.u32 %v3645, 7
    %v3647 = vsub.s32 0, %v3646
    %v3648 = vrot.slane %v3644, %v3647
    %v3649 = vadd.f32 %v3614, %v3648
    %v3650 = vadd.f32 %v3617, %v3648
    %v3651 = vadd.f32 %v3622, %v3648
    %v3652 = vadd.f32 %v3625, %v3648
    %v3653 = vadd.f32 %v3630, %v3648
    %v3654 = vadd.f32 %v3633, %v3648
    %v3655 = vadd.f32 %v3638, %v3648
    %v3656 = vadd.f32 %v3641, %v3648
    %v3657 = vmax.f32 %v3649, 0.0
    %v3658 = vmax.f32 %v3650, 0.0
    %v3659 = vmax.f32 %v3651, 0.0
    %v3660 = vmax.f32 %v3652, 0.0
    %v3661 = vmax.f32 %v3653, 0.0
    %v3662 = vmax.f32 %v3654, 0.0
    %v3663 = vmax.f32 %v3655, 0.0
    %v3664 = vmax.f32 %v3656, 0.0
    %3673 = vrot.lane.b32.xlu0 %v3535, 80
    %v3674 = vpop.permute.xlu0 %3673
    %3675 = vrot.lane.b32.xlu0 %v3536, 80
    %v3676 = vpop.permute.xlu0 %3675
    %3677 = vrot.lane.b32.xlu0 %v3537, 80
    %v3678 = vpop.permute.xlu0 %3677
    %3679 = vrot.lane.b32.xlu0 %v3538, 80
    %v3680 = vpop.permute.xlu0 %3679
    %3681 = vrot.lane.b32.xlu0 %v3539, 80
    %v3682 = vpop.permute.xlu0 %3681
    %3683 = vrot.lane.b32.xlu0 %v3540, 80
    %v3684 = vpop.permute.xlu0 %3683
    %3685 = vrot.lane.b32.xlu0 %v3541, 80
    %v3686 = vpop.permute.xlu0 %3685
    %3687 = vrot.lane.b32.xlu0 %v3542, 80
    %v3688 = vpop.permute.xlu0 %3687
    %v3697 = vadd.f32 %v3657, %v3674
    %v3698 = vadd.f32 %v3658, %v3676
    %v3699 = vadd.f32 %v3659, %v3678
    %v3700 = vadd.f32 %v3660, %v3680
    %v3701 = vadd.f32 %v3661, %v3682
    %v3702 = vadd.f32 %v3662, %v3684
    %v3703 = vadd.f32 %v3663, %v3686
    %v3704 = vadd.f32 %v3664, %v3688
    %3713 = vrot.lane.b32.xlu0 %v3697, 64
    %v3714 = vpop.permute.xlu0 %3713
    %3715 = vrot.lane.b32.xlu0 %v3698, 64
    %v3716 = vpop.permute.xlu0 %3715
    %3717 = vrot.lane.b32.xlu0 %v3699, 64
    %v3718 = vpop.permute.xlu0 %3717
    %3719 = vrot.lane.b32.xlu0 %v3700, 64
    %v3720 = vpop.permute.xlu0 %3719
    %3721 = vrot.lane.b32.xlu0 %v3701, 64
    %v3722 = vpop.permute.xlu0 %3721
    %3723 = vrot.lane.b32.xlu0 %v3702, 64
    %v3724 = vpop.permute.xlu0 %3723
    %3725 = vrot.lane.b32.xlu0 %v3703, 64
    %v3726 = vpop.permute.xlu0 %3725
    %3727 = vrot.lane.b32.xlu0 %v3704, 64
    %v3728 = vpop.permute.xlu0 %3727
    %3737 = vst.msk [vmem:[#allocation3] sm:$0xff] %vm1132, %v3714
    %3738 = vst.msk [vmem:[#allocation3 + $0x8] sm:$0xff] %vm1132, %v3716
    %3739 = vst.msk [vmem:[#allocation3 + $0x10] sm:$0xff] %vm1132, %v3718
    %3740 = vst.msk [vmem:[#allocation3 + $0x18] sm:$0xff] %vm1132, %v3720
    %3741 = vst.msk [vmem:[#allocation3 + $0x20] sm:$0xff] %vm1132, %v3722
    %3742 = vst.msk [vmem:[#allocation3 + $0x28] sm:$0xff] %vm1132, %v3724
    %3743 = vst.msk [vmem:[#allocation3 + $0x30] sm:$0xff] %vm1132, %v3726
    %3744 = vst.msk [vmem:[#allocation3 + $0x38] sm:$0xff] %vm1132, %v3728
    %v3745 = vld [vmem:[#allocation3] sm:$0xff]
    %v3746 = vld [vmem:[#allocation3 + $0x8] sm:$0xff]
    %v3747 = vld [vmem:[#allocation3 + $0x10] sm:$0xff]
    %v3748 = vld [vmem:[#allocation3 + $0x18] sm:$0xff]
    %v3749 = vld [vmem:[#allocation3 + $0x20] sm:$0xff]
    %v3750 = vld [vmem:[#allocation3 + $0x28] sm:$0xff]
    %v3751 = vld [vmem:[#allocation3 + $0x30] sm:$0xff]
    %v3752 = vld [vmem:[#allocation3 + $0x38] sm:$0xff]
    %v3753 = vpack.c.bf16 %v3746, %v3745
    %v3754 = vpack.c.bf16 %v3748, %v3747
    %v3755 = vpack.c.bf16 %v3750, %v3749
    %v3756 = vpack.c.bf16 %v3752, %v3751
    %v3757 = vld [vmem:[#allocation4 + $0x158] sm:$0xf]
    %v3758 = vld [vmem:[#allocation4 + $0x15c] sm:$0xf]
    %v3759 = vld [vmem:[#allocation4 + $0x160] sm:$0xf]
    %v3760 = vld [vmem:[#allocation4 + $0x164] sm:$0xf]
    %v3761 = vld [vmem:[#allocation4 + $0x168] sm:$0xf]
    %v3762 = vld [vmem:[#allocation4 + $0x16c] sm:$0xf]
    %3767 = vrot.lane.b32.xlu0 %v3753, 96
    %v3768 = vpop.permute.xlu0 %3767
    %3769 = vrot.lane.b32.xlu0 %v3754, 96
    %v3770 = vpop.permute.xlu0 %3769
    %3771 = vrot.lane.b32.xlu0 %v3755, 96
    %v3772 = vpop.permute.xlu0 %3771
    %3773 = vrot.lane.b32.xlu0 %v3756, 96
    %v3774 = vpop.permute.xlu0 %3773
    %v3781 = vunpack.c.l.b16 %v3757
    %v3782 = vunpack.c.l.b16 %v3758
    %v3783 = vunpack.c.l.b16 %v3759
    %v3784 = vunpack.c.l.b16 %v3760
    %v3785 = vunpack.c.l.b16 %v3761
    %v3786 = vunpack.c.l.b16 %v3762
    %v3787 = vpack.c.b16 %v3782, %v3781
    %v3788 = vpack.c.b16 %v3784, %v3783
    %v3789 = vpack.c.b16 %v3786, %v3785
    %v3794 = vsel %vm152, %v3768, 0
    %v3797 = vsel %vm152, %v3770, 0
    %v3800 = vsel %vm152, %v3772, 0
    %v3803 = vsel %vm152, %v3774, 0
    %3805 = vmatprep.subr.bf16.mxu0 0
    %3806 = vmatpush1.bf16.msra.mxu0 0
    %3807 = vmatprep.subr.bf16.mxu0 0
    %3808 = vmatpush1.bf16.msra.mxu0 0
    %3809 = vmatprep.subr.bf16.mxu0 0
    %3810 = vmatpush1.bf16.msra.mxu0 0
    %3811 = vmatprep.subr.bf16.mxu0 0
    %3812 = vmatpush1.bf16.msra.mxu0 0
    %3813 = vmatprep.subr.bf16.mxu0 0
    %3814 = vmatpush1.bf16.msra.mxu0 0
    %3815 = vmatprep.subr.bf16.mxu0 0
    %3816 = vmatpush1.bf16.msra.mxu0 %v3789
    %3817 = vmatprep.subr.bf16.mxu0 0
    %3818 = vmatpush1.bf16.msra.mxu0 %v3788
    %3819 = vmatprep.subr.bf16.mxu0 0
    %3820 = vmatpush1.bf16.msra.mxu0 %v3787
    %3821 = vmatprep.subr.bf16.mxu0 0
    %3822 = vmatpush2.bf16.msra.mxu0 0
    %3823 = vmatprep.subr.bf16.mxu0 0
    %3824 = vmatpush2.bf16.msra.mxu0 0
    %3825 = vmatprep.subr.bf16.mxu0 0
    %3826 = vmatpush2.bf16.msra.mxu0 0
    %3827 = vmatprep.subr.bf16.mxu0 0
    %3828 = vmatpush2.bf16.msra.mxu0 0
    %3829 = vmatprep.subr.bf16.mxu0 0
    %3830 = vmatpush2.bf16.msra.mxu0 0
    %3831 = vmatprep.subr.bf16.mxu0 0
    %3832 = vmatpush2.bf16.msra.mxu0 0
    %3833 = vmatprep.subr.bf16.mxu0 0
    %3834 = vmatpush2.bf16.msra.mxu0 0
    %3835 = vmatprep.subr.bf16.mxu0 0
    %3836 = vmatpush2.bf16.msra.mxu0 0
    %3837 = vmatprep.mubr.bf16.mxu0 0
    %3838 = vmatmul.mubr.bf16.gmra.mxu0 %v3794
    %v3839 = vpop.f32.mrf.mxu0
    %v3840 = vadd.f32 0.0, %v3839
    %v3841 = vpop.f32.mrf.mxu0
    %v3842 = vpop.f32.mrf.mxu0
    %v3843 = vadd.f32 0.0, %v3842
    %v3844 = vpop.f32.mrf.mxu0
    %3845 = vmatprep.mubr.bf16.mxu0 0
    %3846 = vmatmul.mubr.bf16.gmra.mxu0 %v3797
    %v3847 = vpop.f32.mrf.mxu0
    %v3848 = vadd.f32 0.0, %v3847
    %v3849 = vpop.f32.mrf.mxu0
    %v3850 = vpop.f32.mrf.mxu0
    %v3851 = vadd.f32 0.0, %v3850
    %v3852 = vpop.f32.mrf.mxu0
    %3853 = vmatprep.mubr.bf16.mxu0 0
    %3854 = vmatmul.mubr.bf16.gmra.mxu0 %v3800
    %v3855 = vpop.f32.mrf.mxu0
    %v3856 = vadd.f32 0.0, %v3855
    %v3857 = vpop.f32.mrf.mxu0
    %v3858 = vpop.f32.mrf.mxu0
    %v3859 = vadd.f32 0.0, %v3858
    %v3860 = vpop.f32.mrf.mxu0
    %3861 = vmatprep.mubr.bf16.mxu0 0
    %3862 = vmatmul.mubr.bf16.gmra.mxu0 %v3803
    %v3863 = vpop.f32.mrf.mxu0
    %v3864 = vadd.f32 0.0, %v3863
    %v3865 = vpop.f32.mrf.mxu0
    %v3866 = vpop.f32.mrf.mxu0
    %v3867 = vadd.f32 0.0, %v3866
    %v3868 = vpop.f32.mrf.mxu0
    %3869 = vdwg.mxu0
    %v3870 = vld [vmem:[%s3 + $0xf] sm:$0x1]
    %v3871 = vpack.c.bf16 %v3843, %v3840
    %v3872 = vpack.c.bf16 %v3851, %v3848
    %v3873 = vpack.c.bf16 %v3859, %v3856
    %v3874 = vpack.c.bf16 %v3867, %v3864
    %v3875 = vlaneseq
    %v3876 = vshrl.u32 %v3875, 7
    %v3877 = vsub.s32 0, %v3876
    %v3878 = vrot.slane %v3870, %v3877
    %3879 = vmatprep.subr.bf16.mxu0 0
    %3880 = vmatpush1.bf16.msra.mxu0 0
    %3881 = vmatprep.subr.bf16.mxu0 0
    %3882 = vmatpush1.bf16.msra.mxu0 0
    %3883 = vmatprep.subr.bf16.mxu0 0
    %3884 = vmatpush1.bf16.msra.mxu0 0
    %3885 = vmatprep.subr.bf16.mxu0 0
    %3886 = vmatpush1.bf16.msra.mxu0 0
    %3887 = vmatprep.subr.bf16.mxu0 0
    %3888 = vmatpush1.bf16.msra.mxu0 %v3874
    %3889 = vmatprep.subr.bf16.mxu0 0
    %3890 = vmatpush1.bf16.msra.mxu0 %v3873
    %3891 = vmatprep.subr.bf16.mxu0 0
    %3892 = vmatpush1.bf16.msra.mxu0 %v3872
    %3893 = vmatprep.subr.bf16.mxu0 0
    %3894 = vmatpush1.bf16.msra.mxu0 %v3871
    %3895 = vmatprep.subr.bf16.mxu0 0
    %3896 = vmatpush2.bf16.msra.mxu0 0
    %3897 = vmatprep.subr.bf16.mxu0 0
    %3898 = vmatpush2.bf16.msra.mxu0 0
    %3899 = vmatprep.subr.bf16.mxu0 0
    %3900 = vmatpush2.bf16.msra.mxu0 0
    %3901 = vmatprep.subr.bf16.mxu0 0
    %3902 = vmatpush2.bf16.msra.mxu0 0
    %3903 = vmatprep.subr.bf16.mxu0 0
    %3904 = vmatpush2.bf16.msra.mxu0 0
    %3905 = vmatprep.subr.bf16.mxu0 0
    %3906 = vmatpush2.bf16.msra.mxu0 0
    %3907 = vmatprep.subr.bf16.mxu0 0
    %3908 = vmatpush2.bf16.msra.mxu0 0
    %3909 = vmatprep.subr.bf16.mxu0 0
    %3910 = vmatpush2.bf16.msra.mxu0 0
    %3911 = vmatprep.mubr.bf16.mxu0 0
    %3912 = vmatmul.mubr.bf16.gmra.mxu0 %v509
    %v3913 = vpop.f32.mrf.mxu0
    %v3914 = vadd.f32 %v3878, %v3913
    %v3915 = vpop.f32.mrf.mxu0
    %v3916 = vpop.f32.mrf.mxu0
    %v3917 = vadd.f32 %v3878, %v3916
    %v3918 = vpop.f32.mrf.mxu0
    %3919 = vmatprep.mubr.bf16.mxu0 0
    %3920 = vmatmul.mubr.bf16.gmra.mxu0 %v512
    %v3921 = vpop.f32.mrf.mxu0
    %v3922 = vadd.f32 %v3878, %v3921
    %v3923 = vpop.f32.mrf.mxu0
    %v3924 = vpop.f32.mrf.mxu0
    %v3925 = vadd.f32 %v3878, %v3924
    %v3926 = vpop.f32.mrf.mxu0
    %3927 = vmatprep.mubr.bf16.mxu0 0
    %3928 = vmatmul.mubr.bf16.gmra.mxu0 %v515
    %v3929 = vpop.f32.mrf.mxu0
    %v3930 = vadd.f32 %v3878, %v3929
    %v3931 = vpop.f32.mrf.mxu0
    %v3932 = vpop.f32.mrf.mxu0
    %v3933 = vadd.f32 %v3878, %v3932
    %v3934 = vpop.f32.mrf.mxu0
    %3935 = vmatprep.mubr.bf16.mxu0 0
    %3936 = vmatmul.mubr.bf16.gmra.mxu0 %v518
    %v3937 = vpop.f32.mrf.mxu0
    %v3938 = vadd.f32 %v3878, %v3937
    %v3939 = vpop.f32.mrf.mxu0
    %v3940 = vpop.f32.mrf.mxu0
    %v3941 = vadd.f32 %v3878, %v3940
    %v3942 = vpop.f32.mrf.mxu0
    %3943 = vdwg.mxu0
    %v3944 = vmax.f32 %v3914, 0.0
    %v3945 = vmax.f32 %v3917, 0.0
    %v3946 = vmax.f32 %v3922, 0.0
    %v3947 = vmax.f32 %v3925, 0.0
    %v3948 = vmax.f32 %v3930, 0.0
    %v3949 = vmax.f32 %v3933, 0.0
    %v3950 = vmax.f32 %v3938, 0.0
    %v3951 = vmax.f32 %v3941, 0.0
    %v3952 = vadd.f32 %v3840, %v3878
    %v3953 = vadd.f32 %v3843, %v3878
    %v3954 = vadd.f32 %v3848, %v3878
    %v3955 = vadd.f32 %v3851, %v3878
    %v3956 = vadd.f32 %v3856, %v3878
    %v3957 = vadd.f32 %v3859, %v3878
    %v3958 = vadd.f32 %v3864, %v3878
    %v3959 = vadd.f32 %v3867, %v3878
    %v3960 = vmax.f32 %v3952, 0.0
    %v3961 = vmax.f32 %v3953, 0.0
    %v3962 = vmax.f32 %v3954, 0.0
    %v3963 = vmax.f32 %v3955, 0.0
    %v3964 = vmax.f32 %v3956, 0.0
    %v3965 = vmax.f32 %v3957, 0.0
    %v3966 = vmax.f32 %v3958, 0.0
    %v3967 = vmax.f32 %v3959, 0.0
    %3976 = vrot.lane.b32.xlu0 %v3960, 112
    %v3977 = vpop.permute.xlu0 %3976
    %3978 = vrot.lane.b32.xlu0 %v3961, 112
    %v3979 = vpop.permute.xlu0 %3978
    %3980 = vrot.lane.b32.xlu0 %v3962, 112
    %v3981 = vpop.permute.xlu0 %3980
    %3982 = vrot.lane.b32.xlu0 %v3963, 112
    %v3983 = vpop.permute.xlu0 %3982
    %3984 = vrot.lane.b32.xlu0 %v3964, 112
    %v3985 = vpop.permute.xlu0 %3984
    %3986 = vrot.lane.b32.xlu0 %v3965, 112
    %v3987 = vpop.permute.xlu0 %3986
    %3988 = vrot.lane.b32.xlu0 %v3966, 112
    %v3989 = vpop.permute.xlu0 %3988
    %3990 = vrot.lane.b32.xlu0 %v3967, 112
    %v3991 = vpop.permute.xlu0 %3990
    %v4000 = vadd.f32 %v3944, %v3977
    %v4001 = vadd.f32 %v3945, %v3979
    %v4002 = vadd.f32 %v3946, %v3981
    %v4003 = vadd.f32 %v3947, %v3983
    %v4004 = vadd.f32 %v3948, %v3985
    %v4005 = vadd.f32 %v3949, %v3987
    %v4006 = vadd.f32 %v3950, %v3989
    %v4007 = vadd.f32 %v3951, %v3991
    %4016 = vrot.lane.b32.xlu0 %v4000, 80
    %v4017 = vpop.permute.xlu0 %4016
    %4018 = vrot.lane.b32.xlu0 %v4001, 80
    %v4019 = vpop.permute.xlu0 %4018
    %4020 = vrot.lane.b32.xlu0 %v4002, 80
    %v4021 = vpop.permute.xlu0 %4020
    %4022 = vrot.lane.b32.xlu0 %v4003, 80
    %v4023 = vpop.permute.xlu0 %4022
    %4024 = vrot.lane.b32.xlu0 %v4004, 80
    %v4025 = vpop.permute.xlu0 %4024
    %4026 = vrot.lane.b32.xlu0 %v4005, 80
    %v4027 = vpop.permute.xlu0 %4026
    %4028 = vrot.lane.b32.xlu0 %v4006, 80
    %v4029 = vpop.permute.xlu0 %4028
    %4030 = vrot.lane.b32.xlu0 %v4007, 80
    %v4031 = vpop.permute.xlu0 %4030
    %4040 = vst.msk [vmem:[#allocation3] sm:$0xff] %vm1436, %v4017
    %4041 = vst.msk [vmem:[#allocation3 + $0x8] sm:$0xff] %vm1436, %v4019
    %4042 = vst.msk [vmem:[#allocation3 + $0x10] sm:$0xff] %vm1436, %v4021
    %4043 = vst.msk [vmem:[#allocation3 + $0x18] sm:$0xff] %vm1436, %v4023
    %4044 = vst.msk [vmem:[#allocation3 + $0x20] sm:$0xff] %vm1436, %v4025
    %4045 = vst.msk [vmem:[#allocation3 + $0x28] sm:$0xff] %vm1436, %v4027
    %4046 = vst.msk [vmem:[#allocation3 + $0x30] sm:$0xff] %vm1436, %v4029
    %4047 = vst.msk [vmem:[#allocation3 + $0x38] sm:$0xff] %vm1436, %v4031
    %v4048 = vld [vmem:[#allocation2] sm:$0xff]
    %v4049 = vld [vmem:[#allocation2 + $0x8] sm:$0xff]
    %v4050 = vld [vmem:[#allocation2 + $0x10] sm:$0xff]
    %v4051 = vld [vmem:[#allocation2 + $0x18] sm:$0xff]
    %v4052 = vld [vmem:[#allocation2 + $0x20] sm:$0xff]
    %v4053 = vld [vmem:[#allocation2 + $0x28] sm:$0xff]
    %v4054 = vld [vmem:[#allocation2 + $0x30] sm:$0xff]
    %v4055 = vld [vmem:[#allocation2 + $0x38] sm:$0xff]
    %4064 = vrot.lane.b32.xlu0 %v4048, 64
    %v4065 = vpop.permute.xlu0 %4064
    %4066 = vrot.lane.b32.xlu0 %v4049, 64
    %v4067 = vpop.permute.xlu0 %4066
    %4068 = vrot.lane.b32.xlu0 %v4050, 64
    %v4069 = vpop.permute.xlu0 %4068
    %4070 = vrot.lane.b32.xlu0 %v4051, 64
    %v4071 = vpop.permute.xlu0 %4070
    %4072 = vrot.lane.b32.xlu0 %v4052, 64
    %v4073 = vpop.permute.xlu0 %4072
    %4074 = vrot.lane.b32.xlu0 %v4053, 64
    %v4075 = vpop.permute.xlu0 %4074
    %4076 = vrot.lane.b32.xlu0 %v4054, 64
    %v4077 = vpop.permute.xlu0 %4076
    %4078 = vrot.lane.b32.xlu0 %v4055, 64
    %v4079 = vpop.permute.xlu0 %4078
    %4088 = vst.msk [vmem:[#allocation2] sm:$0xff] %vm507, %v4065
    %4089 = vst.msk [vmem:[#allocation2 + $0x8] sm:$0xff] %vm507, %v4067
    %4090 = vst.msk [vmem:[#allocation2 + $0x10] sm:$0xff] %vm507, %v4069
    %4091 = vst.msk [vmem:[#allocation2 + $0x18] sm:$0xff] %vm507, %v4071
    %4092 = vst.msk [vmem:[#allocation2 + $0x20] sm:$0xff] %vm507, %v4073
    %4093 = vst.msk [vmem:[#allocation2 + $0x28] sm:$0xff] %vm507, %v4075
    %4094 = vst.msk [vmem:[#allocation2 + $0x30] sm:$0xff] %vm507, %v4077
    %4095 = vst.msk [vmem:[#allocation2 + $0x38] sm:$0xff] %vm507, %v4079
    %v4096 = vld [vmem:[#allocation3] sm:$0xff]
    %v4097 = vld [vmem:[#allocation3 + $0x8] sm:$0xff]
    %v4098 = vld [vmem:[#allocation3 + $0x10] sm:$0xff]
    %v4099 = vld [vmem:[#allocation3 + $0x18] sm:$0xff]
    %v4100 = vld [vmem:[#allocation3 + $0x20] sm:$0xff]
    %v4101 = vld [vmem:[#allocation3 + $0x28] sm:$0xff]
    %v4102 = vld [vmem:[#allocation3 + $0x30] sm:$0xff]
    %v4103 = vld [vmem:[#allocation3 + $0x38] sm:$0xff]
    %4112 = vrot.lane.b32.xlu0 %v4096, 32
    %v4113 = vpop.permute.xlu0 %4112
    %4114 = vrot.lane.b32.xlu0 %v4097, 32
    %v4115 = vpop.permute.xlu0 %4114
    %4116 = vrot.lane.b32.xlu0 %v4098, 32
    %v4117 = vpop.permute.xlu0 %4116
    %4118 = vrot.lane.b32.xlu0 %v4099, 32
    %v4119 = vpop.permute.xlu0 %4118
    %4120 = vrot.lane.b32.xlu0 %v4100, 32
    %v4121 = vpop.permute.xlu0 %4120
    %4122 = vrot.lane.b32.xlu0 %v4101, 32
    %v4123 = vpop.permute.xlu0 %4122
    %4124 = vrot.lane.b32.xlu0 %v4102, 32
    %v4125 = vpop.permute.xlu0 %4124
    %4126 = vrot.lane.b32.xlu0 %v4103, 32
    %v4127 = vpop.permute.xlu0 %4126
    %4136 = vst.msk [vmem:[#allocation2] sm:$0xff] %vm1533, %v4113
    %4137 = vst.msk [vmem:[#allocation2 + $0x8] sm:$0xff] %vm1533, %v4115
    %4138 = vst.msk [vmem:[#allocation2 + $0x10] sm:$0xff] %vm1533, %v4117
    %4139 = vst.msk [vmem:[#allocation2 + $0x18] sm:$0xff] %vm1533, %v4119
    %4140 = vst.msk [vmem:[#allocation2 + $0x20] sm:$0xff] %vm1533, %v4121
    %4141 = vst.msk [vmem:[#allocation2 + $0x28] sm:$0xff] %vm1533, %v4123
    %4142 = vst.msk [vmem:[#allocation2 + $0x30] sm:$0xff] %vm1533, %v4125
    %4143 = vst.msk [vmem:[#allocation2 + $0x38] sm:$0xff] %vm1533, %v4127
    %v4144 = vld [vmem:[#allocation2] sm:$0xff]
    %v4145 = vld [vmem:[#allocation2 + $0x8] sm:$0xff]
    %v4146 = vld [vmem:[#allocation2 + $0x10] sm:$0xff]
    %v4147 = vld [vmem:[#allocation2 + $0x18] sm:$0xff]
    %v4148 = vld [vmem:[#allocation2 + $0x20] sm:$0xff]
    %v4149 = vld [vmem:[#allocation2 + $0x28] sm:$0xff]
    %v4150 = vld [vmem:[#allocation2 + $0x30] sm:$0xff]
    %v4151 = vld [vmem:[#allocation2 + $0x38] sm:$0xff]
    %v4152 = vpack.c.bf16 %v4145, %v4144
    %v4153 = vpack.c.bf16 %v4147, %v4146
    %v4154 = vpack.c.bf16 %v4149, %v4148
    %v4155 = vpack.c.bf16 %v4151, %v4150
    %v4156 = vld [vmem:[#allocation4 + $0x170] sm:$0xf]
    %v4157 = vld [vmem:[#allocation4 + $0x174] sm:$0xf]
    %v4158 = vld [vmem:[#allocation4 + $0x178] sm:$0xf]
    %v4159 = vld [vmem:[#allocation4 + $0x17c] sm:$0xf]
    %v4160 = vld [vmem:[#allocation4 + $0x180] sm:$0xf]
    %v4161 = vld [vmem:[#allocation4 + $0x184] sm:$0xf]
    %v4162 = vld [vmem:[#allocation4 + $0x188] sm:$0xf]
    %v4163 = vld [vmem:[#allocation4 + $0x18c] sm:$0xf]
    %v4164 = vld [vmem:[%s3 + $0x10] sm:$0x1]
    %v4165 = vlaneseq
    %v4166 = vshrl.u32 %v4165, 7
    %v4167 = vsub.s32 0, %v4166
    %v4168 = vrot.slane %v4164, %v4167
    %4173 = vrot.lane.b32.xlu0 %v4152, 64
    %v4174 = vpop.permute.xlu0 %4173
    %4175 = vrot.lane.b32.xlu0 %v4153, 64
    %v4176 = vpop.permute.xlu0 %4175
    %4177 = vrot.lane.b32.xlu0 %v4154, 64
    %v4178 = vpop.permute.xlu0 %4177
    %4179 = vrot.lane.b32.xlu0 %v4155, 64
    %v4180 = vpop.permute.xlu0 %4179
    %v4189 = vunpack.c.l.b16 %v4156
    %v4190 = vunpack.c.l.b16 %v4157
    %v4191 = vunpack.c.l.b16 %v4158
    %v4192 = vunpack.c.l.b16 %v4159
    %v4193 = vunpack.c.l.b16 %v4160
    %v4194 = vunpack.c.l.b16 %v4161
    %v4195 = vunpack.c.l.b16 %v4162
    %v4196 = vunpack.c.l.b16 %v4163
    %v4197 = vpack.c.b16 %v4190, %v4189
    %v4198 = vpack.c.b16 %v4192, %v4191
    %v4199 = vpack.c.b16 %v4194, %v4193
    %v4200 = vpack.c.b16 %v4196, %v4195
    %v4206 = vsel %vm507, %v4174, 0
    %v4209 = vsel %vm507, %v4176, 0
    %v4212 = vsel %vm507, %v4178, 0
    %v4215 = vsel %vm507, %v4180, 0
    %4217 = vmatprep.subr.bf16.mxu0 0
    %4218 = vmatpush1.bf16.msra.mxu0 0
    %4219 = vmatprep.subr.bf16.mxu0 0
    %4220 = vmatpush1.bf16.msra.mxu0 0
    %4221 = vmatprep.subr.bf16.mxu0 0
    %4222 = vmatpush1.bf16.msra.mxu0 0
    %4223 = vmatprep.subr.bf16.mxu0 0
    %4224 = vmatpush1.bf16.msra.mxu0 0
    %4225 = vmatprep.subr.bf16.mxu0 0
    %4226 = vmatpush1.bf16.msra.mxu0 %v4200
    %4227 = vmatprep.subr.bf16.mxu0 0
    %4228 = vmatpush1.bf16.msra.mxu0 %v4199
    %4229 = vmatprep.subr.bf16.mxu0 0
    %4230 = vmatpush1.bf16.msra.mxu0 %v4198
    %4231 = vmatprep.subr.bf16.mxu0 0
    %4232 = vmatpush1.bf16.msra.mxu0 %v4197
    %4233 = vmatprep.subr.bf16.mxu0 0
    %4234 = vmatpush2.bf16.msra.mxu0 0
    %4235 = vmatprep.subr.bf16.mxu0 0
    %4236 = vmatpush2.bf16.msra.mxu0 0
    %4237 = vmatprep.subr.bf16.mxu0 0
    %4238 = vmatpush2.bf16.msra.mxu0 0
    %4239 = vmatprep.subr.bf16.mxu0 0
    %4240 = vmatpush2.bf16.msra.mxu0 0
    %4241 = vmatprep.subr.bf16.mxu0 0
    %4242 = vmatpush2.bf16.msra.mxu0 0
    %4243 = vmatprep.subr.bf16.mxu0 0
    %4244 = vmatpush2.bf16.msra.mxu0 0
    %4245 = vmatprep.subr.bf16.mxu0 0
    %4246 = vmatpush2.bf16.msra.mxu0 0
    %4247 = vmatprep.subr.bf16.mxu0 0
    %4248 = vmatpush2.bf16.msra.mxu0 0
    %4249 = vmatprep.mubr.bf16.mxu0 0
    %4250 = vmatmul.mubr.bf16.gmra.mxu0 %v4206
    %v4251 = vpop.f32.mrf.mxu0
    %v4252 = vadd.f32 %v4168, %v4251
    %v4253 = vpop.f32.mrf.mxu0
    %v4254 = vpop.f32.mrf.mxu0
    %v4255 = vadd.f32 %v4168, %v4254
    %v4256 = vpop.f32.mrf.mxu0
    %4257 = vmatprep.mubr.bf16.mxu0 0
    %4258 = vmatmul.mubr.bf16.gmra.mxu0 %v4209
    %v4259 = vpop.f32.mrf.mxu0
    %v4260 = vadd.f32 %v4168, %v4259
    %v4261 = vpop.f32.mrf.mxu0
    %v4262 = vpop.f32.mrf.mxu0
    %v4263 = vadd.f32 %v4168, %v4262
    %v4264 = vpop.f32.mrf.mxu0
    %4265 = vmatprep.mubr.bf16.mxu0 0
    %4266 = vmatmul.mubr.bf16.gmra.mxu0 %v4212
    %v4267 = vpop.f32.mrf.mxu0
    %v4268 = vadd.f32 %v4168, %v4267
    %v4269 = vpop.f32.mrf.mxu0
    %v4270 = vpop.f32.mrf.mxu0
    %v4271 = vadd.f32 %v4168, %v4270
    %v4272 = vpop.f32.mrf.mxu0
    %4273 = vmatprep.mubr.bf16.mxu0 0
    %4274 = vmatmul.mubr.bf16.gmra.mxu0 %v4215
    %v4275 = vpop.f32.mrf.mxu0
    %v4276 = vadd.f32 %v4168, %v4275
    %v4277 = vpop.f32.mrf.mxu0
    %v4278 = vpop.f32.mrf.mxu0
    %v4279 = vadd.f32 %v4168, %v4278
    %v4280 = vpop.f32.mrf.mxu0
    %4281 = vdwg.mxu0
    %4282 = vst [vmem:[#allocation7] sm:$0xff] %v4252
    %4283 = vst [vmem:[#allocation7 + $0x8] sm:$0xff] %v4255
    %4284 = vst [vmem:[#allocation7 + $0x10] sm:$0xff] %v4260
    %4285 = vst [vmem:[#allocation7 + $0x18] sm:$0xff] %v4263
    %4286 = vst [vmem:[#allocation7 + $0x20] sm:$0xff] %v4268
    %4287 = vst [vmem:[#allocation7 + $0x28] sm:$0xff] %v4271
    %4288 = vst [vmem:[#allocation7 + $0x30] sm:$0xff] %v4276
    %4289 = vst [vmem:[#allocation7 + $0x38] sm:$0xff] %v4279
    // Predicated region
    $region22: #{tpu_custom_call.1} parent=1 // pred_check
      _
    $region23: #{tpu_custom_call.1} parent=1 // pred_check_branch
      %4291 = sbr.rel (0) target = $region25
    $region24: #{tpu_custom_call.1} parent=1 // pred_region
      %s4293 = ssub.s32 1024, 1024
      %4294 = vsyncadd [#allocation6], %s4293
      %s4295 = sshll.u32 [#allocation7], 4
      %s4296 = int_to_ptr.vmem [resolvable:$true] %s4295
      %4301 = dma.vmem_to_hbm [thread:$0]  %s4296, 1024, %s4, [#allocation6], 128, 128, 8
    $region25: #{tpu_custom_call.1} parent=1 // pred_fallthru
      _
    // Predicated region
    $region26: #{tpu_custom_call.1} parent=1 // pred_check
      _
    $region27: #{tpu_custom_call.1} parent=1 // pred_check_branch
      %4303 = sbr.rel (0) target = $region29
    $region28: #{tpu_custom_call.1} parent=1 // pred_region
      %4304 = dma.done [#allocation6], 1024
    $region29: #{tpu_custom_call.1} parent=1 // pred_fallthru
      _
    %4305 = vsyncpa [#allocation5], 1
    %4306 = vsyncpa [#allocation6], 1

</llo_original>
